<compile_context>
chip_gen: v6e
topology: v6e:2x2x1
jax: 0.10.0
libtpu: 0.0.40
codegen_flags: <defaults>
</compile_context>

<pallas_src>
import numpy as np

import jax
import jax.numpy as jnp
from jax.experimental import pallas as pl
from jax.experimental.pallas import tpu as pltpu

LEAKY_SLOPE = 0.01            # torch.nn.LeakyReLU default
LN_EPS = 1e-5
BN_EPS = 1e-5
MXU_DTYPE = jnp.bfloat16      # MXU operand dtype (f32 accumulation)
VMEM_LIMIT = 32 * 1024 * 1024

_CNN_KEYS = ('w1a', 'w1b', 'w1c', 'b1', 'g1', 'bb1',
             'w2a', 'w2b', 'w2c', 'b2', 'g2', 'bb2')


# ----------------------------------------------------------------------------
# Host-side (init-time) conversion of conv weights into banded matmul form
# ----------------------------------------------------------------------------
def _pool_perm(F, Cout):
    """Column permutation: even-frequency outputs first, odd-frequency last."""
    cols = np.arange(F * Cout).reshape(F, Cout)
    return np.concatenate([cols[0::2].reshape(-1), cols[1::2].reshape(-1)])


def _banded_conv_weight_taps(w, F, *, pool_perm=False):
    """(3,3,Cin,Cout) 'same' cross-correlation -> three (F*Cin, F*Cout) banded
    matrices, one per time tap (t-1, t, t+1).  Frequency zero-padding is
    realized by the missing band entries.
    TODO(synk): at production F this densifies a ~3/F-sparse matrix; switch to
    per-frequency-tap (Cin->Cout) matmuls with a Cin lane roll instead."""
    w_np = np.asarray(w, np.float32)                     # (3, 3, Cin, Cout)
    Cin, Cout = w_np.shape[2], w_np.shape[3]
    Wb = np.zeros((3, F, Cin, F, Cout), np.float32)
    for kh in range(3):
        for kw in range(3):
            for fo in range(F):
                fi = fo + kw - 1
                if 0 <= fi < F:
                    Wb[kh, fi, :, fo, :] = w_np[kh, kw]
    Wb = Wb.reshape(3, F * Cin, F * Cout)
    if pool_perm:
        Wb = Wb[:, :, _pool_perm(F, Cout)]
    return tuple(jnp.asarray(Wb[k], MXU_DTYPE) for k in range(3))


def _tiled_bias(b, F, *, pool_perm=False):
    b_np = np.asarray(b, np.float32)
    Cout = b_np.shape[0]
    bs = np.tile(b_np, F)
    if pool_perm:
        bs = bs[_pool_perm(F, Cout)]
    return jnp.asarray(bs.reshape(1, F * Cout))


def _full_spec(a):
    """Whole-array BlockSpec (weights / biases resident across the grid)."""
    return pl.BlockSpec(a.shape, lambda *i: (0,) * a.ndim)


# ----------------------------------------------------------------------------
# In-kernel helpers
# ----------------------------------------------------------------------------
def _ln_leaky(x, g, b):
    # LayerNorm over the flattened (freq * channel) feature row, then LeakyReLU.
    mean = jnp.mean(x, axis=-1, keepdims=True)
    var = jnp.mean(jnp.square(x - mean), axis=-1, keepdims=True)
    y = (x - mean) * jax.lax.rsqrt(var + LN_EPS)
    y = y * g + b
    return jnp.where(y >= 0, y, LEAKY_SLOPE * y)


def _shifted(x, row_idx, direction):
    """x[t-1] (direction=-1) or x[t+1] (direction=+1) with zero time padding,
    via an XLU sublane roll + boundary mask (no VMEM scratch, no zero-fill)."""
    T = x.shape[0]
    if direction < 0:
        return jnp.where(row_idx == 0, 0.0, pltpu.roll(x, 1, axis=0))
    return jnp.where(row_idx == T - 1, 0.0, pltpu.roll(x, T - 1, axis=0))


def _conv3_time(x, row_idx, wa_ref, wb_ref, wc_ref, bias):
    """3x3 'same' conv as three accumulating bf16 MXU matmuls (taps t-1, t,
    t+1); the three frequency taps live inside each banded weight."""
    acc = jnp.dot(x.astype(MXU_DTYPE), wb_ref[...],
                  preferred_element_type=jnp.float32)
    acc += jnp.dot(_shifted(x, row_idx, -1).astype(MXU_DTYPE), wa_ref[...],
                   preferred_element_type=jnp.float32)
    acc += jnp.dot(_shifted(x, row_idx, +1).astype(MXU_DTYPE), wc_ref[...],
                   preferred_element_type=jnp.float32)
    return acc + bias


# ----------------------------------------------------------------------------
# Kernel 1: fully fused CNN block (one batch element per grid step)
# ----------------------------------------------------------------------------
def _cnn_block_kernel(x_ref,
                      w1a_ref, w1b_ref, w1c_ref, b1_ref, g1_ref, bb1_ref,
                      w2a_ref, w2b_ref, w2c_ref, b2_ref, g2_ref, bb2_ref,
                      o_ref):
    # x_ref : (1, T, D1)        D1 = F * Cin
    # w1*   : (D1, 2*D2)        conv_1 taps, columns permuted (even-f | odd-f)
    # w2*   : (D2, D2)          conv_2 taps at pooled frequency
    # o_ref : (1, 1, (T//2)*D2) lane-dense output slab, D2 = (F//2) * C
    T = x_ref.shape[1]
    D2 = g1_ref.shape[1]

    x = x_ref[0]                                              # (T, D1) f32
    row = jax.lax.broadcasted_iota(jnp.int32, (T, 1), 0)

    # conv_1 (3 accumulating MXU matmuls over rolled inputs)
    h = _conv3_time(x, row, w1a_ref, w1b_ref, w1c_ref, b1_ref[...])
    # MaxPool1d(k=2) over frequency == max of the two (permuted) lane halves
    h = jnp.maximum(h[:, :D2], h[:, D2:])                     # (T, D2)
    h = _ln_leaky(h, g1_ref[...], bb1_ref[...])

    # conv_2 at pooled frequency
    h2 = _conv3_time(h, row, w2a_ref, w2b_ref, w2c_ref, b2_ref[...])
    h2 = _ln_leaky(h2, g2_ref[...], bb2_ref[...])

    # MaxPool1d(k=2) over time
    h2 = jnp.max(h2.reshape(T // 2, 2, D2), axis=1)           # (T//2, D2)

    # Dropout2d: identity (inference).
    # Lane-dense store: pack the (T//2, D2) rows into one (1, (T//2)*D2) slab
    # (multiple of 128 lanes here -> unmasked vst), reshaped back for free in
    # the wrapper.
    # TODO(synk): at production sizes D2 is already a >=128 multiple -- store
    #             (T//2, D2) directly and tile T over the grid instead.
    pieces = [h2[i:i + 1, :] for i in range(T // 2)]
    o_ref[0] = jnp.concatenate(pieces, axis=1).astype(o_ref.dtype)


def cnn_block(h, blk):
    B, T, D1 = h.shape
    D2 = blk['g1'].shape[1]
    K = (T // 2) * D2
    out = pl.pallas_call(
        _cnn_block_kernel,
        out_shape=jax.ShapeDtypeStruct((B, 1, K), jnp.float32),
        grid=(B,),
        in_specs=[pl.BlockSpec((1, T, D1), lambda i: (i, 0, 0))] +
                 [_full_spec(blk[k]) for k in _CNN_KEYS],
        out_specs=pl.BlockSpec((1, 1, K), lambda i: (i, 0, 0)),
        compiler_params=pltpu.CompilerParams(
            dimension_semantics=("parallel",),       # v7x: both TCs share batch
            vmem_limit_bytes=VMEM_LIMIT),
    )(h, *[blk[k] for k in _CNN_KEYS])
    return out.reshape(B, T // 2, D2)                # free row-major reshape


# ----------------------------------------------------------------------------
# Kernel 2: fused 2-layer LiGRU + head (Linear+folded BN -> LeakyReLU -> decode)
#   gates_t = wx_t + h @ U ;  at, zt = split ;  zt = sigmoid(zt)
#   h = zt*h + (1-zt)*leaky_relu(at)      (nonlinearity='leaky_relu')
# ----------------------------------------------------------------------------
def _rnn_head_kernel(x_ref,
                     w1_ref, g1_ref, b1_ref, u1_ref,
                     w2_ref, g2_ref, b2_ref, u2_ref,
                     wh_ref, bh_ref, wd_ref,
                     o_ref):
    Bb, T, Din = x_ref.shape
    H = u1_ref.shape[0]

    # wx1 = LayerNorm(x @ W1) for all time steps in one batched MXU matmul
    x2d = x_ref[...].reshape(Bb * T, Din).astype(MXU_DTYPE)
    wx = jnp.dot(x2d, w1_ref[...], preferred_element_type=jnp.float32)
    mean = jnp.mean(wx, axis=-1, keepdims=True)
    var = jnp.mean(jnp.square(wx - mean), axis=-1, keepdims=True)
    wx = (wx - mean) * jax.lax.rsqrt(var + LN_EPS) * g1_ref[...] + b1_ref[...]
    wx = wx.reshape(Bb, T, 2 * H)

    u1, u2, w2 = u1_ref[...], u2_ref[...], w2_ref[...]
    g2, b2 = g2_ref[...], b2_ref[...]
    wh, bh, wd = wh_ref[...], bh_ref[...], wd_ref[...]

    h1 = jnp.zeros((Bb, H), jnp.float32)
    h2 = jnp.zeros((Bb, H), jnp.float32)
    # TODO(synk): for production T, switch to lax.fori_loop (unroll=2-4) over
    #             time chunks with carried (h1, h2) and a chunked wx buffer.
    for t in range(T):
        # ---- LiGRU layer 1 ----
        gates = wx[:, t, :] + jnp.dot(h1.astype(MXU_DTYPE), u1,
                                      preferred_element_type=jnp.float32)
        at = gates[:, :H]
        zt = jax.nn.sigmoid(gates[:, H:])
        h1 = zt * h1 + (1.0 - zt) * jnp.where(at >= 0, at, LEAKY_SLOPE * at)

        # ---- LiGRU layer 2 (LayerNorm of h1@W2 is per-time-step exact) ----
        g2x = jnp.dot(h1.astype(MXU_DTYPE), w2,
                      preferred_element_type=jnp.float32)
        m2 = jnp.mean(g2x, axis=-1, keepdims=True)
        v2 = jnp.mean(jnp.square(g2x - m2), axis=-1, keepdims=True)
        g2x = (g2x - m2) * jax.lax.rsqrt(v2 + LN_EPS) * g2 + b2
        gates = g2x + jnp.dot(h2.astype(MXU_DTYPE), u2,
                              preferred_element_type=jnp.float32)
        at = gates[:, :H]
        zt = jax.nn.sigmoid(gates[:, H:])
        h2 = zt * h2 + (1.0 - zt) * jnp.where(at >= 0, at, LEAKY_SLOPE * at)

        # ---- head: Linear(+folded BatchNorm) -> LeakyReLU -> decode ----
        y = jnp.dot(h2.astype(MXU_DTYPE), wh,
                    preferred_element_type=jnp.float32) + bh
        y = jnp.where(y >= 0, y, LEAKY_SLOPE * y)
        # Dropout: identity (inference).  Per-step lane-dense (128-pad) store.
        o_ref[:, t, :] = jnp.dot(y.astype(MXU_DTYPE), wd,
                                 preferred_element_type=jnp.float32
                                 ).astype(o_ref.dtype)


def rnn_head(h, lay1, lay2, wh, bh, wd_pad):
    B, T, Din = h.shape
    Npad = wd_pad.shape[1]
    # Fill sublanes (>=8 rows) per invocation when possible; the grid splits
    # larger batches across both v7x TensorCores.
    b_blk = min(B, 8)
    assert B % b_blk == 0
    consts = (lay1['w'], lay1['g'], lay1['b'], lay1['u'],
              lay2['w'], lay2['g'], lay2['b'], lay2['u'],
              wh, bh, wd_pad)
    return pl.pallas_call(
        _rnn_head_kernel,
        out_shape=jax.ShapeDtypeStruct((B, T, Npad), jnp.float32),
        grid=(B // b_blk,),
        in_specs=[pl.BlockSpec((b_blk, T, Din), lambda i: (i, 0, 0))] +
                 [_full_spec(a) for a in consts],
        out_specs=pl.BlockSpec((b_blk, T, Npad), lambda i: (i, 0, 0)),
        compiler_params=pltpu.CompilerParams(
            dimension_semantics=("parallel",),
            vmem_limit_bytes=VMEM_LIMIT),
    )(h, *consts)


# ----------------------------------------------------------------------------
# Parameter init (deterministic, synthetic) and full forward
# ----------------------------------------------------------------------------
def init_params(key, feat_dim, cnn_block_num=2, cnn_channels=8, rnn_hidden=32,
                num_rnn_layers=2, dnn_neurons=32, n_neurons=16):
    keys = iter(jax.random.split(key, 64))

    def nrm(shape, scale=0.1):
        return jax.random.normal(next(keys), shape, jnp.float32) * scale

    params = {}
    cin, f = 1, feat_dim
    blocks = []
    for _ in range(cnn_block_num):
        c1w = nrm((3, 3, cin, cnn_channels))
        c1b = nrm((cnn_channels,), 0.01)
        c2w = nrm((3, 3, cnn_channels, cnn_channels))
        c2b = nrm((cnn_channels,), 0.01)
        f_in = f
        f = f // 2                                   # freq pooling (pool_axis=2)
        w1a, w1b, w1c = _banded_conv_weight_taps(c1w, f_in, pool_perm=True)
        w2a, w2b, w2c = _banded_conv_weight_taps(c2w, f, pool_perm=False)
        blocks.append({
            'w1a': w1a, 'w1b': w1b, 'w1c': w1c,
            'b1': _tiled_bias(c1b, f_in, pool_perm=True),
            'g1': jnp.ones((1, f * cnn_channels), jnp.float32),
            'bb1': jnp.zeros((1, f * cnn_channels), jnp.float32),
            'w2a': w2a, 'w2b': w2b, 'w2c': w2c,
            'b2': _tiled_bias(c2b, f, pool_perm=False),
            'g2': jnp.ones((1, f * cnn_channels), jnp.float32),
            'bb2': jnp.zeros((1, f * cnn_channels), jnp.float32),
        })
        cin = cnn_channels
    params['cnn_blocks'] = blocks

    din = f * cnn_channels
    lays = []
    for _ in range(num_rnn_layers):
        lays.append({
            'w': nrm((din, 2 * rnn_hidden)).astype(MXU_DTYPE),
            'g': jnp.ones((1, 2 * rnn_hidden), jnp.float32),
            'b': jnp.zeros((1, 2 * rnn_hidden), jnp.float32),
            'u': nrm((rnn_hidden, 2 * rnn_hidden)).astype(MXU_DTYPE),
        })
        din = rnn_hidden
    params['ligru_layers'] = lays

    params['lin1_w'] = nrm((rnn_hidden, dnn_neurons * 2))
    params['lin1_b'] = nrm((dnn_neurons * 2,), 0.01)
    params['bn_g'] = jnp.ones((dnn_neurons * 2,), jnp.float32)
    params['bn_b'] = jnp.zeros((dnn_neurons * 2,), jnp.float32)
    params['bn_m'] = jnp.zeros((dnn_neurons * 2,), jnp.float32)
    params['bn_v'] = jnp.ones((dnn_neurons * 2,), jnp.float32)
    params['dec_w'] = nrm((dnn_neurons * 2, n_neurons))
    return params


def apply_cdrnn_forward(x, params):
    # x: (B, T, F)  -> channels-last slab (B, T, F*Cin) with Cin = 1
    B, T, F = x.shape
    h = x.reshape(B, T, F)

    # CNN blocks (each a single fused pallas_call, gridded over batch)
    for blk in params['cnn_blocks']:
        h = cnn_block(h, blk)                        # (B, T/2, (F/2)*C)

    # Fold eval-mode BatchNorm1d into lin1 at trace time (tiny XLA ops)
    scale = params['bn_g'] * jax.lax.rsqrt(params['bn_v'] + BN_EPS)
    wh = (params['lin1_w'] * scale[None, :]).astype(MXU_DTYPE)
    bh = ((params['lin1_b'] - params['bn_m']) * scale
          + params['bn_b']).reshape(1, -1)

    # Pad decode columns to a 128-lane multiple so every store is unmasked.
    n_out = params['dec_w'].shape[1]
    n_pad = ((n_out + 127) // 128) * 128
    wd_pad = jnp.pad(params['dec_w'],
                     ((0, 0), (0, n_pad - n_out))).astype(MXU_DTYPE)

    # TODO(synk): the fused kernel hard-codes exactly 2 LiGRU layers
    #             (inter_rnn_num_layers=2 in the reference module).
    lay1, lay2 = params['ligru_layers']
    y = rnn_head(h, lay1, lay2, wh, bh, wd_pad)      # (B, T', n_pad)
    return y[:, :, :n_out]


if __name__ == "__main__":
    key = jax.random.PRNGKey(0)
    kx, kp = jax.random.split(key)
    B, T, F = 2, 16, 16
    N_NEURONS = 16
    x = jax.random.normal(kx, (B, T, F), jnp.float32)
    params = init_params(kp, feat_dim=F, cnn_block_num=2, cnn_channels=8,
                         rnn_hidden=32, num_rnn_layers=2, dnn_neurons=32,
                         n_neurons=N_NEURONS)
    fwd = jax.jit(apply_cdrnn_forward)
    out = jax.block_until_ready(fwd(x, params))
    # After two time-poolings: T/4 frames, decoded to n_neurons classes.
    assert out.shape == (B, T // 4, N_NEURONS), out.shape
    assert bool(jnp.all(jnp.isfinite(out)))
    print("KERNEL_OK")
</pallas_src>

<mosaic_0001>
module attributes {stable_mosaic.version = 11 : i64} {
  func.func @_cnn_block_kernel(%arg0: i32, %arg1: memref<1x16x16xf32, #tpu.memory_space<vmem>>, %arg2: memref<16x128xbf16, #tpu.memory_space<vmem>>, %arg3: memref<16x128xbf16, #tpu.memory_space<vmem>>, %arg4: memref<16x128xbf16, #tpu.memory_space<vmem>>, %arg5: memref<1x128xf32, #tpu.memory_space<vmem>>, %arg6: memref<1x64xf32, #tpu.memory_space<vmem>>, %arg7: memref<1x64xf32, #tpu.memory_space<vmem>>, %arg8: memref<64x64xbf16, #tpu.memory_space<vmem>>, %arg9: memref<64x64xbf16, #tpu.memory_space<vmem>>, %arg10: memref<64x64xbf16, #tpu.memory_space<vmem>>, %arg11: memref<1x64xf32, #tpu.memory_space<vmem>>, %arg12: memref<1x64xf32, #tpu.memory_space<vmem>>, %arg13: memref<1x64xf32, #tpu.memory_space<vmem>>, %arg14: memref<1x1x512xf32, #tpu.memory_space<vmem>>) attributes {dimension_semantics = [#tpu.dimension_semantics<parallel>], iteration_bounds = array<i64: 2>, scalar_prefetch = 0 : i64, scratch_operands = 0 : i64, tpu.core_type = #tpu.core_type<tc>, window_params = [{transform_indices = @transform_0, window_bounds = array<i64: 1, 16, 16>}, {pipeline_mode = #tpu.pipeline_mode<synchronous>, transform_indices = @transform_1, window_bounds = array<i64: 16, 128>}, {pipeline_mode = #tpu.pipeline_mode<synchronous>, transform_indices = @transform_2, window_bounds = array<i64: 16, 128>}, {pipeline_mode = #tpu.pipeline_mode<synchronous>, transform_indices = @transform_3, window_bounds = array<i64: 16, 128>}, {pipeline_mode = #tpu.pipeline_mode<synchronous>, transform_indices = @transform_4, window_bounds = array<i64: 1, 128>}, {pipeline_mode = #tpu.pipeline_mode<synchronous>, transform_indices = @transform_5, window_bounds = array<i64: 1, 64>}, {pipeline_mode = #tpu.pipeline_mode<synchronous>, transform_indices = @transform_6, window_bounds = array<i64: 1, 64>}, {pipeline_mode = #tpu.pipeline_mode<synchronous>, transform_indices = @transform_7, window_bounds = array<i64: 64, 64>}, {pipeline_mode = #tpu.pipeline_mode<synchronous>, transform_indices = @transform_8, window_bounds = array<i64: 64, 64>}, {pipeline_mode = #tpu.pipeline_mode<synchronous>, transform_indices = @transform_9, window_bounds = array<i64: 64, 64>}, {pipeline_mode = #tpu.pipeline_mode<synchronous>, transform_indices = @transform_10, window_bounds = array<i64: 1, 64>}, {pipeline_mode = #tpu.pipeline_mode<synchronous>, transform_indices = @transform_11, window_bounds = array<i64: 1, 64>}, {pipeline_mode = #tpu.pipeline_mode<synchronous>, transform_indices = @transform_12, window_bounds = array<i64: 1, 64>}, {transform_indices = @transform_13, window_bounds = array<i64: 1, 1, 512>}]} {
    %c0 = arith.constant 0 : index
    %c0_0 = arith.constant 0 : index
    %c0_1 = arith.constant 0 : index
    %0 = vector.load %arg1[%c0, %c0_0, %c0_1] : memref<1x16x16xf32, #tpu.memory_space<vmem>>, vector<1x16x16xf32>
    %1 = vector.shape_cast %0 : vector<1x16x16xf32> to vector<16x16xf32>
    %2 = tpu.iota {dimensions = array<i32: 0>} : vector<16x1xi32>
    %c0_2 = arith.constant 0 : index
    %c0_3 = arith.constant 0 : index
    %3 = vector.load %arg5[%c0_2, %c0_3] : memref<1x128xf32, #tpu.memory_space<vmem>>, vector<1x128xf32>
    %4 = arith.truncf %1 : vector<16x16xf32> to vector<16x16xbf16>
    %c0_4 = arith.constant 0 : index
    %c0_5 = arith.constant 0 : index
    %5 = vector.load %arg3[%c0_4, %c0_5] : memref<16x128xbf16, #tpu.memory_space<vmem>>, vector<16x128xbf16>
    %cst = arith.constant dense<0.000000e+00> : vector<16x128xf32>
    %6 = tpu.matmul %4, %5, %cst {dimension_numbers = #tpu.dot_dimension_numbers<[1], [0], [0], [1], [0, 0, 1, 1], [], []>} : vector<16x16xbf16>, vector<16x128xbf16>, vector<16x128xf32> -> vector<16x128xf32>
    %c0_i32 = arith.constant 0 : i32
    %7 = vector.broadcast %c0_i32 : i32 to vector<16x1xi32>
    %8 = arith.cmpi eq, %2, %7 : vector<16x1xi32>
    %c1_i32 = arith.constant 1 : i32
    %9 = tpu.dynamic_rotate %1 by %c1_i32 dim 0 : vector<16x16xf32>, i32 -> vector<16x16xf32>
    %cst_6 = arith.constant 0.000000e+00 : f32
    %10 = vector.shape_cast %8 : vector<16x1xi1> to vector<16x1xi1>
    %11 = vector.broadcast %10 : vector<16x1xi1> to vector<16x16xi1>
    %12 = vector.broadcast %cst_6 : f32 to vector<16x16xf32>
    %13 = arith.select %11, %12, %9 : vector<16x16xi1>, vector<16x16xf32>
    %14 = arith.truncf %13 : vector<16x16xf32> to vector<16x16xbf16>
    %c0_7 = arith.constant 0 : index
    %c0_8 = arith.constant 0 : index
    %15 = vector.load %arg2[%c0_7, %c0_8] : memref<16x128xbf16, #tpu.memory_space<vmem>>, vector<16x128xbf16>
    %cst_9 = arith.constant dense<0.000000e+00> : vector<16x128xf32>
    %16 = tpu.matmul %14, %15, %cst_9 {dimension_numbers = #tpu.dot_dimension_numbers<[1], [0], [0], [1], [0, 0, 1, 1], [], []>} : vector<16x16xbf16>, vector<16x128xbf16>, vector<16x128xf32> -> vector<16x128xf32>
    %17 = arith.addf %6, %16 : vector<16x128xf32>
    %c15_i32 = arith.constant 15 : i32
    %18 = vector.broadcast %c15_i32 : i32 to vector<16x1xi32>
    %19 = arith.cmpi eq, %2, %18 : vector<16x1xi32>
    %c15_i32_10 = arith.constant 15 : i32
    %20 = tpu.dynamic_rotate %1 by %c15_i32_10 dim 0 : vector<16x16xf32>, i32 -> vector<16x16xf32>
    %cst_11 = arith.constant 0.000000e+00 : f32
    %21 = vector.shape_cast %19 : vector<16x1xi1> to vector<16x1xi1>
    %22 = vector.broadcast %21 : vector<16x1xi1> to vector<16x16xi1>
    %23 = vector.broadcast %cst_11 : f32 to vector<16x16xf32>
    %24 = arith.select %22, %23, %20 : vector<16x16xi1>, vector<16x16xf32>
    %25 = arith.truncf %24 : vector<16x16xf32> to vector<16x16xbf16>
    %c0_12 = arith.constant 0 : index
    %c0_13 = arith.constant 0 : index
    %26 = vector.load %arg4[%c0_12, %c0_13] : memref<16x128xbf16, #tpu.memory_space<vmem>>, vector<16x128xbf16>
    %cst_14 = arith.constant dense<0.000000e+00> : vector<16x128xf32>
    %27 = tpu.matmul %25, %26, %cst_14 {dimension_numbers = #tpu.dot_dimension_numbers<[1], [0], [0], [1], [0, 0, 1, 1], [], []>} : vector<16x16xbf16>, vector<16x128xbf16>, vector<16x128xf32> -> vector<16x128xf32>
    %28 = arith.addf %17, %27 : vector<16x128xf32>
    %29 = vector.broadcast %3 : vector<1x128xf32> to vector<16x128xf32>
    %30 = arith.addf %28, %29 : vector<16x128xf32>
    %31 = vector.extract_strided_slice %30 {offsets = [0, 0], sizes = [16, 64], strides = [1, 1]} : vector<16x128xf32> to vector<16x64xf32>
    %32 = vector.extract_strided_slice %30 {offsets = [0, 64], sizes = [16, 64], strides = [1, 1]} : vector<16x128xf32> to vector<16x64xf32>
    %33 = arith.maximumf %31, %32 : vector<16x64xf32>
    %c0_15 = arith.constant 0 : index
    %c0_16 = arith.constant 0 : index
    %34 = vector.load %arg6[%c0_15, %c0_16] : memref<1x64xf32, #tpu.memory_space<vmem>>, vector<1x64xf32>
    %c0_17 = arith.constant 0 : index
    %c0_18 = arith.constant 0 : index
    %35 = vector.load %arg7[%c0_17, %c0_18] : memref<1x64xf32, #tpu.memory_space<vmem>>, vector<1x64xf32>
    %cst_19 = arith.constant dense<0.000000e+00> : vector<16xf32>
    %36 = vector.multi_reduction <add>, %33, %cst_19 [1] : vector<16x64xf32> to vector<16xf32>
    %37 = vector.shape_cast %36 : vector<16xf32> to vector<16x1xf32>
    %cst_20 = arith.constant 6.400000e+01 : f32
    %38 = vector.broadcast %cst_20 : f32 to vector<16x1xf32>
    %39 = arith.divf %37, %38 : vector<16x1xf32>
    %40 = vector.broadcast %39 : vector<16x1xf32> to vector<16x64xf32>
    %41 = arith.subf %33, %40 : vector<16x64xf32>
    %42 = arith.mulf %41, %41 : vector<16x64xf32>
    %cst_21 = arith.constant dense<0.000000e+00> : vector<16xf32>
    %43 = vector.multi_reduction <add>, %42, %cst_21 [1] : vector<16x64xf32> to vector<16xf32>
    %44 = vector.shape_cast %43 : vector<16xf32> to vector<16x1xf32>
    %cst_22 = arith.constant 6.400000e+01 : f32
    %45 = vector.broadcast %cst_22 : f32 to vector<16x1xf32>
    %46 = arith.divf %44, %45 : vector<16x1xf32>
    %47 = vector.broadcast %39 : vector<16x1xf32> to vector<16x64xf32>
    %48 = arith.subf %33, %47 : vector<16x64xf32>
    %cst_23 = arith.constant 9.99999974E-6 : f32
    %49 = vector.broadcast %cst_23 : f32 to vector<16x1xf32>
    %50 = arith.addf %46, %49 : vector<16x1xf32>
    %51 = math.rsqrt %50 : vector<16x1xf32>
    %52 = vector.broadcast %51 : vector<16x1xf32> to vector<16x64xf32>
    %53 = arith.mulf %48, %52 : vector<16x64xf32>
    %54 = vector.broadcast %34 : vector<1x64xf32> to vector<16x64xf32>
    %55 = arith.mulf %53, %54 : vector<16x64xf32>
    %56 = vector.broadcast %35 : vector<1x64xf32> to vector<16x64xf32>
    %57 = arith.addf %55, %56 : vector<16x64xf32>
    %cst_24 = arith.constant 0.000000e+00 : f32
    %58 = vector.broadcast %cst_24 : f32 to vector<16x64xf32>
    %59 = arith.cmpf oge, %57, %58 : vector<16x64xf32>
    %cst_25 = arith.constant 0.00999999977 : f32
    %60 = vector.broadcast %cst_25 : f32 to vector<16x64xf32>
    %61 = arith.mulf %60, %57 : vector<16x64xf32>
    %62 = arith.select %59, %57, %61 : vector<16x64xi1>, vector<16x64xf32>
    %c0_26 = arith.constant 0 : index
    %c0_27 = arith.constant 0 : index
    %63 = vector.load %arg11[%c0_26, %c0_27] : memref<1x64xf32, #tpu.memory_space<vmem>>, vector<1x64xf32>
    %64 = arith.truncf %62 : vector<16x64xf32> to vector<16x64xbf16>
    %c0_28 = arith.constant 0 : index
    %c0_29 = arith.constant 0 : index
    %65 = vector.load %arg9[%c0_28, %c0_29] : memref<64x64xbf16, #tpu.memory_space<vmem>>, vector<64x64xbf16>
    %cst_30 = arith.constant dense<0.000000e+00> : vector<16x64xf32>
    %66 = tpu.matmul %64, %65, %cst_30 {dimension_numbers = #tpu.dot_dimension_numbers<[1], [0], [0], [1], [0, 0, 1, 1], [], []>} : vector<16x64xbf16>, vector<64x64xbf16>, vector<16x64xf32> -> vector<16x64xf32>
    %c0_i32_31 = arith.constant 0 : i32
    %67 = vector.broadcast %c0_i32_31 : i32 to vector<16x1xi32>
    %68 = arith.cmpi eq, %2, %67 : vector<16x1xi32>
    %c1_i32_32 = arith.constant 1 : i32
    %69 = tpu.dynamic_rotate %62 by %c1_i32_32 dim 0 : vector<16x64xf32>, i32 -> vector<16x64xf32>
    %cst_33 = arith.constant 0.000000e+00 : f32
    %70 = vector.shape_cast %68 : vector<16x1xi1> to vector<16x1xi1>
    %71 = vector.broadcast %70 : vector<16x1xi1> to vector<16x64xi1>
    %72 = vector.broadcast %cst_33 : f32 to vector<16x64xf32>
    %73 = arith.select %71, %72, %69 : vector<16x64xi1>, vector<16x64xf32>
    %74 = arith.truncf %73 : vector<16x64xf32> to vector<16x64xbf16>
    %c0_34 = arith.constant 0 : index
    %c0_35 = arith.constant 0 : index
    %75 = vector.load %arg8[%c0_34, %c0_35] : memref<64x64xbf16, #tpu.memory_space<vmem>>, vector<64x64xbf16>
    %cst_36 = arith.constant dense<0.000000e+00> : vector<16x64xf32>
    %76 = tpu.matmul %74, %75, %cst_36 {dimension_numbers = #tpu.dot_dimension_numbers<[1], [0], [0], [1], [0, 0, 1, 1], [], []>} : vector<16x64xbf16>, vector<64x64xbf16>, vector<16x64xf32> -> vector<16x64xf32>
    %77 = arith.addf %66, %76 : vector<16x64xf32>
    %c15_i32_37 = arith.constant 15 : i32
    %78 = vector.broadcast %c15_i32_37 : i32 to vector<16x1xi32>
    %79 = arith.cmpi eq, %2, %78 : vector<16x1xi32>
    %c15_i32_38 = arith.constant 15 : i32
    %80 = tpu.dynamic_rotate %62 by %c15_i32_38 dim 0 : vector<16x64xf32>, i32 -> vector<16x64xf32>
    %cst_39 = arith.constant 0.000000e+00 : f32
    %81 = vector.shape_cast %79 : vector<16x1xi1> to vector<16x1xi1>
    %82 = vector.broadcast %81 : vector<16x1xi1> to vector<16x64xi1>
    %83 = vector.broadcast %cst_39 : f32 to vector<16x64xf32>
    %84 = arith.select %82, %83, %80 : vector<16x64xi1>, vector<16x64xf32>
    %85 = arith.truncf %84 : vector<16x64xf32> to vector<16x64xbf16>
    %c0_40 = arith.constant 0 : index
    %c0_41 = arith.constant 0 : index
    %86 = vector.load %arg10[%c0_40, %c0_41] : memref<64x64xbf16, #tpu.memory_space<vmem>>, vector<64x64xbf16>
    %cst_42 = arith.constant dense<0.000000e+00> : vector<16x64xf32>
    %87 = tpu.matmul %85, %86, %cst_42 {dimension_numbers = #tpu.dot_dimension_numbers<[1], [0], [0], [1], [0, 0, 1, 1], [], []>} : vector<16x64xbf16>, vector<64x64xbf16>, vector<16x64xf32> -> vector<16x64xf32>
    %88 = arith.addf %77, %87 : vector<16x64xf32>
    %89 = vector.broadcast %63 : vector<1x64xf32> to vector<16x64xf32>
    %90 = arith.addf %88, %89 : vector<16x64xf32>
    %c0_43 = arith.constant 0 : index
    %c0_44 = arith.constant 0 : index
    %91 = vector.load %arg12[%c0_43, %c0_44] : memref<1x64xf32, #tpu.memory_space<vmem>>, vector<1x64xf32>
    %c0_45 = arith.constant 0 : index
    %c0_46 = arith.constant 0 : index
    %92 = vector.load %arg13[%c0_45, %c0_46] : memref<1x64xf32, #tpu.memory_space<vmem>>, vector<1x64xf32>
    %cst_47 = arith.constant dense<0.000000e+00> : vector<16xf32>
    %93 = vector.multi_reduction <add>, %90, %cst_47 [1] : vector<16x64xf32> to vector<16xf32>
    %94 = vector.shape_cast %93 : vector<16xf32> to vector<16x1xf32>
    %cst_48 = arith.constant 6.400000e+01 : f32
    %95 = vector.broadcast %cst_48 : f32 to vector<16x1xf32>
    %96 = arith.divf %94, %95 : vector<16x1xf32>
    %97 = vector.broadcast %96 : vector<16x1xf32> to vector<16x64xf32>
    %98 = arith.subf %90, %97 : vector<16x64xf32>
    %99 = arith.mulf %98, %98 : vector<16x64xf32>
    %cst_49 = arith.constant dense<0.000000e+00> : vector<16xf32>
    %100 = vector.multi_reduction <add>, %99, %cst_49 [1] : vector<16x64xf32> to vector<16xf32>
    %101 = vector.shape_cast %100 : vector<16xf32> to vector<16x1xf32>
    %cst_50 = arith.constant 6.400000e+01 : f32
    %102 = vector.broadcast %cst_50 : f32 to vector<16x1xf32>
    %103 = arith.divf %101, %102 : vector<16x1xf32>
    %104 = vector.broadcast %96 : vector<16x1xf32> to vector<16x64xf32>
    %105 = arith.subf %90, %104 : vector<16x64xf32>
    %cst_51 = arith.constant 9.99999974E-6 : f32
    %106 = vector.broadcast %cst_51 : f32 to vector<16x1xf32>
    %107 = arith.addf %103, %106 : vector<16x1xf32>
    %108 = math.rsqrt %107 : vector<16x1xf32>
    %109 = vector.broadcast %108 : vector<16x1xf32> to vector<16x64xf32>
    %110 = arith.mulf %105, %109 : vector<16x64xf32>
    %111 = vector.broadcast %91 : vector<1x64xf32> to vector<16x64xf32>
    %112 = arith.mulf %110, %111 : vector<16x64xf32>
    %113 = vector.broadcast %92 : vector<1x64xf32> to vector<16x64xf32>
    %114 = arith.addf %112, %113 : vector<16x64xf32>
    %cst_52 = arith.constant 0.000000e+00 : f32
    %115 = vector.broadcast %cst_52 : f32 to vector<16x64xf32>
    %116 = arith.cmpf oge, %114, %115 : vector<16x64xf32>
    %cst_53 = arith.constant 0.00999999977 : f32
    %117 = vector.broadcast %cst_53 : f32 to vector<16x64xf32>
    %118 = arith.mulf %117, %114 : vector<16x64xf32>
    %119 = arith.select %116, %114, %118 : vector<16x64xi1>, vector<16x64xf32>
    %120 = vector.shape_cast %119 : vector<16x64xf32> to vector<8x2x64xf32>
    %cst_54 = arith.constant dense<0xFF800000> : vector<8x64xf32>
    %121 = vector.multi_reduction <maximumf>, %120, %cst_54 [1] : vector<8x2x64xf32> to vector<8x64xf32>
    %122 = vector.extract_strided_slice %121 {offsets = [0, 0], sizes = [1, 64], strides = [1, 1]} : vector<8x64xf32> to vector<1x64xf32>
    %123 = vector.extract_strided_slice %121 {offsets = [1, 0], sizes = [1, 64], strides = [1, 1]} : vector<8x64xf32> to vector<1x64xf32>
    %124 = vector.extract_strided_slice %121 {offsets = [2, 0], sizes = [1, 64], strides = [1, 1]} : vector<8x64xf32> to vector<1x64xf32>
    %125 = vector.extract_strided_slice %121 {offsets = [3, 0], sizes = [1, 64], strides = [1, 1]} : vector<8x64xf32> to vector<1x64xf32>
    %126 = vector.extract_strided_slice %121 {offsets = [4, 0], sizes = [1, 64], strides = [1, 1]} : vector<8x64xf32> to vector<1x64xf32>
    %127 = vector.extract_strided_slice %121 {offsets = [5, 0], sizes = [1, 64], strides = [1, 1]} : vector<8x64xf32> to vector<1x64xf32>
    %128 = vector.extract_strided_slice %121 {offsets = [6, 0], sizes = [1, 64], strides = [1, 1]} : vector<8x64xf32> to vector<1x64xf32>
    %129 = vector.extract_strided_slice %121 {offsets = [7, 0], sizes = [1, 64], strides = [1, 1]} : vector<8x64xf32> to vector<1x64xf32>
    %130 = tpu.concatenate %122, %123, %124, %125, %126, %127, %128, %129 in 1 : vector<1x64xf32>, vector<1x64xf32>, vector<1x64xf32>, vector<1x64xf32>, vector<1x64xf32>, vector<1x64xf32>, vector<1x64xf32>, vector<1x64xf32> -> vector<1x512xf32>
    %c0_55 = arith.constant 0 : index
    %c0_56 = arith.constant 0 : index
    %c0_57 = arith.constant 0 : index
    %131 = vector.load %arg14[%c0_55, %c0_56, %c0_57] : memref<1x1x512xf32, #tpu.memory_space<vmem>>, vector<1x1x512xf32>
    %132 = vector.shape_cast %131 : vector<1x1x512xf32> to vector<1x512xf32>
    %133 = vector.shape_cast %130 : vector<1x512xf32> to vector<1x1x512xf32>
    tpu.vector_store %arg14[%c0_55, %c0_56, %c0_57], %133 {strides = array<i32>} : memref<1x1x512xf32, #tpu.memory_space<vmem>>, vector<1x1x512xf32>,
    return
  }
  func.func @transform_0(%arg0: i32) -> (i32, i32, i32) {
    %c0_i32 = arith.constant 0 : i32
    %c0_i32_0 = arith.constant 0 : i32
    %c0_i32_1 = arith.constant 0 : i32
    return %arg0, %c0_i32, %c0_i32_0 : i32, i32, i32
  }
  func.func @transform_1(%arg0: i32) -> (i32, i32) {
    %c0_i32 = arith.constant 0 : i32
    %c0_i32_0 = arith.constant 0 : i32
    %c0_i32_1 = arith.constant 0 : i32
    return %c0_i32, %c0_i32_0 : i32, i32
  }
  func.func @transform_2(%arg0: i32) -> (i32, i32) {
    %c0_i32 = arith.constant 0 : i32
    %c0_i32_0 = arith.constant 0 : i32
    %c0_i32_1 = arith.constant 0 : i32
    return %c0_i32, %c0_i32_0 : i32, i32
  }
  func.func @transform_3(%arg0: i32) -> (i32, i32) {
    %c0_i32 = arith.constant 0 : i32
    %c0_i32_0 = arith.constant 0 : i32
    %c0_i32_1 = arith.constant 0 : i32
    return %c0_i32, %c0_i32_0 : i32, i32
  }
  func.func @transform_4(%arg0: i32) -> (i32, i32) {
    %c0_i32 = arith.constant 0 : i32
    %c0_i32_0 = arith.constant 0 : i32
    %c0_i32_1 = arith.constant 0 : i32
    return %c0_i32, %c0_i32_0 : i32, i32
  }
  func.func @transform_5(%arg0: i32) -> (i32, i32) {
    %c0_i32 = arith.constant 0 : i32
    %c0_i32_0 = arith.constant 0 : i32
    %c0_i32_1 = arith.constant 0 : i32
    return %c0_i32, %c0_i32_0 : i32, i32
  }
  func.func @transform_6(%arg0: i32) -> (i32, i32) {
    %c0_i32 = arith.constant 0 : i32
    %c0_i32_0 = arith.constant 0 : i32
    %c0_i32_1 = arith.constant 0 : i32
    return %c0_i32, %c0_i32_0 : i32, i32
  }
  func.func @transform_7(%arg0: i32) -> (i32, i32) {
    %c0_i32 = arith.constant 0 : i32
    %c0_i32_0 = arith.constant 0 : i32
    %c0_i32_1 = arith.constant 0 : i32
    return %c0_i32, %c0_i32_0 : i32, i32
  }
  func.func @transform_8(%arg0: i32) -> (i32, i32) {
    %c0_i32 = arith.constant 0 : i32
    %c0_i32_0 = arith.constant 0 : i32
    %c0_i32_1 = arith.constant 0 : i32
    return %c0_i32, %c0_i32_0 : i32, i32
  }
  func.func @transform_9(%arg0: i32) -> (i32, i32) {
    %c0_i32 = arith.constant 0 : i32
    %c0_i32_0 = arith.constant 0 : i32
    %c0_i32_1 = arith.constant 0 : i32
    return %c0_i32, %c0_i32_0 : i32, i32
  }
  func.func @transform_10(%arg0: i32) -> (i32, i32) {
    %c0_i32 = arith.constant 0 : i32
    %c0_i32_0 = arith.constant 0 : i32
    %c0_i32_1 = arith.constant 0 : i32
    return %c0_i32, %c0_i32_0 : i32, i32
  }
  func.func @transform_11(%arg0: i32) -> (i32, i32) {
    %c0_i32 = arith.constant 0 : i32
    %c0_i32_0 = arith.constant 0 : i32
    %c0_i32_1 = arith.constant 0 : i32
    return %c0_i32, %c0_i32_0 : i32, i32
  }
  func.func @transform_12(%arg0: i32) -> (i32, i32) {
    %c0_i32 = arith.constant 0 : i32
    %c0_i32_0 = arith.constant 0 : i32
    %c0_i32_1 = arith.constant 0 : i32
    return %c0_i32, %c0_i32_0 : i32, i32
  }
  func.func @transform_13(%arg0: i32) -> (i32, i32, i32) {
    %c0_i32 = arith.constant 0 : i32
    %c0_i32_0 = arith.constant 0 : i32
    %c0_i32_1 = arith.constant 0 : i32
    return %arg0, %c0_i32, %c0_i32_0 : i32, i32, i32
  }
}

module attributes {stable_mosaic.version = 11 : i64} {
  func.func @_cnn_block_kernel(%arg0: i32, %arg1: memref<1x8x64xf32, #tpu.memory_space<vmem>>, %arg2: memref<64x64xbf16, #tpu.memory_space<vmem>>, %arg3: memref<64x64xbf16, #tpu.memory_space<vmem>>, %arg4: memref<64x64xbf16, #tpu.memory_space<vmem>>, %arg5: memref<1x64xf32, #tpu.memory_space<vmem>>, %arg6: memref<1x32xf32, #tpu.memory_space<vmem>>, %arg7: memref<1x32xf32, #tpu.memory_space<vmem>>, %arg8: memref<32x32xbf16, #tpu.memory_space<vmem>>, %arg9: memref<32x32xbf16, #tpu.memory_space<vmem>>, %arg10: memref<32x32xbf16, #tpu.memory_space<vmem>>, %arg11: memref<1x32xf32, #tpu.memory_space<vmem>>, %arg12: memref<1x32xf32, #tpu.memory_space<vmem>>, %arg13: memref<1x32xf32, #tpu.memory_space<vmem>>, %arg14: memref<1x1x128xf32, #tpu.memory_space<vmem>>) attributes {dimension_semantics = [#tpu.dimension_semantics<parallel>], iteration_bounds = array<i64: 2>, scalar_prefetch = 0 : i64, scratch_operands = 0 : i64, tpu.core_type = #tpu.core_type<tc>, window_params = [{transform_indices = @transform_0, window_bounds = array<i64: 1, 8, 64>}, {pipeline_mode = #tpu.pipeline_mode<synchronous>, transform_indices = @transform_1, window_bounds = array<i64: 64, 64>}, {pipeline_mode = #tpu.pipeline_mode<synchronous>, transform_indices = @transform_2, window_bounds = array<i64: 64, 64>}, {pipeline_mode = #tpu.pipeline_mode<synchronous>, transform_indices = @transform_3, window_bounds = array<i64: 64, 64>}, {pipeline_mode = #tpu.pipeline_mode<synchronous>, transform_indices = @transform_4, window_bounds = array<i64: 1, 64>}, {pipeline_mode = #tpu.pipeline_mode<synchronous>, transform_indices = @transform_5, window_bounds = array<i64: 1, 32>}, {pipeline_mode = #tpu.pipeline_mode<synchronous>, transform_indices = @transform_6, window_bounds = array<i64: 1, 32>}, {pipeline_mode = #tpu.pipeline_mode<synchronous>, transform_indices = @transform_7, window_bounds = array<i64: 32, 32>}, {pipeline_mode = #tpu.pipeline_mode<synchronous>, transform_indices = @transform_8, window_bounds = array<i64: 32, 32>}, {pipeline_mode = #tpu.pipeline_mode<synchronous>, transform_indices = @transform_9, window_bounds = array<i64: 32, 32>}, {pipeline_mode = #tpu.pipeline_mode<synchronous>, transform_indices = @transform_10, window_bounds = array<i64: 1, 32>}, {pipeline_mode = #tpu.pipeline_mode<synchronous>, transform_indices = @transform_11, window_bounds = array<i64: 1, 32>}, {pipeline_mode = #tpu.pipeline_mode<synchronous>, transform_indices = @transform_12, window_bounds = array<i64: 1, 32>}, {transform_indices = @transform_13, window_bounds = array<i64: 1, 1, 128>}]} {
    %c0 = arith.constant 0 : index
    %c0_0 = arith.constant 0 : index
    %c0_1 = arith.constant 0 : index
    %0 = vector.load %arg1[%c0, %c0_0, %c0_1] : memref<1x8x64xf32, #tpu.memory_space<vmem>>, vector<1x8x64xf32>
    %1 = vector.shape_cast %0 : vector<1x8x64xf32> to vector<8x64xf32>
    %2 = tpu.iota {dimensions = array<i32: 0>} : vector<8x1xi32>
    %c0_2 = arith.constant 0 : index
    %c0_3 = arith.constant 0 : index
    %3 = vector.load %arg5[%c0_2, %c0_3] : memref<1x64xf32, #tpu.memory_space<vmem>>, vector<1x64xf32>
    %4 = arith.truncf %1 : vector<8x64xf32> to vector<8x64xbf16>
    %c0_4 = arith.constant 0 : index
    %c0_5 = arith.constant 0 : index
    %5 = vector.load %arg3[%c0_4, %c0_5] : memref<64x64xbf16, #tpu.memory_space<vmem>>, vector<64x64xbf16>
    %cst = arith.constant dense<0.000000e+00> : vector<8x64xf32>
    %6 = tpu.matmul %4, %5, %cst {dimension_numbers = #tpu.dot_dimension_numbers<[1], [0], [0], [1], [0, 0, 1, 1], [], []>} : vector<8x64xbf16>, vector<64x64xbf16>, vector<8x64xf32> -> vector<8x64xf32>
    %c0_i32 = arith.constant 0 : i32
    %7 = vector.broadcast %c0_i32 : i32 to vector<8x1xi32>
    %8 = arith.cmpi eq, %2, %7 : vector<8x1xi32>
    %c1_i32 = arith.constant 1 : i32
    %9 = tpu.dynamic_rotate %1 by %c1_i32 dim 0 : vector<8x64xf32>, i32 -> vector<8x64xf32>
    %cst_6 = arith.constant 0.000000e+00 : f32
    %10 = vector.shape_cast %8 : vector<8x1xi1> to vector<8x1xi1>
    %11 = vector.broadcast %10 : vector<8x1xi1> to vector<8x64xi1>
    %12 = vector.broadcast %cst_6 : f32 to vector<8x64xf32>
    %13 = arith.select %11, %12, %9 : vector<8x64xi1>, vector<8x64xf32>
    %14 = arith.truncf %13 : vector<8x64xf32> to vector<8x64xbf16>
    %c0_7 = arith.constant 0 : index
    %c0_8 = arith.constant 0 : index
    %15 = vector.load %arg2[%c0_7, %c0_8] : memref<64x64xbf16, #tpu.memory_space<vmem>>, vector<64x64xbf16>
    %cst_9 = arith.constant dense<0.000000e+00> : vector<8x64xf32>
    %16 = tpu.matmul %14, %15, %cst_9 {dimension_numbers = #tpu.dot_dimension_numbers<[1], [0], [0], [1], [0, 0, 1, 1], [], []>} : vector<8x64xbf16>, vector<64x64xbf16>, vector<8x64xf32> -> vector<8x64xf32>
    %17 = arith.addf %6, %16 : vector<8x64xf32>
    %c7_i32 = arith.constant 7 : i32
    %18 = vector.broadcast %c7_i32 : i32 to vector<8x1xi32>
    %19 = arith.cmpi eq, %2, %18 : vector<8x1xi32>
    %c7_i32_10 = arith.constant 7 : i32
    %20 = tpu.dynamic_rotate %1 by %c7_i32_10 dim 0 : vector<8x64xf32>, i32 -> vector<8x64xf32>
    %cst_11 = arith.constant 0.000000e+00 : f32
    %21 = vector.shape_cast %19 : vector<8x1xi1> to vector<8x1xi1>
    %22 = vector.broadcast %21 : vector<8x1xi1> to vector<8x64xi1>
    %23 = vector.broadcast %cst_11 : f32 to vector<8x64xf32>
    %24 = arith.select %22, %23, %20 : vector<8x64xi1>, vector<8x64xf32>
    %25 = arith.truncf %24 : vector<8x64xf32> to vector<8x64xbf16>
    %c0_12 = arith.constant 0 : index
    %c0_13 = arith.constant 0 : index
    %26 = vector.load %arg4[%c0_12, %c0_13] : memref<64x64xbf16, #tpu.memory_space<vmem>>, vector<64x64xbf16>
    %cst_14 = arith.constant dense<0.000000e+00> : vector<8x64xf32>
    %27 = tpu.matmul %25, %26, %cst_14 {dimension_numbers = #tpu.dot_dimension_numbers<[1], [0], [0], [1], [0, 0, 1, 1], [], []>} : vector<8x64xbf16>, vector<64x64xbf16>, vector<8x64xf32> -> vector<8x64xf32>
    %28 = arith.addf %17, %27 : vector<8x64xf32>
    %29 = vector.broadcast %3 : vector<1x64xf32> to vector<8x64xf32>
    %30 = arith.addf %28, %29 : vector<8x64xf32>
    %31 = vector.extract_strided_slice %30 {offsets = [0, 0], sizes = [8, 32], strides = [1, 1]} : vector<8x64xf32> to vector<8x32xf32>
    %32 = vector.extract_strided_slice %30 {offsets = [0, 32], sizes = [8, 32], strides = [1, 1]} : vector<8x64xf32> to vector<8x32xf32>
    %33 = arith.maximumf %31, %32 : vector<8x32xf32>
    %c0_15 = arith.constant 0 : index
    %c0_16 = arith.constant 0 : index
    %34 = vector.load %arg6[%c0_15, %c0_16] : memref<1x32xf32, #tpu.memory_space<vmem>>, vector<1x32xf32>
    %c0_17 = arith.constant 0 : index
    %c0_18 = arith.constant 0 : index
    %35 = vector.load %arg7[%c0_17, %c0_18] : memref<1x32xf32, #tpu.memory_space<vmem>>, vector<1x32xf32>
    %cst_19 = arith.constant dense<0.000000e+00> : vector<8xf32>
    %36 = vector.multi_reduction <add>, %33, %cst_19 [1] : vector<8x32xf32> to vector<8xf32>
    %37 = vector.shape_cast %36 : vector<8xf32> to vector<8x1xf32>
    %cst_20 = arith.constant 3.200000e+01 : f32
    %38 = vector.broadcast %cst_20 : f32 to vector<8x1xf32>
    %39 = arith.divf %37, %38 : vector<8x1xf32>
    %40 = vector.broadcast %39 : vector<8x1xf32> to vector<8x32xf32>
    %41 = arith.subf %33, %40 : vector<8x32xf32>
    %42 = arith.mulf %41, %41 : vector<8x32xf32>
    %cst_21 = arith.constant dense<0.000000e+00> : vector<8xf32>
    %43 = vector.multi_reduction <add>, %42, %cst_21 [1] : vector<8x32xf32> to vector<8xf32>
    %44 = vector.shape_cast %43 : vector<8xf32> to vector<8x1xf32>
    %cst_22 = arith.constant 3.200000e+01 : f32
    %45 = vector.broadcast %cst_22 : f32 to vector<8x1xf32>
    %46 = arith.divf %44, %45 : vector<8x1xf32>
    %47 = vector.broadcast %39 : vector<8x1xf32> to vector<8x32xf32>
    %48 = arith.subf %33, %47 : vector<8x32xf32>
    %cst_23 = arith.constant 9.99999974E-6 : f32
    %49 = vector.broadcast %cst_23 : f32 to vector<8x1xf32>
    %50 = arith.addf %46, %49 : vector<8x1xf32>
    %51 = math.rsqrt %50 : vector<8x1xf32>
    %52 = vector.broadcast %51 : vector<8x1xf32> to vector<8x32xf32>
    %53 = arith.mulf %48, %52 : vector<8x32xf32>
    %54 = vector.broadcast %34 : vector<1x32xf32> to vector<8x32xf32>
    %55 = arith.mulf %53, %54 : vector<8x32xf32>
    %56 = vector.broadcast %35 : vector<1x32xf32> to vector<8x32xf32>
    %57 = arith.addf %55, %56 : vector<8x32xf32>
    %cst_24 = arith.constant 0.000000e+00 : f32
    %58 = vector.broadcast %cst_24 : f32 to vector<8x32xf32>
    %59 = arith.cmpf oge, %57, %58 : vector<8x32xf32>
    %cst_25 = arith.constant 0.00999999977 : f32
    %60 = vector.broadcast %cst_25 : f32 to vector<8x32xf32>
    %61 = arith.mulf %60, %57 : vector<8x32xf32>
    %62 = arith.select %59, %57, %61 : vector<8x32xi1>, vector<8x32xf32>
    %c0_26 = arith.constant 0 : index
    %c0_27 = arith.constant 0 : index
    %63 = vector.load %arg11[%c0_26, %c0_27] : memref<1x32xf32, #tpu.memory_space<vmem>>, vector<1x32xf32>
    %64 = arith.truncf %62 : vector<8x32xf32> to vector<8x32xbf16>
    %c0_28 = arith.constant 0 : index
    %c0_29 = arith.constant 0 : index
    %65 = vector.load %arg9[%c0_28, %c0_29] : memref<32x32xbf16, #tpu.memory_space<vmem>>, vector<32x32xbf16>
    %cst_30 = arith.constant dense<0.000000e+00> : vector<8x32xf32>
    %66 = tpu.matmul %64, %65, %cst_30 {dimension_numbers = #tpu.dot_dimension_numbers<[1], [0], [0], [1], [0, 0, 1, 1], [], []>} : vector<8x32xbf16>, vector<32x32xbf16>, vector<8x32xf32> -> vector<8x32xf32>
    %c0_i32_31 = arith.constant 0 : i32
    %67 = vector.broadcast %c0_i32_31 : i32 to vector<8x1xi32>
    %68 = arith.cmpi eq, %2, %67 : vector<8x1xi32>
    %c1_i32_32 = arith.constant 1 : i32
    %69 = tpu.dynamic_rotate %62 by %c1_i32_32 dim 0 : vector<8x32xf32>, i32 -> vector<8x32xf32>
    %cst_33 = arith.constant 0.000000e+00 : f32
    %70 = vector.shape_cast %68 : vector<8x1xi1> to vector<8x1xi1>
    %71 = vector.broadcast %70 : vector<8x1xi1> to vector<8x32xi1>
    %72 = vector.broadcast %cst_33 : f32 to vector<8x32xf32>
    %73 = arith.select %71, %72, %69 : vector<8x32xi1>, vector<8x32xf32>
    %74 = arith.truncf %73 : vector<8x32xf32> to vector<8x32xbf16>
    %c0_34 = arith.constant 0 : index
    %c0_35 = arith.constant 0 : index
    %75 = vector.load %arg8[%c0_34, %c0_35] : memref<32x32xbf16, #tpu.memory_space<vmem>>, vector<32x32xbf16>
    %cst_36 = arith.constant dense<0.000000e+00> : vector<8x32xf32>
    %76 = tpu.matmul %74, %75, %cst_36 {dimension_numbers = #tpu.dot_dimension_numbers<[1], [0], [0], [1], [0, 0, 1, 1], [], []>} : vector<8x32xbf16>, vector<32x32xbf16>, vector<8x32xf32> -> vector<8x32xf32>
    %77 = arith.addf %66, %76 : vector<8x32xf32>
    %c7_i32_37 = arith.constant 7 : i32
    %78 = vector.broadcast %c7_i32_37 : i32 to vector<8x1xi32>
    %79 = arith.cmpi eq, %2, %78 : vector<8x1xi32>
    %c7_i32_38 = arith.constant 7 : i32
    %80 = tpu.dynamic_rotate %62 by %c7_i32_38 dim 0 : vector<8x32xf32>, i32 -> vector<8x32xf32>
    %cst_39 = arith.constant 0.000000e+00 : f32
    %81 = vector.shape_cast %79 : vector<8x1xi1> to vector<8x1xi1>
    %82 = vector.broadcast %81 : vector<8x1xi1> to vector<8x32xi1>
    %83 = vector.broadcast %cst_39 : f32 to vector<8x32xf32>
    %84 = arith.select %82, %83, %80 : vector<8x32xi1>, vector<8x32xf32>
    %85 = arith.truncf %84 : vector<8x32xf32> to vector<8x32xbf16>
    %c0_40 = arith.constant 0 : index
    %c0_41 = arith.constant 0 : index
    %86 = vector.load %arg10[%c0_40, %c0_41] : memref<32x32xbf16, #tpu.memory_space<vmem>>, vector<32x32xbf16>
    %cst_42 = arith.constant dense<0.000000e+00> : vector<8x32xf32>
    %87 = tpu.matmul %85, %86, %cst_42 {dimension_numbers = #tpu.dot_dimension_numbers<[1], [0], [0], [1], [0, 0, 1, 1], [], []>} : vector<8x32xbf16>, vector<32x32xbf16>, vector<8x32xf32> -> vector<8x32xf32>
    %88 = arith.addf %77, %87 : vector<8x32xf32>
    %89 = vector.broadcast %63 : vector<1x32xf32> to vector<8x32xf32>
    %90 = arith.addf %88, %89 : vector<8x32xf32>
    %c0_43 = arith.constant 0 : index
    %c0_44 = arith.constant 0 : index
    %91 = vector.load %arg12[%c0_43, %c0_44] : memref<1x32xf32, #tpu.memory_space<vmem>>, vector<1x32xf32>
    %c0_45 = arith.constant 0 : index
    %c0_46 = arith.constant 0 : index
    %92 = vector.load %arg13[%c0_45, %c0_46] : memref<1x32xf32, #tpu.memory_space<vmem>>, vector<1x32xf32>
    %cst_47 = arith.constant dense<0.000000e+00> : vector<8xf32>
    %93 = vector.multi_reduction <add>, %90, %cst_47 [1] : vector<8x32xf32> to vector<8xf32>
    %94 = vector.shape_cast %93 : vector<8xf32> to vector<8x1xf32>
    %cst_48 = arith.constant 3.200000e+01 : f32
    %95 = vector.broadcast %cst_48 : f32 to vector<8x1xf32>
    %96 = arith.divf %94, %95 : vector<8x1xf32>
    %97 = vector.broadcast %96 : vector<8x1xf32> to vector<8x32xf32>
    %98 = arith.subf %90, %97 : vector<8x32xf32>
    %99 = arith.mulf %98, %98 : vector<8x32xf32>
    %cst_49 = arith.constant dense<0.000000e+00> : vector<8xf32>
    %100 = vector.multi_reduction <add>, %99, %cst_49 [1] : vector<8x32xf32> to vector<8xf32>
    %101 = vector.shape_cast %100 : vector<8xf32> to vector<8x1xf32>
    %cst_50 = arith.constant 3.200000e+01 : f32
    %102 = vector.broadcast %cst_50 : f32 to vector<8x1xf32>
    %103 = arith.divf %101, %102 : vector<8x1xf32>
    %104 = vector.broadcast %96 : vector<8x1xf32> to vector<8x32xf32>
    %105 = arith.subf %90, %104 : vector<8x32xf32>
    %cst_51 = arith.constant 9.99999974E-6 : f32
    %106 = vector.broadcast %cst_51 : f32 to vector<8x1xf32>
    %107 = arith.addf %103, %106 : vector<8x1xf32>
    %108 = math.rsqrt %107 : vector<8x1xf32>
    %109 = vector.broadcast %108 : vector<8x1xf32> to vector<8x32xf32>
    %110 = arith.mulf %105, %109 : vector<8x32xf32>
    %111 = vector.broadcast %91 : vector<1x32xf32> to vector<8x32xf32>
    %112 = arith.mulf %110, %111 : vector<8x32xf32>
    %113 = vector.broadcast %92 : vector<1x32xf32> to vector<8x32xf32>
    %114 = arith.addf %112, %113 : vector<8x32xf32>
    %cst_52 = arith.constant 0.000000e+00 : f32
    %115 = vector.broadcast %cst_52 : f32 to vector<8x32xf32>
    %116 = arith.cmpf oge, %114, %115 : vector<8x32xf32>
    %cst_53 = arith.constant 0.00999999977 : f32
    %117 = vector.broadcast %cst_53 : f32 to vector<8x32xf32>
    %118 = arith.mulf %117, %114 : vector<8x32xf32>
    %119 = arith.select %116, %114, %118 : vector<8x32xi1>, vector<8x32xf32>
    %120 = vector.shape_cast %119 : vector<8x32xf32> to vector<4x2x32xf32>
    %cst_54 = arith.constant dense<0xFF800000> : vector<4x32xf32>
    %121 = vector.multi_reduction <maximumf>, %120, %cst_54 [1] : vector<4x2x32xf32> to vector<4x32xf32>
    %122 = vector.extract_strided_slice %121 {offsets = [0, 0], sizes = [1, 32], strides = [1, 1]} : vector<4x32xf32> to vector<1x32xf32>
    %123 = vector.extract_strided_slice %121 {offsets = [1, 0], sizes = [1, 32], strides = [1, 1]} : vector<4x32xf32> to vector<1x32xf32>
    %124 = vector.extract_strided_slice %121 {offsets = [2, 0], sizes = [1, 32], strides = [1, 1]} : vector<4x32xf32> to vector<1x32xf32>
    %125 = vector.extract_strided_slice %121 {offsets = [3, 0], sizes = [1, 32], strides = [1, 1]} : vector<4x32xf32> to vector<1x32xf32>
    %126 = tpu.concatenate %122, %123, %124, %125 in 1 : vector<1x32xf32>, vector<1x32xf32>, vector<1x32xf32>, vector<1x32xf32> -> vector<1x128xf32>
    %c0_55 = arith.constant 0 : index
    %c0_56 = arith.constant 0 : index
    %c0_57 = arith.constant 0 : index
    %127 = vector.load %arg14[%c0_55, %c0_56, %c0_57] : memref<1x1x128xf32, #tpu.memory_space<vmem>>, vector<1x1x128xf32>
    %128 = vector.shape_cast %127 : vector<1x1x128xf32> to vector<1x128xf32>
    %129 = vector.shape_cast %126 : vector<1x128xf32> to vector<1x1x128xf32>
    tpu.vector_store %arg14[%c0_55, %c0_56, %c0_57], %129 {strides = array<i32>} : memref<1x1x128xf32, #tpu.memory_space<vmem>>, vector<1x1x128xf32>,
    return
  }
  func.func @transform_0(%arg0: i32) -> (i32, i32, i32) {
    %c0_i32 = arith.constant 0 : i32
    %c0_i32_0 = arith.constant 0 : i32
    %c0_i32_1 = arith.constant 0 : i32
    return %arg0, %c0_i32, %c0_i32_0 : i32, i32, i32
  }
  func.func @transform_1(%arg0: i32) -> (i32, i32) {
    %c0_i32 = arith.constant 0 : i32
    %c0_i32_0 = arith.constant 0 : i32
    %c0_i32_1 = arith.constant 0 : i32
    return %c0_i32, %c0_i32_0 : i32, i32
  }
  func.func @transform_2(%arg0: i32) -> (i32, i32) {
    %c0_i32 = arith.constant 0 : i32
    %c0_i32_0 = arith.constant 0 : i32
    %c0_i32_1 = arith.constant 0 : i32
    return %c0_i32, %c0_i32_0 : i32, i32
  }
  func.func @transform_3(%arg0: i32) -> (i32, i32) {
    %c0_i32 = arith.constant 0 : i32
    %c0_i32_0 = arith.constant 0 : i32
    %c0_i32_1 = arith.constant 0 : i32
    return %c0_i32, %c0_i32_0 : i32, i32
  }
  func.func @transform_4(%arg0: i32) -> (i32, i32) {
    %c0_i32 = arith.constant 0 : i32
    %c0_i32_0 = arith.constant 0 : i32
    %c0_i32_1 = arith.constant 0 : i32
    return %c0_i32, %c0_i32_0 : i32, i32
  }
  func.func @transform_5(%arg0: i32) -> (i32, i32) {
    %c0_i32 = arith.constant 0 : i32
    %c0_i32_0 = arith.constant 0 : i32
    %c0_i32_1 = arith.constant 0 : i32
    return %c0_i32, %c0_i32_0 : i32, i32
  }
  func.func @transform_6(%arg0: i32) -> (i32, i32) {
    %c0_i32 = arith.constant 0 : i32
    %c0_i32_0 = arith.constant 0 : i32
    %c0_i32_1 = arith.constant 0 : i32
    return %c0_i32, %c0_i32_0 : i32, i32
  }
  func.func @transform_7(%arg0: i32) -> (i32, i32) {
    %c0_i32 = arith.constant 0 : i32
    %c0_i32_0 = arith.constant 0 : i32
    %c0_i32_1 = arith.constant 0 : i32
    return %c0_i32, %c0_i32_0 : i32, i32
  }
  func.func @transform_8(%arg0: i32) -> (i32, i32) {
    %c0_i32 = arith.constant 0 : i32
    %c0_i32_0 = arith.constant 0 : i32
    %c0_i32_1 = arith.constant 0 : i32
    return %c0_i32, %c0_i32_0 : i32, i32
  }
  func.func @transform_9(%arg0: i32) -> (i32, i32) {
    %c0_i32 = arith.constant 0 : i32
    %c0_i32_0 = arith.constant 0 : i32
    %c0_i32_1 = arith.constant 0 : i32
    return %c0_i32, %c0_i32_0 : i32, i32
  }
  func.func @transform_10(%arg0: i32) -> (i32, i32) {
    %c0_i32 = arith.constant 0 : i32
    %c0_i32_0 = arith.constant 0 : i32
    %c0_i32_1 = arith.constant 0 : i32
    return %c0_i32, %c0_i32_0 : i32, i32
  }
  func.func @transform_11(%arg0: i32) -> (i32, i32) {
    %c0_i32 = arith.constant 0 : i32
    %c0_i32_0 = arith.constant 0 : i32
    %c0_i32_1 = arith.constant 0 : i32
    return %c0_i32, %c0_i32_0 : i32, i32
  }
  func.func @transform_12(%arg0: i32) -> (i32, i32) {
    %c0_i32 = arith.constant 0 : i32
    %c0_i32_0 = arith.constant 0 : i32
    %c0_i32_1 = arith.constant 0 : i32
    return %c0_i32, %c0_i32_0 : i32, i32
  }
  func.func @transform_13(%arg0: i32) -> (i32, i32, i32) {
    %c0_i32 = arith.constant 0 : i32
    %c0_i32_0 = arith.constant 0 : i32
    %c0_i32_1 = arith.constant 0 : i32
    return %arg0, %c0_i32, %c0_i32_0 : i32, i32, i32
  }
}

module attributes {stable_mosaic.version = 11 : i64} {
  func.func @_rnn_head_kernel(%arg0: i32, %arg1: memref<2x4x32xf32, #tpu.memory_space<vmem>>, %arg2: memref<32x64xbf16, #tpu.memory_space<vmem>>, %arg3: memref<1x64xf32, #tpu.memory_space<vmem>>, %arg4: memref<1x64xf32, #tpu.memory_space<vmem>>, %arg5: memref<32x64xbf16, #tpu.memory_space<vmem>>, %arg6: memref<32x64xbf16, #tpu.memory_space<vmem>>, %arg7: memref<1x64xf32, #tpu.memory_space<vmem>>, %arg8: memref<1x64xf32, #tpu.memory_space<vmem>>, %arg9: memref<32x64xbf16, #tpu.memory_space<vmem>>, %arg10: memref<32x64xbf16, #tpu.memory_space<vmem>>, %arg11: memref<1x64xf32, #tpu.memory_space<vmem>>, %arg12: memref<64x128xbf16, #tpu.memory_space<vmem>>, %arg13: memref<2x4x128xf32, #tpu.memory_space<vmem>>) attributes {dimension_semantics = [#tpu.dimension_semantics<parallel>], iteration_bounds = array<i64: 1>, scalar_prefetch = 0 : i64, scratch_operands = 0 : i64, tpu.core_type = #tpu.core_type<tc>, window_params = [{transform_indices = @transform_0, window_bounds = array<i64: 2, 4, 32>}, {pipeline_mode = #tpu.pipeline_mode<synchronous>, transform_indices = @transform_1, window_bounds = array<i64: 32, 64>}, {pipeline_mode = #tpu.pipeline_mode<synchronous>, transform_indices = @transform_2, window_bounds = array<i64: 1, 64>}, {pipeline_mode = #tpu.pipeline_mode<synchronous>, transform_indices = @transform_3, window_bounds = array<i64: 1, 64>}, {pipeline_mode = #tpu.pipeline_mode<synchronous>, transform_indices = @transform_4, window_bounds = array<i64: 32, 64>}, {pipeline_mode = #tpu.pipeline_mode<synchronous>, transform_indices = @transform_5, window_bounds = array<i64: 32, 64>}, {pipeline_mode = #tpu.pipeline_mode<synchronous>, transform_indices = @transform_6, window_bounds = array<i64: 1, 64>}, {pipeline_mode = #tpu.pipeline_mode<synchronous>, transform_indices = @transform_7, window_bounds = array<i64: 1, 64>}, {pipeline_mode = #tpu.pipeline_mode<synchronous>, transform_indices = @transform_8, window_bounds = array<i64: 32, 64>}, {pipeline_mode = #tpu.pipeline_mode<synchronous>, transform_indices = @transform_9, window_bounds = array<i64: 32, 64>}, {pipeline_mode = #tpu.pipeline_mode<synchronous>, transform_indices = @transform_10, window_bounds = array<i64: 1, 64>}, {pipeline_mode = #tpu.pipeline_mode<synchronous>, transform_indices = @transform_11, window_bounds = array<i64: 64, 128>}, {transform_indices = @transform_12, window_bounds = array<i64: 2, 4, 128>}]} {
    %c0 = arith.constant 0 : index
    %c0_0 = arith.constant 0 : index
    %c0_1 = arith.constant 0 : index
    %0 = vector.load %arg1[%c0, %c0_0, %c0_1] : memref<2x4x32xf32, #tpu.memory_space<vmem>>, vector<2x4x32xf32>
    %1 = vector.shape_cast %0 : vector<2x4x32xf32> to vector<8x32xf32>
    %2 = arith.truncf %1 : vector<8x32xf32> to vector<8x32xbf16>
    %c0_2 = arith.constant 0 : index
    %c0_3 = arith.constant 0 : index
    %3 = vector.load %arg2[%c0_2, %c0_3] : memref<32x64xbf16, #tpu.memory_space<vmem>>, vector<32x64xbf16>
    %cst = arith.constant dense<0.000000e+00> : vector<8x64xf32>
    %4 = tpu.matmul %2, %3, %cst {dimension_numbers = #tpu.dot_dimension_numbers<[1], [0], [0], [1], [0, 0, 1, 1], [], []>} : vector<8x32xbf16>, vector<32x64xbf16>, vector<8x64xf32> -> vector<8x64xf32>
    %cst_4 = arith.constant dense<0.000000e+00> : vector<8xf32>
    %5 = vector.multi_reduction <add>, %4, %cst_4 [1] : vector<8x64xf32> to vector<8xf32>
    %6 = vector.shape_cast %5 : vector<8xf32> to vector<8x1xf32>
    %cst_5 = arith.constant 6.400000e+01 : f32
    %7 = vector.broadcast %cst_5 : f32 to vector<8x1xf32>
    %8 = arith.divf %6, %7 : vector<8x1xf32>
    %9 = vector.broadcast %8 : vector<8x1xf32> to vector<8x64xf32>
    %10 = arith.subf %4, %9 : vector<8x64xf32>
    %11 = arith.mulf %10, %10 : vector<8x64xf32>
    %cst_6 = arith.constant dense<0.000000e+00> : vector<8xf32>
    %12 = vector.multi_reduction <add>, %11, %cst_6 [1] : vector<8x64xf32> to vector<8xf32>
    %13 = vector.shape_cast %12 : vector<8xf32> to vector<8x1xf32>
    %cst_7 = arith.constant 6.400000e+01 : f32
    %14 = vector.broadcast %cst_7 : f32 to vector<8x1xf32>
    %15 = arith.divf %13, %14 : vector<8x1xf32>
    %16 = vector.broadcast %8 : vector<8x1xf32> to vector<8x64xf32>
    %17 = arith.subf %4, %16 : vector<8x64xf32>
    %cst_8 = arith.constant 9.99999974E-6 : f32
    %18 = vector.broadcast %cst_8 : f32 to vector<8x1xf32>
    %19 = arith.addf %15, %18 : vector<8x1xf32>
    %20 = math.rsqrt %19 : vector<8x1xf32>
    %21 = vector.broadcast %20 : vector<8x1xf32> to vector<8x64xf32>
    %22 = arith.mulf %17, %21 : vector<8x64xf32>
    %c0_9 = arith.constant 0 : index
    %c0_10 = arith.constant 0 : index
    %23 = vector.load %arg3[%c0_9, %c0_10] : memref<1x64xf32, #tpu.memory_space<vmem>>, vector<1x64xf32>
    %24 = vector.broadcast %23 : vector<1x64xf32> to vector<8x64xf32>
    %25 = arith.mulf %22, %24 : vector<8x64xf32>
    %c0_11 = arith.constant 0 : index
    %c0_12 = arith.constant 0 : index
    %26 = vector.load %arg4[%c0_11, %c0_12] : memref<1x64xf32, #tpu.memory_space<vmem>>, vector<1x64xf32>
    %27 = vector.broadcast %26 : vector<1x64xf32> to vector<8x64xf32>
    %28 = arith.addf %25, %27 : vector<8x64xf32>
    %29 = vector.shape_cast %28 : vector<8x64xf32> to vector<2x4x64xf32>
    %c0_13 = arith.constant 0 : index
    %c0_14 = arith.constant 0 : index
    %30 = vector.load %arg5[%c0_13, %c0_14] : memref<32x64xbf16, #tpu.memory_space<vmem>>, vector<32x64xbf16>
    %c0_15 = arith.constant 0 : index
    %c0_16 = arith.constant 0 : index
    %31 = vector.load %arg9[%c0_15, %c0_16] : memref<32x64xbf16, #tpu.memory_space<vmem>>, vector<32x64xbf16>
    %c0_17 = arith.constant 0 : index
    %c0_18 = arith.constant 0 : index
    %32 = vector.load %arg6[%c0_17, %c0_18] : memref<32x64xbf16, #tpu.memory_space<vmem>>, vector<32x64xbf16>
    %c0_19 = arith.constant 0 : index
    %c0_20 = arith.constant 0 : index
    %33 = vector.load %arg7[%c0_19, %c0_20] : memref<1x64xf32, #tpu.memory_space<vmem>>, vector<1x64xf32>
    %c0_21 = arith.constant 0 : index
    %c0_22 = arith.constant 0 : index
    %34 = vector.load %arg8[%c0_21, %c0_22] : memref<1x64xf32, #tpu.memory_space<vmem>>, vector<1x64xf32>
    %c0_23 = arith.constant 0 : index
    %c0_24 = arith.constant 0 : index
    %35 = vector.load %arg10[%c0_23, %c0_24] : memref<32x64xbf16, #tpu.memory_space<vmem>>, vector<32x64xbf16>
    %c0_25 = arith.constant 0 : index
    %c0_26 = arith.constant 0 : index
    %36 = vector.load %arg11[%c0_25, %c0_26] : memref<1x64xf32, #tpu.memory_space<vmem>>, vector<1x64xf32>
    %c0_27 = arith.constant 0 : index
    %c0_28 = arith.constant 0 : index
    %37 = vector.load %arg12[%c0_27, %c0_28] : memref<64x128xbf16, #tpu.memory_space<vmem>>, vector<64x128xbf16>
    %cst_29 = arith.constant 0.000000e+00 : f32
    %38 = vector.broadcast %cst_29 : f32 to vector<2x32xf32>
    %cst_30 = arith.constant 0.000000e+00 : f32
    %39 = vector.broadcast %cst_30 : f32 to vector<2x32xf32>
    %40 = vector.extract_strided_slice %29 {offsets = [0, 0, 0], sizes = [2, 1, 64], strides = [1, 1, 1]} : vector<2x4x64xf32> to vector<2x1x64xf32>
    %41 = vector.shape_cast %40 : vector<2x1x64xf32> to vector<2x64xf32>
    %42 = arith.truncf %38 : vector<2x32xf32> to vector<2x32xbf16>
    %cst_31 = arith.constant dense<0.000000e+00> : vector<2x64xf32>
    %43 = tpu.matmul %42, %30, %cst_31 {dimension_numbers = #tpu.dot_dimension_numbers<[1], [0], [0], [1], [0, 0, 1, 1], [], []>} : vector<2x32xbf16>, vector<32x64xbf16>, vector<2x64xf32> -> vector<2x64xf32>
    %44 = arith.addf %41, %43 : vector<2x64xf32>
    %45 = vector.extract_strided_slice %44 {offsets = [0, 0], sizes = [2, 32], strides = [1, 1]} : vector<2x64xf32> to vector<2x32xf32>
    %46 = vector.extract_strided_slice %44 {offsets = [0, 32], sizes = [2, 32], strides = [1, 1]} : vector<2x64xf32> to vector<2x32xf32>
    %47 = arith.negf %46 : vector<2x32xf32>
    %48 = math.exp %47 : vector<2x32xf32>
    %cst_32 = arith.constant 1.000000e+00 : f32
    %49 = vector.broadcast %cst_32 : f32 to vector<2x32xf32>
    %50 = arith.addf %49, %48 : vector<2x32xf32>
    %51 = arith.divf %49, %50 : vector<2x32xf32>
    %52 = arith.mulf %51, %38 : vector<2x32xf32>
    %cst_33 = arith.constant 1.000000e+00 : f32
    %53 = vector.broadcast %cst_33 : f32 to vector<2x32xf32>
    %54 = arith.subf %53, %51 : vector<2x32xf32>
    %cst_34 = arith.constant 0.000000e+00 : f32
    %55 = vector.broadcast %cst_34 : f32 to vector<2x32xf32>
    %56 = arith.cmpf oge, %45, %55 : vector<2x32xf32>
    %cst_35 = arith.constant 0.00999999977 : f32
    %57 = vector.broadcast %cst_35 : f32 to vector<2x32xf32>
    %58 = arith.mulf %57, %45 : vector<2x32xf32>
    %59 = arith.select %56, %45, %58 : vector<2x32xi1>, vector<2x32xf32>
    %60 = arith.mulf %54, %59 : vector<2x32xf32>
    %61 = arith.addf %52, %60 : vector<2x32xf32>
    %62 = arith.truncf %61 : vector<2x32xf32> to vector<2x32xbf16>
    %cst_36 = arith.constant dense<0.000000e+00> : vector<2x64xf32>
    %63 = tpu.matmul %62, %32, %cst_36 {dimension_numbers = #tpu.dot_dimension_numbers<[1], [0], [0], [1], [0, 0, 1, 1], [], []>} : vector<2x32xbf16>, vector<32x64xbf16>, vector<2x64xf32> -> vector<2x64xf32>
    %cst_37 = arith.constant dense<0.000000e+00> : vector<2xf32>
    %64 = vector.multi_reduction <add>, %63, %cst_37 [1] : vector<2x64xf32> to vector<2xf32>
    %65 = vector.shape_cast %64 : vector<2xf32> to vector<2x1xf32>
    %cst_38 = arith.constant 6.400000e+01 : f32
    %66 = vector.broadcast %cst_38 : f32 to vector<2x1xf32>
    %67 = arith.divf %65, %66 : vector<2x1xf32>
    %68 = vector.broadcast %67 : vector<2x1xf32> to vector<2x64xf32>
    %69 = arith.subf %63, %68 : vector<2x64xf32>
    %70 = arith.mulf %69, %69 : vector<2x64xf32>
    %cst_39 = arith.constant dense<0.000000e+00> : vector<2xf32>
    %71 = vector.multi_reduction <add>, %70, %cst_39 [1] : vector<2x64xf32> to vector<2xf32>
    %72 = vector.shape_cast %71 : vector<2xf32> to vector<2x1xf32>
    %cst_40 = arith.constant 6.400000e+01 : f32
    %73 = vector.broadcast %cst_40 : f32 to vector<2x1xf32>
    %74 = arith.divf %72, %73 : vector<2x1xf32>
    %75 = vector.broadcast %67 : vector<2x1xf32> to vector<2x64xf32>
    %76 = arith.subf %63, %75 : vector<2x64xf32>
    %cst_41 = arith.constant 9.99999974E-6 : f32
    %77 = vector.broadcast %cst_41 : f32 to vector<2x1xf32>
    %78 = arith.addf %74, %77 : vector<2x1xf32>
    %79 = math.rsqrt %78 : vector<2x1xf32>
    %80 = vector.broadcast %79 : vector<2x1xf32> to vector<2x64xf32>
    %81 = arith.mulf %76, %80 : vector<2x64xf32>
    %82 = vector.broadcast %33 : vector<1x64xf32> to vector<2x64xf32>
    %83 = arith.mulf %81, %82 : vector<2x64xf32>
    %84 = vector.broadcast %34 : vector<1x64xf32> to vector<2x64xf32>
    %85 = arith.addf %83, %84 : vector<2x64xf32>
    %86 = arith.truncf %39 : vector<2x32xf32> to vector<2x32xbf16>
    %cst_42 = arith.constant dense<0.000000e+00> : vector<2x64xf32>
    %87 = tpu.matmul %86, %31, %cst_42 {dimension_numbers = #tpu.dot_dimension_numbers<[1], [0], [0], [1], [0, 0, 1, 1], [], []>} : vector<2x32xbf16>, vector<32x64xbf16>, vector<2x64xf32> -> vector<2x64xf32>
    %88 = arith.addf %85, %87 : vector<2x64xf32>
    %89 = vector.extract_strided_slice %88 {offsets = [0, 0], sizes = [2, 32], strides = [1, 1]} : vector<2x64xf32> to vector<2x32xf32>
    %90 = vector.extract_strided_slice %88 {offsets = [0, 32], sizes = [2, 32], strides = [1, 1]} : vector<2x64xf32> to vector<2x32xf32>
    %91 = arith.negf %90 : vector<2x32xf32>
    %92 = math.exp %91 : vector<2x32xf32>
    %cst_43 = arith.constant 1.000000e+00 : f32
    %93 = vector.broadcast %cst_43 : f32 to vector<2x32xf32>
    %94 = arith.addf %93, %92 : vector<2x32xf32>
    %95 = arith.divf %93, %94 : vector<2x32xf32>
    %96 = arith.mulf %95, %39 : vector<2x32xf32>
    %cst_44 = arith.constant 1.000000e+00 : f32
    %97 = vector.broadcast %cst_44 : f32 to vector<2x32xf32>
    %98 = arith.subf %97, %95 : vector<2x32xf32>
    %cst_45 = arith.constant 0.000000e+00 : f32
    %99 = vector.broadcast %cst_45 : f32 to vector<2x32xf32>
    %100 = arith.cmpf oge, %89, %99 : vector<2x32xf32>
    %cst_46 = arith.constant 0.00999999977 : f32
    %101 = vector.broadcast %cst_46 : f32 to vector<2x32xf32>
    %102 = arith.mulf %101, %89 : vector<2x32xf32>
    %103 = arith.select %100, %89, %102 : vector<2x32xi1>, vector<2x32xf32>
    %104 = arith.mulf %98, %103 : vector<2x32xf32>
    %105 = arith.addf %96, %104 : vector<2x32xf32>
    %106 = arith.truncf %105 : vector<2x32xf32> to vector<2x32xbf16>
    %cst_47 = arith.constant dense<0.000000e+00> : vector<2x64xf32>
    %107 = tpu.matmul %106, %35, %cst_47 {dimension_numbers = #tpu.dot_dimension_numbers<[1], [0], [0], [1], [0, 0, 1, 1], [], []>} : vector<2x32xbf16>, vector<32x64xbf16>, vector<2x64xf32> -> vector<2x64xf32>
    %108 = vector.broadcast %36 : vector<1x64xf32> to vector<2x64xf32>
    %109 = arith.addf %107, %108 : vector<2x64xf32>
    %cst_48 = arith.constant 0.000000e+00 : f32
    %110 = vector.broadcast %cst_48 : f32 to vector<2x64xf32>
    %111 = arith.cmpf oge, %109, %110 : vector<2x64xf32>
    %cst_49 = arith.constant 0.00999999977 : f32
    %112 = vector.broadcast %cst_49 : f32 to vector<2x64xf32>
    %113 = arith.mulf %112, %109 : vector<2x64xf32>
    %114 = arith.select %111, %109, %113 : vector<2x64xi1>, vector<2x64xf32>
    %115 = arith.truncf %114 : vector<2x64xf32> to vector<2x64xbf16>
    %cst_50 = arith.constant dense<0.000000e+00> : vector<2x128xf32>
    %116 = tpu.matmul %115, %37, %cst_50 {dimension_numbers = #tpu.dot_dimension_numbers<[1], [0], [0], [1], [0, 0, 1, 1], [], []>} : vector<2x64xbf16>, vector<64x128xbf16>, vector<2x128xf32> -> vector<2x128xf32>
    %c0_51 = arith.constant 0 : index
    %c0_52 = arith.constant 0 : index
    %c0_53 = arith.constant 0 : index
    %117 = vector.load %arg13[%c0_51, %c0_52, %c0_53] : memref<2x4x128xf32, #tpu.memory_space<vmem>>, vector<2x1x128xf32>
    %118 = vector.shape_cast %117 : vector<2x1x128xf32> to vector<2x128xf32>
    %119 = vector.shape_cast %116 : vector<2x128xf32> to vector<2x1x128xf32>
    tpu.vector_store %arg13[%c0_51, %c0_52, %c0_53], %119 {strides = array<i32>} : memref<2x4x128xf32, #tpu.memory_space<vmem>>, vector<2x1x128xf32>,
    %120 = vector.extract_strided_slice %29 {offsets = [0, 1, 0], sizes = [2, 1, 64], strides = [1, 1, 1]} : vector<2x4x64xf32> to vector<2x1x64xf32>
    %121 = vector.shape_cast %120 : vector<2x1x64xf32> to vector<2x64xf32>
    %122 = arith.truncf %61 : vector<2x32xf32> to vector<2x32xbf16>
    %cst_54 = arith.constant dense<0.000000e+00> : vector<2x64xf32>
    %123 = tpu.matmul %122, %30, %cst_54 {dimension_numbers = #tpu.dot_dimension_numbers<[1], [0], [0], [1], [0, 0, 1, 1], [], []>} : vector<2x32xbf16>, vector<32x64xbf16>, vector<2x64xf32> -> vector<2x64xf32>
    %124 = arith.addf %121, %123 : vector<2x64xf32>
    %125 = vector.extract_strided_slice %124 {offsets = [0, 0], sizes = [2, 32], strides = [1, 1]} : vector<2x64xf32> to vector<2x32xf32>
    %126 = vector.extract_strided_slice %124 {offsets = [0, 32], sizes = [2, 32], strides = [1, 1]} : vector<2x64xf32> to vector<2x32xf32>
    %127 = arith.negf %126 : vector<2x32xf32>
    %128 = math.exp %127 : vector<2x32xf32>
    %cst_55 = arith.constant 1.000000e+00 : f32
    %129 = vector.broadcast %cst_55 : f32 to vector<2x32xf32>
    %130 = arith.addf %129, %128 : vector<2x32xf32>
    %131 = arith.divf %129, %130 : vector<2x32xf32>
    %132 = arith.mulf %131, %61 : vector<2x32xf32>
    %cst_56 = arith.constant 1.000000e+00 : f32
    %133 = vector.broadcast %cst_56 : f32 to vector<2x32xf32>
    %134 = arith.subf %133, %131 : vector<2x32xf32>
    %cst_57 = arith.constant 0.000000e+00 : f32
    %135 = vector.broadcast %cst_57 : f32 to vector<2x32xf32>
    %136 = arith.cmpf oge, %125, %135 : vector<2x32xf32>
    %cst_58 = arith.constant 0.00999999977 : f32
    %137 = vector.broadcast %cst_58 : f32 to vector<2x32xf32>
    %138 = arith.mulf %137, %125 : vector<2x32xf32>
    %139 = arith.select %136, %125, %138 : vector<2x32xi1>, vector<2x32xf32>
    %140 = arith.mulf %134, %139 : vector<2x32xf32>
    %141 = arith.addf %132, %140 : vector<2x32xf32>
    %142 = arith.truncf %141 : vector<2x32xf32> to vector<2x32xbf16>
    %cst_59 = arith.constant dense<0.000000e+00> : vector<2x64xf32>
    %143 = tpu.matmul %142, %32, %cst_59 {dimension_numbers = #tpu.dot_dimension_numbers<[1], [0], [0], [1], [0, 0, 1, 1], [], []>} : vector<2x32xbf16>, vector<32x64xbf16>, vector<2x64xf32> -> vector<2x64xf32>
    %cst_60 = arith.constant dense<0.000000e+00> : vector<2xf32>
    %144 = vector.multi_reduction <add>, %143, %cst_60 [1] : vector<2x64xf32> to vector<2xf32>
    %145 = vector.shape_cast %144 : vector<2xf32> to vector<2x1xf32>
    %cst_61 = arith.constant 6.400000e+01 : f32
    %146 = vector.broadcast %cst_61 : f32 to vector<2x1xf32>
    %147 = arith.divf %145, %146 : vector<2x1xf32>
    %148 = vector.broadcast %147 : vector<2x1xf32> to vector<2x64xf32>
    %149 = arith.subf %143, %148 : vector<2x64xf32>
    %150 = arith.mulf %149, %149 : vector<2x64xf32>
    %cst_62 = arith.constant dense<0.000000e+00> : vector<2xf32>
    %151 = vector.multi_reduction <add>, %150, %cst_62 [1] : vector<2x64xf32> to vector<2xf32>
    %152 = vector.shape_cast %151 : vector<2xf32> to vector<2x1xf32>
    %cst_63 = arith.constant 6.400000e+01 : f32
    %153 = vector.broadcast %cst_63 : f32 to vector<2x1xf32>
    %154 = arith.divf %152, %153 : vector<2x1xf32>
    %155 = vector.broadcast %147 : vector<2x1xf32> to vector<2x64xf32>
    %156 = arith.subf %143, %155 : vector<2x64xf32>
    %cst_64 = arith.constant 9.99999974E-6 : f32
    %157 = vector.broadcast %cst_64 : f32 to vector<2x1xf32>
    %158 = arith.addf %154, %157 : vector<2x1xf32>
    %159 = math.rsqrt %158 : vector<2x1xf32>
    %160 = vector.broadcast %159 : vector<2x1xf32> to vector<2x64xf32>
    %161 = arith.mulf %156, %160 : vector<2x64xf32>
    %162 = vector.broadcast %33 : vector<1x64xf32> to vector<2x64xf32>
    %163 = arith.mulf %161, %162 : vector<2x64xf32>
    %164 = vector.broadcast %34 : vector<1x64xf32> to vector<2x64xf32>
    %165 = arith.addf %163, %164 : vector<2x64xf32>
    %166 = arith.truncf %105 : vector<2x32xf32> to vector<2x32xbf16>
    %cst_65 = arith.constant dense<0.000000e+00> : vector<2x64xf32>
    %167 = tpu.matmul %166, %31, %cst_65 {dimension_numbers = #tpu.dot_dimension_numbers<[1], [0], [0], [1], [0, 0, 1, 1], [], []>} : vector<2x32xbf16>, vector<32x64xbf16>, vector<2x64xf32> -> vector<2x64xf32>
    %168 = arith.addf %165, %167 : vector<2x64xf32>
    %169 = vector.extract_strided_slice %168 {offsets = [0, 0], sizes = [2, 32], strides = [1, 1]} : vector<2x64xf32> to vector<2x32xf32>
    %170 = vector.extract_strided_slice %168 {offsets = [0, 32], sizes = [2, 32], strides = [1, 1]} : vector<2x64xf32> to vector<2x32xf32>
    %171 = arith.negf %170 : vector<2x32xf32>
    %172 = math.exp %171 : vector<2x32xf32>
    %cst_66 = arith.constant 1.000000e+00 : f32
    %173 = vector.broadcast %cst_66 : f32 to vector<2x32xf32>
    %174 = arith.addf %173, %172 : vector<2x32xf32>
    %175 = arith.divf %173, %174 : vector<2x32xf32>
    %176 = arith.mulf %175, %105 : vector<2x32xf32>
    %cst_67 = arith.constant 1.000000e+00 : f32
    %177 = vector.broadcast %cst_67 : f32 to vector<2x32xf32>
    %178 = arith.subf %177, %175 : vector<2x32xf32>
    %cst_68 = arith.constant 0.000000e+00 : f32
    %179 = vector.broadcast %cst_68 : f32 to vector<2x32xf32>
    %180 = arith.cmpf oge, %169, %179 : vector<2x32xf32>
    %cst_69 = arith.constant 0.00999999977 : f32
    %181 = vector.broadcast %cst_69 : f32 to vector<2x32xf32>
    %182 = arith.mulf %181, %169 : vector<2x32xf32>
    %183 = arith.select %180, %169, %182 : vector<2x32xi1>, vector<2x32xf32>
    %184 = arith.mulf %178, %183 : vector<2x32xf32>
    %185 = arith.addf %176, %184 : vector<2x32xf32>
    %186 = arith.truncf %185 : vector<2x32xf32> to vector<2x32xbf16>
    %cst_70 = arith.constant dense<0.000000e+00> : vector<2x64xf32>
    %187 = tpu.matmul %186, %35, %cst_70 {dimension_numbers = #tpu.dot_dimension_numbers<[1], [0], [0], [1], [0, 0, 1, 1], [], []>} : vector<2x32xbf16>, vector<32x64xbf16>, vector<2x64xf32> -> vector<2x64xf32>
    %188 = vector.broadcast %36 : vector<1x64xf32> to vector<2x64xf32>
    %189 = arith.addf %187, %188 : vector<2x64xf32>
    %cst_71 = arith.constant 0.000000e+00 : f32
    %190 = vector.broadcast %cst_71 : f32 to vector<2x64xf32>
    %191 = arith.cmpf oge, %189, %190 : vector<2x64xf32>
    %cst_72 = arith.constant 0.00999999977 : f32
    %192 = vector.broadcast %cst_72 : f32 to vector<2x64xf32>
    %193 = arith.mulf %192, %189 : vector<2x64xf32>
    %194 = arith.select %191, %189, %193 : vector<2x64xi1>, vector<2x64xf32>
    %195 = arith.truncf %194 : vector<2x64xf32> to vector<2x64xbf16>
    %cst_73 = arith.constant dense<0.000000e+00> : vector<2x128xf32>
    %196 = tpu.matmul %195, %37, %cst_73 {dimension_numbers = #tpu.dot_dimension_numbers<[1], [0], [0], [1], [0, 0, 1, 1], [], []>} : vector<2x64xbf16>, vector<64x128xbf16>, vector<2x128xf32> -> vector<2x128xf32>
    %c0_74 = arith.constant 0 : index
    %c1 = arith.constant 1 : index
    %c0_75 = arith.constant 0 : index
    %197 = vector.load %arg13[%c0_74, %c1, %c0_75] : memref<2x4x128xf32, #tpu.memory_space<vmem>>, vector<2x1x128xf32>
    %198 = vector.shape_cast %197 : vector<2x1x128xf32> to vector<2x128xf32>
    %199 = vector.shape_cast %196 : vector<2x128xf32> to vector<2x1x128xf32>
    tpu.vector_store %arg13[%c0_74, %c1, %c0_75], %199 {strides = array<i32>} : memref<2x4x128xf32, #tpu.memory_space<vmem>>, vector<2x1x128xf32>,
    %200 = vector.extract_strided_slice %29 {offsets = [0, 2, 0], sizes = [2, 1, 64], strides = [1, 1, 1]} : vector<2x4x64xf32> to vector<2x1x64xf32>
    %201 = vector.shape_cast %200 : vector<2x1x64xf32> to vector<2x64xf32>
    %202 = arith.truncf %141 : vector<2x32xf32> to vector<2x32xbf16>
    %cst_76 = arith.constant dense<0.000000e+00> : vector<2x64xf32>
    %203 = tpu.matmul %202, %30, %cst_76 {dimension_numbers = #tpu.dot_dimension_numbers<[1], [0], [0], [1], [0, 0, 1, 1], [], []>} : vector<2x32xbf16>, vector<32x64xbf16>, vector<2x64xf32> -> vector<2x64xf32>
    %204 = arith.addf %201, %203 : vector<2x64xf32>
    %205 = vector.extract_strided_slice %204 {offsets = [0, 0], sizes = [2, 32], strides = [1, 1]} : vector<2x64xf32> to vector<2x32xf32>
    %206 = vector.extract_strided_slice %204 {offsets = [0, 32], sizes = [2, 32], strides = [1, 1]} : vector<2x64xf32> to vector<2x32xf32>
    %207 = arith.negf %206 : vector<2x32xf32>
    %208 = math.exp %207 : vector<2x32xf32>
    %cst_77 = arith.constant 1.000000e+00 : f32
    %209 = vector.broadcast %cst_77 : f32 to vector<2x32xf32>
    %210 = arith.addf %209, %208 : vector<2x32xf32>
    %211 = arith.divf %209, %210 : vector<2x32xf32>
    %212 = arith.mulf %211, %141 : vector<2x32xf32>
    %cst_78 = arith.constant 1.000000e+00 : f32
    %213 = vector.broadcast %cst_78 : f32 to vector<2x32xf32>
    %214 = arith.subf %213, %211 : vector<2x32xf32>
    %cst_79 = arith.constant 0.000000e+00 : f32
    %215 = vector.broadcast %cst_79 : f32 to vector<2x32xf32>
    %216 = arith.cmpf oge, %205, %215 : vector<2x32xf32>
    %cst_80 = arith.constant 0.00999999977 : f32
    %217 = vector.broadcast %cst_80 : f32 to vector<2x32xf32>
    %218 = arith.mulf %217, %205 : vector<2x32xf32>
    %219 = arith.select %216, %205, %218 : vector<2x32xi1>, vector<2x32xf32>
    %220 = arith.mulf %214, %219 : vector<2x32xf32>
    %221 = arith.addf %212, %220 : vector<2x32xf32>
    %222 = arith.truncf %221 : vector<2x32xf32> to vector<2x32xbf16>
    %cst_81 = arith.constant dense<0.000000e+00> : vector<2x64xf32>
    %223 = tpu.matmul %222, %32, %cst_81 {dimension_numbers = #tpu.dot_dimension_numbers<[1], [0], [0], [1], [0, 0, 1, 1], [], []>} : vector<2x32xbf16>, vector<32x64xbf16>, vector<2x64xf32> -> vector<2x64xf32>
    %cst_82 = arith.constant dense<0.000000e+00> : vector<2xf32>
    %224 = vector.multi_reduction <add>, %223, %cst_82 [1] : vector<2x64xf32> to vector<2xf32>
    %225 = vector.shape_cast %224 : vector<2xf32> to vector<2x1xf32>
    %cst_83 = arith.constant 6.400000e+01 : f32
    %226 = vector.broadcast %cst_83 : f32 to vector<2x1xf32>
    %227 = arith.divf %225, %226 : vector<2x1xf32>
    %228 = vector.broadcast %227 : vector<2x1xf32> to vector<2x64xf32>
    %229 = arith.subf %223, %228 : vector<2x64xf32>
    %230 = arith.mulf %229, %229 : vector<2x64xf32>
    %cst_84 = arith.constant dense<0.000000e+00> : vector<2xf32>
    %231 = vector.multi_reduction <add>, %230, %cst_84 [1] : vector<2x64xf32> to vector<2xf32>
    %232 = vector.shape_cast %231 : vector<2xf32> to vector<2x1xf32>
    %cst_85 = arith.constant 6.400000e+01 : f32
    %233 = vector.broadcast %cst_85 : f32 to vector<2x1xf32>
    %234 = arith.divf %232, %233 : vector<2x1xf32>
    %235 = vector.broadcast %227 : vector<2x1xf32> to vector<2x64xf32>
    %236 = arith.subf %223, %235 : vector<2x64xf32>
    %cst_86 = arith.constant 9.99999974E-6 : f32
    %237 = vector.broadcast %cst_86 : f32 to vector<2x1xf32>
    %238 = arith.addf %234, %237 : vector<2x1xf32>
    %239 = math.rsqrt %238 : vector<2x1xf32>
    %240 = vector.broadcast %239 : vector<2x1xf32> to vector<2x64xf32>
    %241 = arith.mulf %236, %240 : vector<2x64xf32>
    %242 = vector.broadcast %33 : vector<1x64xf32> to vector<2x64xf32>
    %243 = arith.mulf %241, %242 : vector<2x64xf32>
    %244 = vector.broadcast %34 : vector<1x64xf32> to vector<2x64xf32>
    %245 = arith.addf %243, %244 : vector<2x64xf32>
    %246 = arith.truncf %185 : vector<2x32xf32> to vector<2x32xbf16>
    %cst_87 = arith.constant dense<0.000000e+00> : vector<2x64xf32>
    %247 = tpu.matmul %246, %31, %cst_87 {dimension_numbers = #tpu.dot_dimension_numbers<[1], [0], [0], [1], [0, 0, 1, 1], [], []>} : vector<2x32xbf16>, vector<32x64xbf16>, vector<2x64xf32> -> vector<2x64xf32>
    %248 = arith.addf %245, %247 : vector<2x64xf32>
    %249 = vector.extract_strided_slice %248 {offsets = [0, 0], sizes = [2, 32], strides = [1, 1]} : vector<2x64xf32> to vector<2x32xf32>
    %250 = vector.extract_strided_slice %248 {offsets = [0, 32], sizes = [2, 32], strides = [1, 1]} : vector<2x64xf32> to vector<2x32xf32>
    %251 = arith.negf %250 : vector<2x32xf32>
    %252 = math.exp %251 : vector<2x32xf32>
    %cst_88 = arith.constant 1.000000e+00 : f32
    %253 = vector.broadcast %cst_88 : f32 to vector<2x32xf32>
    %254 = arith.addf %253, %252 : vector<2x32xf32>
    %255 = arith.divf %253, %254 : vector<2x32xf32>
    %256 = arith.mulf %255, %185 : vector<2x32xf32>
    %cst_89 = arith.constant 1.000000e+00 : f32
    %257 = vector.broadcast %cst_89 : f32 to vector<2x32xf32>
    %258 = arith.subf %257, %255 : vector<2x32xf32>
    %cst_90 = arith.constant 0.000000e+00 : f32
    %259 = vector.broadcast %cst_90 : f32 to vector<2x32xf32>
    %260 = arith.cmpf oge, %249, %259 : vector<2x32xf32>
    %cst_91 = arith.constant 0.00999999977 : f32
    %261 = vector.broadcast %cst_91 : f32 to vector<2x32xf32>
    %262 = arith.mulf %261, %249 : vector<2x32xf32>
    %263 = arith.select %260, %249, %262 : vector<2x32xi1>, vector<2x32xf32>
    %264 = arith.mulf %258, %263 : vector<2x32xf32>
    %265 = arith.addf %256, %264 : vector<2x32xf32>
    %266 = arith.truncf %265 : vector<2x32xf32> to vector<2x32xbf16>
    %cst_92 = arith.constant dense<0.000000e+00> : vector<2x64xf32>
    %267 = tpu.matmul %266, %35, %cst_92 {dimension_numbers = #tpu.dot_dimension_numbers<[1], [0], [0], [1], [0, 0, 1, 1], [], []>} : vector<2x32xbf16>, vector<32x64xbf16>, vector<2x64xf32> -> vector<2x64xf32>
    %268 = vector.broadcast %36 : vector<1x64xf32> to vector<2x64xf32>
    %269 = arith.addf %267, %268 : vector<2x64xf32>
    %cst_93 = arith.constant 0.000000e+00 : f32
    %270 = vector.broadcast %cst_93 : f32 to vector<2x64xf32>
    %271 = arith.cmpf oge, %269, %270 : vector<2x64xf32>
    %cst_94 = arith.constant 0.00999999977 : f32
    %272 = vector.broadcast %cst_94 : f32 to vector<2x64xf32>
    %273 = arith.mulf %272, %269 : vector<2x64xf32>
    %274 = arith.select %271, %269, %273 : vector<2x64xi1>, vector<2x64xf32>
    %275 = arith.truncf %274 : vector<2x64xf32> to vector<2x64xbf16>
    %cst_95 = arith.constant dense<0.000000e+00> : vector<2x128xf32>
    %276 = tpu.matmul %275, %37, %cst_95 {dimension_numbers = #tpu.dot_dimension_numbers<[1], [0], [0], [1], [0, 0, 1, 1], [], []>} : vector<2x64xbf16>, vector<64x128xbf16>, vector<2x128xf32> -> vector<2x128xf32>
    %c0_96 = arith.constant 0 : index
    %c2 = arith.constant 2 : index
    %c0_97 = arith.constant 0 : index
    %277 = vector.load %arg13[%c0_96, %c2, %c0_97] : memref<2x4x128xf32, #tpu.memory_space<vmem>>, vector<2x1x128xf32>
    %278 = vector.shape_cast %277 : vector<2x1x128xf32> to vector<2x128xf32>
    %279 = vector.shape_cast %276 : vector<2x128xf32> to vector<2x1x128xf32>
    tpu.vector_store %arg13[%c0_96, %c2, %c0_97], %279 {strides = array<i32>} : memref<2x4x128xf32, #tpu.memory_space<vmem>>, vector<2x1x128xf32>,
    %280 = vector.extract_strided_slice %29 {offsets = [0, 3, 0], sizes = [2, 1, 64], strides = [1, 1, 1]} : vector<2x4x64xf32> to vector<2x1x64xf32>
    %281 = vector.shape_cast %280 : vector<2x1x64xf32> to vector<2x64xf32>
    %282 = arith.truncf %221 : vector<2x32xf32> to vector<2x32xbf16>
    %cst_98 = arith.constant dense<0.000000e+00> : vector<2x64xf32>
    %283 = tpu.matmul %282, %30, %cst_98 {dimension_numbers = #tpu.dot_dimension_numbers<[1], [0], [0], [1], [0, 0, 1, 1], [], []>} : vector<2x32xbf16>, vector<32x64xbf16>, vector<2x64xf32> -> vector<2x64xf32>
    %284 = arith.addf %281, %283 : vector<2x64xf32>
    %285 = vector.extract_strided_slice %284 {offsets = [0, 0], sizes = [2, 32], strides = [1, 1]} : vector<2x64xf32> to vector<2x32xf32>
    %286 = vector.extract_strided_slice %284 {offsets = [0, 32], sizes = [2, 32], strides = [1, 1]} : vector<2x64xf32> to vector<2x32xf32>
    %287 = arith.negf %286 : vector<2x32xf32>
    %288 = math.exp %287 : vector<2x32xf32>
    %cst_99 = arith.constant 1.000000e+00 : f32
    %289 = vector.broadcast %cst_99 : f32 to vector<2x32xf32>
    %290 = arith.addf %289, %288 : vector<2x32xf32>
    %291 = arith.divf %289, %290 : vector<2x32xf32>
    %292 = arith.mulf %291, %221 : vector<2x32xf32>
    %cst_100 = arith.constant 1.000000e+00 : f32
    %293 = vector.broadcast %cst_100 : f32 to vector<2x32xf32>
    %294 = arith.subf %293, %291 : vector<2x32xf32>
    %cst_101 = arith.constant 0.000000e+00 : f32
    %295 = vector.broadcast %cst_101 : f32 to vector<2x32xf32>
    %296 = arith.cmpf oge, %285, %295 : vector<2x32xf32>
    %cst_102 = arith.constant 0.00999999977 : f32
    %297 = vector.broadcast %cst_102 : f32 to vector<2x32xf32>
    %298 = arith.mulf %297, %285 : vector<2x32xf32>
    %299 = arith.select %296, %285, %298 : vector<2x32xi1>, vector<2x32xf32>
    %300 = arith.mulf %294, %299 : vector<2x32xf32>
    %301 = arith.addf %292, %300 : vector<2x32xf32>
    %302 = arith.truncf %301 : vector<2x32xf32> to vector<2x32xbf16>
    %cst_103 = arith.constant dense<0.000000e+00> : vector<2x64xf32>
    %303 = tpu.matmul %302, %32, %cst_103 {dimension_numbers = #tpu.dot_dimension_numbers<[1], [0], [0], [1], [0, 0, 1, 1], [], []>} : vector<2x32xbf16>, vector<32x64xbf16>, vector<2x64xf32> -> vector<2x64xf32>
    %cst_104 = arith.constant dense<0.000000e+00> : vector<2xf32>
    %304 = vector.multi_reduction <add>, %303, %cst_104 [1] : vector<2x64xf32> to vector<2xf32>
    %305 = vector.shape_cast %304 : vector<2xf32> to vector<2x1xf32>
    %cst_105 = arith.constant 6.400000e+01 : f32
    %306 = vector.broadcast %cst_105 : f32 to vector<2x1xf32>
    %307 = arith.divf %305, %306 : vector<2x1xf32>
    %308 = vector.broadcast %307 : vector<2x1xf32> to vector<2x64xf32>
    %309 = arith.subf %303, %308 : vector<2x64xf32>
    %310 = arith.mulf %309, %309 : vector<2x64xf32>
    %cst_106 = arith.constant dense<0.000000e+00> : vector<2xf32>
    %311 = vector.multi_reduction <add>, %310, %cst_106 [1] : vector<2x64xf32> to vector<2xf32>
    %312 = vector.shape_cast %311 : vector<2xf32> to vector<2x1xf32>
    %cst_107 = arith.constant 6.400000e+01 : f32
    %313 = vector.broadcast %cst_107 : f32 to vector<2x1xf32>
    %314 = arith.divf %312, %313 : vector<2x1xf32>
    %315 = vector.broadcast %307 : vector<2x1xf32> to vector<2x64xf32>
    %316 = arith.subf %303, %315 : vector<2x64xf32>
    %cst_108 = arith.constant 9.99999974E-6 : f32
    %317 = vector.broadcast %cst_108 : f32 to vector<2x1xf32>
    %318 = arith.addf %314, %317 : vector<2x1xf32>
    %319 = math.rsqrt %318 : vector<2x1xf32>
    %320 = vector.broadcast %319 : vector<2x1xf32> to vector<2x64xf32>
    %321 = arith.mulf %316, %320 : vector<2x64xf32>
    %322 = vector.broadcast %33 : vector<1x64xf32> to vector<2x64xf32>
    %323 = arith.mulf %321, %322 : vector<2x64xf32>
    %324 = vector.broadcast %34 : vector<1x64xf32> to vector<2x64xf32>
    %325 = arith.addf %323, %324 : vector<2x64xf32>
    %326 = arith.truncf %265 : vector<2x32xf32> to vector<2x32xbf16>
    %cst_109 = arith.constant dense<0.000000e+00> : vector<2x64xf32>
    %327 = tpu.matmul %326, %31, %cst_109 {dimension_numbers = #tpu.dot_dimension_numbers<[1], [0], [0], [1], [0, 0, 1, 1], [], []>} : vector<2x32xbf16>, vector<32x64xbf16>, vector<2x64xf32> -> vector<2x64xf32>
    %328 = arith.addf %325, %327 : vector<2x64xf32>
    %329 = vector.extract_strided_slice %328 {offsets = [0, 0], sizes = [2, 32], strides = [1, 1]} : vector<2x64xf32> to vector<2x32xf32>
    %330 = vector.extract_strided_slice %328 {offsets = [0, 32], sizes = [2, 32], strides = [1, 1]} : vector<2x64xf32> to vector<2x32xf32>
    %331 = arith.negf %330 : vector<2x32xf32>
    %332 = math.exp %331 : vector<2x32xf32>
    %cst_110 = arith.constant 1.000000e+00 : f32
    %333 = vector.broadcast %cst_110 : f32 to vector<2x32xf32>
    %334 = arith.addf %333, %332 : vector<2x32xf32>
    %335 = arith.divf %333, %334 : vector<2x32xf32>
    %336 = arith.mulf %335, %265 : vector<2x32xf32>
    %cst_111 = arith.constant 1.000000e+00 : f32
    %337 = vector.broadcast %cst_111 : f32 to vector<2x32xf32>
    %338 = arith.subf %337, %335 : vector<2x32xf32>
    %cst_112 = arith.constant 0.000000e+00 : f32
    %339 = vector.broadcast %cst_112 : f32 to vector<2x32xf32>
    %340 = arith.cmpf oge, %329, %339 : vector<2x32xf32>
    %cst_113 = arith.constant 0.00999999977 : f32
    %341 = vector.broadcast %cst_113 : f32 to vector<2x32xf32>
    %342 = arith.mulf %341, %329 : vector<2x32xf32>
    %343 = arith.select %340, %329, %342 : vector<2x32xi1>, vector<2x32xf32>
    %344 = arith.mulf %338, %343 : vector<2x32xf32>
    %345 = arith.addf %336, %344 : vector<2x32xf32>
    %346 = arith.truncf %345 : vector<2x32xf32> to vector<2x32xbf16>
    %cst_114 = arith.constant dense<0.000000e+00> : vector<2x64xf32>
    %347 = tpu.matmul %346, %35, %cst_114 {dimension_numbers = #tpu.dot_dimension_numbers<[1], [0], [0], [1], [0, 0, 1, 1], [], []>} : vector<2x32xbf16>, vector<32x64xbf16>, vector<2x64xf32> -> vector<2x64xf32>
    %348 = vector.broadcast %36 : vector<1x64xf32> to vector<2x64xf32>
    %349 = arith.addf %347, %348 : vector<2x64xf32>
    %cst_115 = arith.constant 0.000000e+00 : f32
    %350 = vector.broadcast %cst_115 : f32 to vector<2x64xf32>
    %351 = arith.cmpf oge, %349, %350 : vector<2x64xf32>
    %cst_116 = arith.constant 0.00999999977 : f32
    %352 = vector.broadcast %cst_116 : f32 to vector<2x64xf32>
    %353 = arith.mulf %352, %349 : vector<2x64xf32>
    %354 = arith.select %351, %349, %353 : vector<2x64xi1>, vector<2x64xf32>
    %355 = arith.truncf %354 : vector<2x64xf32> to vector<2x64xbf16>
    %cst_117 = arith.constant dense<0.000000e+00> : vector<2x128xf32>
    %356 = tpu.matmul %355, %37, %cst_117 {dimension_numbers = #tpu.dot_dimension_numbers<[1], [0], [0], [1], [0, 0, 1, 1], [], []>} : vector<2x64xbf16>, vector<64x128xbf16>, vector<2x128xf32> -> vector<2x128xf32>
    %c0_118 = arith.constant 0 : index
    %c3 = arith.constant 3 : index
    %c0_119 = arith.constant 0 : index
    %357 = vector.load %arg13[%c0_118, %c3, %c0_119] : memref<2x4x128xf32, #tpu.memory_space<vmem>>, vector<2x1x128xf32>
    %358 = vector.shape_cast %357 : vector<2x1x128xf32> to vector<2x128xf32>
    %359 = vector.shape_cast %356 : vector<2x128xf32> to vector<2x1x128xf32>
    tpu.vector_store %arg13[%c0_118, %c3, %c0_119], %359 {strides = array<i32>} : memref<2x4x128xf32, #tpu.memory_space<vmem>>, vector<2x1x128xf32>,
    return
  }
  func.func @transform_0(%arg0: i32) -> (i32, i32, i32) {
    %c0_i32 = arith.constant 0 : i32
    %c0_i32_0 = arith.constant 0 : i32
    %c0_i32_1 = arith.constant 0 : i32
    return %arg0, %c0_i32, %c0_i32_0 : i32, i32, i32
  }
  func.func @transform_1(%arg0: i32) -> (i32, i32) {
    %c0_i32 = arith.constant 0 : i32
    %c0_i32_0 = arith.constant 0 : i32
    %c0_i32_1 = arith.constant 0 : i32
    return %c0_i32, %c0_i32_0 : i32, i32
  }
  func.func @transform_2(%arg0: i32) -> (i32, i32) {
    %c0_i32 = arith.constant 0 : i32
    %c0_i32_0 = arith.constant 0 : i32
    %c0_i32_1 = arith.constant 0 : i32
    return %c0_i32, %c0_i32_0 : i32, i32
  }
  func.func @transform_3(%arg0: i32) -> (i32, i32) {
    %c0_i32 = arith.constant 0 : i32
    %c0_i32_0 = arith.constant 0 : i32
    %c0_i32_1 = arith.constant 0 : i32
    return %c0_i32, %c0_i32_0 : i32, i32
  }
  func.func @transform_4(%arg0: i32) -> (i32, i32) {
    %c0_i32 = arith.constant 0 : i32
    %c0_i32_0 = arith.constant 0 : i32
    %c0_i32_1 = arith.constant 0 : i32
    return %c0_i32, %c0_i32_0 : i32, i32
  }
  func.func @transform_5(%arg0: i32) -> (i32, i32) {
    %c0_i32 = arith.constant 0 : i32
    %c0_i32_0 = arith.constant 0 : i32
    %c0_i32_1 = arith.constant 0 : i32
    return %c0_i32, %c0_i32_0 : i32, i32
  }
  func.func @transform_6(%arg0: i32) -> (i32, i32) {
    %c0_i32 = arith.constant 0 : i32
    %c0_i32_0 = arith.constant 0 : i32
    %c0_i32_1 = arith.constant 0 : i32
    return %c0_i32, %c0_i32_0 : i32, i32
  }
  func.func @transform_7(%arg0: i32) -> (i32, i32) {
    %c0_i32 = arith.constant 0 : i32
    %c0_i32_0 = arith.constant 0 : i32
    %c0_i32_1 = arith.constant 0 : i32
    return %c0_i32, %c0_i32_0 : i32, i32
  }
  func.func @transform_8(%arg0: i32) -> (i32, i32) {
    %c0_i32 = arith.constant 0 : i32
    %c0_i32_0 = arith.constant 0 : i32
    %c0_i32_1 = arith.constant 0 : i32
    return %c0_i32, %c0_i32_0 : i32, i32
  }
  func.func @transform_9(%arg0: i32) -> (i32, i32) {
    %c0_i32 = arith.constant 0 : i32
    %c0_i32_0 = arith.constant 0 : i32
    %c0_i32_1 = arith.constant 0 : i32
    return %c0_i32, %c0_i32_0 : i32, i32
  }
  func.func @transform_10(%arg0: i32) -> (i32, i32) {
    %c0_i32 = arith.constant 0 : i32
    %c0_i32_0 = arith.constant 0 : i32
    %c0_i32_1 = arith.constant 0 : i32
    return %c0_i32, %c0_i32_0 : i32, i32
  }
  func.func @transform_11(%arg0: i32) -> (i32, i32) {
    %c0_i32 = arith.constant 0 : i32
    %c0_i32_0 = arith.constant 0 : i32
    %c0_i32_1 = arith.constant 0 : i32
    return %c0_i32, %c0_i32_0 : i32, i32
  }
  func.func @transform_12(%arg0: i32) -> (i32, i32, i32) {
    %c0_i32 = arith.constant 0 : i32
    %c0_i32_0 = arith.constant 0 : i32
    %c0_i32_1 = arith.constant 0 : i32
    return %arg0, %c0_i32, %c0_i32_0 : i32, i32, i32
  }
}

</mosaic_0001>

<llo_original>
// kernel: apply_cdrnn_forward.3
$region0: #{apply_cdrnn_forward.3}
  #allocation0 [shape = 'u32[]', space=smem, size = 0x4, offset = 0x4, fixed_abs, tag = 'smem constant byte address 0x4 - core index']
  #allocation1 [shape = 'u32[144,128]{1,0:T(1,128)}', space=vmem, size = 0x12000, scoped, tag = 'internal scratch']
  %s0 = inlined_call_operand.vmem [shape: f32[2,16,16], index: 0, kind: input, shape index: {}]
  %s1 = inlined_call_operand.vmem [shape: bf16[16,128], index: 1, kind: input, shape index: {}]
  %s2 = inlined_call_operand.vmem [shape: bf16[16,128], index: 2, kind: input, shape index: {}]
  %s3 = inlined_call_operand.vmem [shape: bf16[16,128], index: 3, kind: input, shape index: {}]
  %s4 = inlined_call_operand.vmem [shape: f32[1,128], index: 4, kind: input, shape index: {}]
  %s5 = inlined_call_operand.vmem [shape: f32[1,64], index: 5, kind: input, shape index: {}]
  %s6 = inlined_call_operand.vmem [shape: f32[1,64], index: 6, kind: input, shape index: {}]
  %s7 = inlined_call_operand.vmem [shape: bf16[64,64], index: 7, kind: input, shape index: {}]
  %s8 = inlined_call_operand.vmem [shape: bf16[64,64], index: 8, kind: input, shape index: {}]
  %s9 = inlined_call_operand.vmem [shape: bf16[64,64], index: 9, kind: input, shape index: {}]
  %s10 = inlined_call_operand.vmem [shape: f32[1,64], index: 10, kind: input, shape index: {}]
  %s11 = inlined_call_operand.vmem [shape: f32[1,64], index: 11, kind: input, shape index: {}]
  %s12 = inlined_call_operand.vmem [shape: f32[1,64], index: 12, kind: input, shape index: {}]
  %s13 = inlined_call_operand.vmem [shape: f32[2,1,512], index: 13, kind: output, shape index: {}]
  %s14 = sld [smem:[#allocation0]]
  $region85: #{apply_cdrnn_forward.3} parent=0
    _
  %s16 = ssub.s32 1, %s14
  %s17 = scalar_select 0, %s16, %s14
  loop: start=0, step=1, limit=4
  $region2: #{apply_cdrnn_forward.3} parent=0 // loop_pre_header
    _
  $region3: #{apply_cdrnn_forward.3} parent=0 // loop_header
    %s19 = sphi 0, %s23
    %p20 = scmp.ge.s32.totalorder %s19, 4
    %s29 = sphi 0, %s31
    %s32 = sphi 0, %s29
    %s33 = sphi 0, %s32
    %s49 = sphi 0, %s33
    %s53 = sphi 0, %s53
    %s55 = sphi 0, %s53
    %s56 = sphi 0, %s55
    %s70 = sphi 0, %s56
    %s74 = sphi 0, %s74
    %s76 = sphi 0, %s74
    %s77 = sphi 0, %s76
    %s91 = sphi 0, %s77
    %s95 = sphi 0, %s95
    %s97 = sphi 0, %s95
    %s98 = sphi 0, %s97
    %s112 = sphi 0, %s98
    %s116 = sphi 0, %s116
    %s118 = sphi 0, %s116
    %s119 = sphi 0, %s118
    %s133 = sphi 0, %s119
    %s137 = sphi 0, %s137
    %s139 = sphi 0, %s137
    %s140 = sphi 0, %s139
    %s154 = sphi 0, %s140
    %s158 = sphi 0, %s158
    %s160 = sphi 0, %s158
    %s161 = sphi 0, %s160
    %s175 = sphi 0, %s161
    %s179 = sphi 0, %s179
    %s181 = sphi 0, %s179
    %s182 = sphi 0, %s181
    %s196 = sphi 0, %s182
    %s200 = sphi 0, %s200
    %s202 = sphi 0, %s200
    %s203 = sphi 0, %s202
    %s217 = sphi 0, %s203
    %s221 = sphi 0, %s221
    %s223 = sphi 0, %s221
    %s224 = sphi 0, %s223
    %s238 = sphi 0, %s224
    %s242 = sphi 0, %s242
    %s244 = sphi 0, %s242
    %s245 = sphi 0, %s244
    %s259 = sphi 0, %s245
    %s263 = sphi 0, %s263
    %s265 = sphi 0, %s263
    %s266 = sphi 0, %s265
    %s280 = sphi 0, %s266
    %s284 = sphi 0, %s284
    %s286 = sphi 0, %s284
    %s287 = sphi 0, %s286
    %s301 = sphi 0, %s287
    %s307 = sphi 0, %s309
    %s310 = sphi 0, %s307
    %s311 = sphi 0, %s310
    %s327 = sphi 0, %s311
  $region4: #{apply_cdrnn_forward.3} parent=0 // loop_header_branch
    %22 = sbr.rel (%p20) target = $region8
  $region5: #{apply_cdrnn_forward.3} parent=0 // loop_body
    %s24 = ssub.s32 %s19, 1
    %s25 = ssub.s32 %s19, 2
    %s26 = sadd.s32 %s19, 1
    %s27 = ssub.s32 %s19, %s26
    %p28 = scmp.eq.s32.totalorder %s27, 0
    %s30 = sadd.s32 %s29, 1
    %s31 = scalar_select %p28, %s29, %s30
    %p34 = pneg %p28
    %p35 = scmp.eq.s32.totalorder %s19, 1
    %p36 = por %p34, %p35
    %p37 = scmp.ne.s32.totalorder %s29, %s32
    %p38 = scmp.eq.s32.totalorder %s19, 0
    %p39 = por %p37, %p38
    %p40 = scmp.ne.s32.totalorder %s29, %s32
    %p41 = scmp.eq.s32.totalorder %s24, 1
    %p42 = por %p40, %p41
    %p43 = scmp.ne.s32.totalorder %s32, %s33
    %p44 = scmp.eq.s32.totalorder %s24, 0
    %p45 = por %p43, %p44
    %p46 = scmp.ne.s32.totalorder %s32, %s33
    %p47 = scmp.eq.s32.totalorder %s25, 1
    %p48 = por %p46, %p47
    %p50 = scmp.ne.s32.totalorder %s33, %s49
    %p51 = scmp.eq.s32.totalorder %s25, 0
    %p52 = por %p50, %p51
    %s54 = sadd.s32 %s53, 1
    %p57 = scmp.eq.s32.totalorder %s19, 1
    %p58 = scmp.ne.s32.totalorder %s53, %s55
    %p59 = scmp.eq.s32.totalorder %s19, 0
    %p60 = por %p58, %p59
    %p61 = scmp.ne.s32.totalorder %s53, %s55
    %p62 = scmp.eq.s32.totalorder %s24, 1
    %p63 = por %p61, %p62
    %p64 = scmp.ne.s32.totalorder %s55, %s56
    %p65 = scmp.eq.s32.totalorder %s24, 0
    %p66 = por %p64, %p65
    %p67 = scmp.ne.s32.totalorder %s55, %s56
    %p68 = scmp.eq.s32.totalorder %s25, 1
    %p69 = por %p67, %p68
    %p71 = scmp.ne.s32.totalorder %s56, %s70
    %p72 = scmp.eq.s32.totalorder %s25, 0
    %p73 = por %p71, %p72
    %s75 = sadd.s32 %s74, 1
    %p78 = scmp.eq.s32.totalorder %s19, 1
    %p79 = scmp.ne.s32.totalorder %s74, %s76
    %p80 = scmp.eq.s32.totalorder %s19, 0
    %p81 = por %p79, %p80
    %p82 = scmp.ne.s32.totalorder %s74, %s76
    %p83 = scmp.eq.s32.totalorder %s24, 1
    %p84 = por %p82, %p83
    %p85 = scmp.ne.s32.totalorder %s76, %s77
    %p86 = scmp.eq.s32.totalorder %s24, 0
    %p87 = por %p85, %p86
    %p88 = scmp.ne.s32.totalorder %s76, %s77
    %p89 = scmp.eq.s32.totalorder %s25, 1
    %p90 = por %p88, %p89
    %p92 = scmp.ne.s32.totalorder %s77, %s91
    %p93 = scmp.eq.s32.totalorder %s25, 0
    %p94 = por %p92, %p93
    %s96 = sadd.s32 %s95, 1
    %p99 = scmp.eq.s32.totalorder %s19, 1
    %p100 = scmp.ne.s32.totalorder %s95, %s97
    %p101 = scmp.eq.s32.totalorder %s19, 0
    %p102 = por %p100, %p101
    %p103 = scmp.ne.s32.totalorder %s95, %s97
    %p104 = scmp.eq.s32.totalorder %s24, 1
    %p105 = por %p103, %p104
    %p106 = scmp.ne.s32.totalorder %s97, %s98
    %p107 = scmp.eq.s32.totalorder %s24, 0
    %p108 = por %p106, %p107
    %p109 = scmp.ne.s32.totalorder %s97, %s98
    %p110 = scmp.eq.s32.totalorder %s25, 1
    %p111 = por %p109, %p110
    %p113 = scmp.ne.s32.totalorder %s98, %s112
    %p114 = scmp.eq.s32.totalorder %s25, 0
    %p115 = por %p113, %p114
    %s117 = sadd.s32 %s116, 1
    %p120 = scmp.eq.s32.totalorder %s19, 1
    %p121 = scmp.ne.s32.totalorder %s116, %s118
    %p122 = scmp.eq.s32.totalorder %s19, 0
    %p123 = por %p121, %p122
    %p124 = scmp.ne.s32.totalorder %s116, %s118
    %p125 = scmp.eq.s32.totalorder %s24, 1
    %p126 = por %p124, %p125
    %p127 = scmp.ne.s32.totalorder %s118, %s119
    %p128 = scmp.eq.s32.totalorder %s24, 0
    %p129 = por %p127, %p128
    %p130 = scmp.ne.s32.totalorder %s118, %s119
    %p131 = scmp.eq.s32.totalorder %s25, 1
    %p132 = por %p130, %p131
    %p134 = scmp.ne.s32.totalorder %s119, %s133
    %p135 = scmp.eq.s32.totalorder %s25, 0
    %p136 = por %p134, %p135
    %s138 = sadd.s32 %s137, 1
    %p141 = scmp.eq.s32.totalorder %s19, 1
    %p142 = scmp.ne.s32.totalorder %s137, %s139
    %p143 = scmp.eq.s32.totalorder %s19, 0
    %p144 = por %p142, %p143
    %p145 = scmp.ne.s32.totalorder %s137, %s139
    %p146 = scmp.eq.s32.totalorder %s24, 1
    %p147 = por %p145, %p146
    %p148 = scmp.ne.s32.totalorder %s139, %s140
    %p149 = scmp.eq.s32.totalorder %s24, 0
    %p150 = por %p148, %p149
    %p151 = scmp.ne.s32.totalorder %s139, %s140
    %p152 = scmp.eq.s32.totalorder %s25, 1
    %p153 = por %p151, %p152
    %p155 = scmp.ne.s32.totalorder %s140, %s154
    %p156 = scmp.eq.s32.totalorder %s25, 0
    %p157 = por %p155, %p156
    %s159 = sadd.s32 %s158, 1
    %p162 = scmp.eq.s32.totalorder %s19, 1
    %p163 = scmp.ne.s32.totalorder %s158, %s160
    %p164 = scmp.eq.s32.totalorder %s19, 0
    %p165 = por %p163, %p164
    %p166 = scmp.ne.s32.totalorder %s158, %s160
    %p167 = scmp.eq.s32.totalorder %s24, 1
    %p168 = por %p166, %p167
    %p169 = scmp.ne.s32.totalorder %s160, %s161
    %p170 = scmp.eq.s32.totalorder %s24, 0
    %p171 = por %p169, %p170
    %p172 = scmp.ne.s32.totalorder %s160, %s161
    %p173 = scmp.eq.s32.totalorder %s25, 1
    %p174 = por %p172, %p173
    %p176 = scmp.ne.s32.totalorder %s161, %s175
    %p177 = scmp.eq.s32.totalorder %s25, 0
    %p178 = por %p176, %p177
    %s180 = sadd.s32 %s179, 1
    %p183 = scmp.eq.s32.totalorder %s19, 1
    %p184 = scmp.ne.s32.totalorder %s179, %s181
    %p185 = scmp.eq.s32.totalorder %s19, 0
    %p186 = por %p184, %p185
    %p187 = scmp.ne.s32.totalorder %s179, %s181
    %p188 = scmp.eq.s32.totalorder %s24, 1
    %p189 = por %p187, %p188
    %p190 = scmp.ne.s32.totalorder %s181, %s182
    %p191 = scmp.eq.s32.totalorder %s24, 0
    %p192 = por %p190, %p191
    %p193 = scmp.ne.s32.totalorder %s181, %s182
    %p194 = scmp.eq.s32.totalorder %s25, 1
    %p195 = por %p193, %p194
    %p197 = scmp.ne.s32.totalorder %s182, %s196
    %p198 = scmp.eq.s32.totalorder %s25, 0
    %p199 = por %p197, %p198
    %s201 = sadd.s32 %s200, 1
    %p204 = scmp.eq.s32.totalorder %s19, 1
    %p205 = scmp.ne.s32.totalorder %s200, %s202
    %p206 = scmp.eq.s32.totalorder %s19, 0
    %p207 = por %p205, %p206
    %p208 = scmp.ne.s32.totalorder %s200, %s202
    %p209 = scmp.eq.s32.totalorder %s24, 1
    %p210 = por %p208, %p209
    %p211 = scmp.ne.s32.totalorder %s202, %s203
    %p212 = scmp.eq.s32.totalorder %s24, 0
    %p213 = por %p211, %p212
    %p214 = scmp.ne.s32.totalorder %s202, %s203
    %p215 = scmp.eq.s32.totalorder %s25, 1
    %p216 = por %p214, %p215
    %p218 = scmp.ne.s32.totalorder %s203, %s217
    %p219 = scmp.eq.s32.totalorder %s25, 0
    %p220 = por %p218, %p219
    %s222 = sadd.s32 %s221, 1
    %p225 = scmp.eq.s32.totalorder %s19, 1
    %p226 = scmp.ne.s32.totalorder %s221, %s223
    %p227 = scmp.eq.s32.totalorder %s19, 0
    %p228 = por %p226, %p227
    %p229 = scmp.ne.s32.totalorder %s221, %s223
    %p230 = scmp.eq.s32.totalorder %s24, 1
    %p231 = por %p229, %p230
    %p232 = scmp.ne.s32.totalorder %s223, %s224
    %p233 = scmp.eq.s32.totalorder %s24, 0
    %p234 = por %p232, %p233
    %p235 = scmp.ne.s32.totalorder %s223, %s224
    %p236 = scmp.eq.s32.totalorder %s25, 1
    %p237 = por %p235, %p236
    %p239 = scmp.ne.s32.totalorder %s224, %s238
    %p240 = scmp.eq.s32.totalorder %s25, 0
    %p241 = por %p239, %p240
    %s243 = sadd.s32 %s242, 1
    %p246 = scmp.eq.s32.totalorder %s19, 1
    %p247 = scmp.ne.s32.totalorder %s242, %s244
    %p248 = scmp.eq.s32.totalorder %s19, 0
    %p249 = por %p247, %p248
    %p250 = scmp.ne.s32.totalorder %s242, %s244
    %p251 = scmp.eq.s32.totalorder %s24, 1
    %p252 = por %p250, %p251
    %p253 = scmp.ne.s32.totalorder %s244, %s245
    %p254 = scmp.eq.s32.totalorder %s24, 0
    %p255 = por %p253, %p254
    %p256 = scmp.ne.s32.totalorder %s244, %s245
    %p257 = scmp.eq.s32.totalorder %s25, 1
    %p258 = por %p256, %p257
    %p260 = scmp.ne.s32.totalorder %s245, %s259
    %p261 = scmp.eq.s32.totalorder %s25, 0
    %p262 = por %p260, %p261
    %s264 = sadd.s32 %s263, 1
    %p267 = scmp.eq.s32.totalorder %s19, 1
    %p268 = scmp.ne.s32.totalorder %s263, %s265
    %p269 = scmp.eq.s32.totalorder %s19, 0
    %p270 = por %p268, %p269
    %p271 = scmp.ne.s32.totalorder %s263, %s265
    %p272 = scmp.eq.s32.totalorder %s24, 1
    %p273 = por %p271, %p272
    %p274 = scmp.ne.s32.totalorder %s265, %s266
    %p275 = scmp.eq.s32.totalorder %s24, 0
    %p276 = por %p274, %p275
    %p277 = scmp.ne.s32.totalorder %s265, %s266
    %p278 = scmp.eq.s32.totalorder %s25, 1
    %p279 = por %p277, %p278
    %p281 = scmp.ne.s32.totalorder %s266, %s280
    %p282 = scmp.eq.s32.totalorder %s25, 0
    %p283 = por %p281, %p282
    %s285 = sadd.s32 %s284, 1
    %p288 = scmp.eq.s32.totalorder %s19, 1
    %p289 = scmp.ne.s32.totalorder %s284, %s286
    %p290 = scmp.eq.s32.totalorder %s19, 0
    %p291 = por %p289, %p290
    %p292 = scmp.ne.s32.totalorder %s284, %s286
    %p293 = scmp.eq.s32.totalorder %s24, 1
    %p294 = por %p292, %p293
    %p295 = scmp.ne.s32.totalorder %s286, %s287
    %p296 = scmp.eq.s32.totalorder %s24, 0
    %p297 = por %p295, %p296
    %p298 = scmp.ne.s32.totalorder %s286, %s287
    %p299 = scmp.eq.s32.totalorder %s25, 1
    %p300 = por %p298, %p299
    %p302 = scmp.ne.s32.totalorder %s287, %s301
    %p303 = scmp.eq.s32.totalorder %s25, 0
    %p304 = por %p302, %p303
    %s305 = ssub.s32 %s19, %s26
    %p306 = scmp.eq.s32.totalorder %s305, 0
    %s308 = sadd.s32 %s307, 1
    %s309 = scalar_select %p306, %s307, %s308
    %p312 = pneg %p306
    %p313 = scmp.eq.s32.totalorder %s19, 1
    %p314 = por %p312, %p313
    %p315 = scmp.ne.s32.totalorder %s307, %s310
    %p316 = scmp.eq.s32.totalorder %s19, 0
    %p317 = por %p315, %p316
    %p318 = scmp.ne.s32.totalorder %s307, %s310
    %p319 = scmp.eq.s32.totalorder %s24, 1
    %p320 = por %p318, %p319
    %p321 = scmp.ne.s32.totalorder %s310, %s311
    %p322 = scmp.eq.s32.totalorder %s24, 0
    %p323 = por %p321, %p322
    %p324 = scmp.ne.s32.totalorder %s310, %s311
    %p325 = scmp.eq.s32.totalorder %s25, 1
    %p326 = por %p324, %p325
    %p328 = scmp.ne.s32.totalorder %s311, %s327
    %p329 = scmp.eq.s32.totalorder %s25, 0
    %p330 = por %p328, %p329
    %p331 = scmp.le.s32.totalorder 1, %s19
    %p332 = scmp.lt.s32.totalorder %s19, 3
    %p333 = pnand %p331, %p332
    %p334 = pneg %p333
    // Predicated region
    $region9: #{apply_cdrnn_forward.3} parent=5 // pred_check
      _
    $region10: #{apply_cdrnn_forward.3} parent=5 // pred_check_branch
      %336 = sbr.rel (%p333) target = $region12
    $region11: #{apply_cdrnn_forward.3} parent=5 // pred_region
      %s337 = ssub.s32 %s19, 1
      // Predicated region
      $region13: #{apply_cdrnn_forward.3} parent=11 // pred_check
        %p338 = pneg %p66
      $region14: #{apply_cdrnn_forward.3} parent=11 // pred_check_branch
        %340 = sbr.rel (%p338) target = $region16
      $region15: #{apply_cdrnn_forward.3} parent=11 // pred_region
        _
      $region16: #{apply_cdrnn_forward.3} parent=11 // pred_fallthru
        _
      // Predicated region
      $region17: #{apply_cdrnn_forward.3} parent=11 // pred_check
        %p341 = pneg %p87
      $region18: #{apply_cdrnn_forward.3} parent=11 // pred_check_branch
        %343 = sbr.rel (%p341) target = $region20
      $region19: #{apply_cdrnn_forward.3} parent=11 // pred_region
        _
      $region20: #{apply_cdrnn_forward.3} parent=11 // pred_fallthru
        _
      // Predicated region
      $region21: #{apply_cdrnn_forward.3} parent=11 // pred_check
        %p344 = pneg %p108
      $region22: #{apply_cdrnn_forward.3} parent=11 // pred_check_branch
        %346 = sbr.rel (%p344) target = $region24
      $region23: #{apply_cdrnn_forward.3} parent=11 // pred_region
        _
      $region24: #{apply_cdrnn_forward.3} parent=11 // pred_fallthru
        _
      // Predicated region
      $region25: #{apply_cdrnn_forward.3} parent=11 // pred_check
        %p347 = pneg %p129
      $region26: #{apply_cdrnn_forward.3} parent=11 // pred_check_branch
        %349 = sbr.rel (%p347) target = $region28
      $region27: #{apply_cdrnn_forward.3} parent=11 // pred_region
        _
      $region28: #{apply_cdrnn_forward.3} parent=11 // pred_fallthru
        _
      // Predicated region
      $region29: #{apply_cdrnn_forward.3} parent=11 // pred_check
        %p350 = pneg %p150
      $region30: #{apply_cdrnn_forward.3} parent=11 // pred_check_branch
        %352 = sbr.rel (%p350) target = $region32
      $region31: #{apply_cdrnn_forward.3} parent=11 // pred_region
        _
      $region32: #{apply_cdrnn_forward.3} parent=11 // pred_fallthru
        _
      // Predicated region
      $region33: #{apply_cdrnn_forward.3} parent=11 // pred_check
        %p353 = pneg %p171
      $region34: #{apply_cdrnn_forward.3} parent=11 // pred_check_branch
        %355 = sbr.rel (%p353) target = $region36
      $region35: #{apply_cdrnn_forward.3} parent=11 // pred_region
        _
      $region36: #{apply_cdrnn_forward.3} parent=11 // pred_fallthru
        _
      // Predicated region
      $region37: #{apply_cdrnn_forward.3} parent=11 // pred_check
        %p356 = pneg %p192
      $region38: #{apply_cdrnn_forward.3} parent=11 // pred_check_branch
        %358 = sbr.rel (%p356) target = $region40
      $region39: #{apply_cdrnn_forward.3} parent=11 // pred_region
        _
      $region40: #{apply_cdrnn_forward.3} parent=11 // pred_fallthru
        _
      // Predicated region
      $region41: #{apply_cdrnn_forward.3} parent=11 // pred_check
        %p359 = pneg %p213
      $region42: #{apply_cdrnn_forward.3} parent=11 // pred_check_branch
        %361 = sbr.rel (%p359) target = $region44
      $region43: #{apply_cdrnn_forward.3} parent=11 // pred_region
        _
      $region44: #{apply_cdrnn_forward.3} parent=11 // pred_fallthru
        _
      // Predicated region
      $region45: #{apply_cdrnn_forward.3} parent=11 // pred_check
        %p362 = pneg %p234
      $region46: #{apply_cdrnn_forward.3} parent=11 // pred_check_branch
        %364 = sbr.rel (%p362) target = $region48
      $region47: #{apply_cdrnn_forward.3} parent=11 // pred_region
        _
      $region48: #{apply_cdrnn_forward.3} parent=11 // pred_fallthru
        _
      // Predicated region
      $region49: #{apply_cdrnn_forward.3} parent=11 // pred_check
        %p365 = pneg %p255
      $region50: #{apply_cdrnn_forward.3} parent=11 // pred_check_branch
        %367 = sbr.rel (%p365) target = $region52
      $region51: #{apply_cdrnn_forward.3} parent=11 // pred_region
        _
      $region52: #{apply_cdrnn_forward.3} parent=11 // pred_fallthru
        _
      // Predicated region
      $region53: #{apply_cdrnn_forward.3} parent=11 // pred_check
        %p368 = pneg %p276
      $region54: #{apply_cdrnn_forward.3} parent=11 // pred_check_branch
        %370 = sbr.rel (%p368) target = $region56
      $region55: #{apply_cdrnn_forward.3} parent=11 // pred_region
        _
      $region56: #{apply_cdrnn_forward.3} parent=11 // pred_fallthru
        _
      // Predicated region
      $region57: #{apply_cdrnn_forward.3} parent=11 // pred_check
        %p371 = pneg %p297
      $region58: #{apply_cdrnn_forward.3} parent=11 // pred_check_branch
        %373 = sbr.rel (%p371) target = $region60
      $region59: #{apply_cdrnn_forward.3} parent=11 // pred_region
        _
      $region60: #{apply_cdrnn_forward.3} parent=11 // pred_fallthru
        _
    $region12: #{apply_cdrnn_forward.3} parent=5 // pred_fallthru
      _
    %p374 = scmp.lt.s32.totalorder %s19, 2
    // Predicated region
    $region61: #{apply_cdrnn_forward.3} parent=5 // pred_check
      %p375 = pneg %p374
    $region62: #{apply_cdrnn_forward.3} parent=5 // pred_check_branch
      %377 = sbr.rel (%p375) target = $region64
    $region63: #{apply_cdrnn_forward.3} parent=5 // pred_region
      // Predicated region
      $region65: #{apply_cdrnn_forward.3} parent=63 // pred_check
        %p378 = pneg %p39
      $region66: #{apply_cdrnn_forward.3} parent=63 // pred_check_branch
        %380 = sbr.rel (%p378) target = $region68
      $region67: #{apply_cdrnn_forward.3} parent=63 // pred_region
        %p381 = scmp.lt.s32.totalorder %s19, 1
        %s382 = scalar_select %p381, %s19, 1
        %s383 = smul.addr %s382, 2
        %s384 = smul.addr %s383, 8
        %s385 = scalar_lea.vmem %s0, %s384
      $region68: #{apply_cdrnn_forward.3} parent=63 // pred_fallthru
        _
    $region64: #{apply_cdrnn_forward.3} parent=5 // pred_fallthru
      _
    %p386 = scmp.le.s32.totalorder 1, %s19
    %p387 = scmp.lt.s32.totalorder %s19, 3
    %p388 = pnand %p386, %p387
    %p389 = pneg %p388
    // Predicated region
    $region69: #{apply_cdrnn_forward.3} parent=5 // pred_check
      _
    $region70: #{apply_cdrnn_forward.3} parent=5 // pred_check_branch
      %391 = sbr.rel (%p388) target = $region72
    $region71: #{apply_cdrnn_forward.3} parent=5 // pred_region
      %s392 = ssub.s32 %s19, 1
      %p393 = scmp.lt.s32.totalorder %s24, 1
      %s394 = scalar_select %p393, %s24, 1
      %s395 = smul.addr %s394, 2
      %s396 = smul.addr %s395, 8
      %s397 = scalar_lea.vmem %s0, %s396
      %p398 = pneg %p45
      %p399 = pneg %p42
      %p400 = pneg %p66
      %p401 = pneg %p63
      %p402 = pneg %p87
      %p403 = pneg %p84
      %p404 = pneg %p108
      %p405 = pneg %p105
      %p406 = pneg %p129
      %p407 = pneg %p126
      %p408 = pneg %p150
      %p409 = pneg %p147
      %p410 = pneg %p171
      %p411 = pneg %p168
      %p412 = pneg %p192
      %p413 = pneg %p189
      %p414 = pneg %p213
      %p415 = pneg %p210
      %p416 = pneg %p234
      %p417 = pneg %p231
      %p418 = pneg %p255
      %p419 = pneg %p252
      %p420 = pneg %p276
      %p421 = pneg %p273
      %p422 = pneg %p297
      %p423 = pneg %p294
      %p424 = pneg %p323
      %p425 = pneg %p320
      %p426 = scmp.lt.s32.totalorder %s24, 1
      %s427 = scalar_select %p426, %s24, 1
      %s428 = smul.addr %s427, 4
      %s429 = scalar_lea.vmem %s13, %s428
      %p430 = scmp.lt.s32.totalorder %s24, 1
      %s431 = scalar_select %p430, %s24, 1
      %s432 = smul.addr %s431, 2
      %s433 = smul.addr %s432, 8
      %s434 = scalar_lea.vmem %s0, %s433
      %p435 = scmp.lt.s32.totalorder %s24, 1
      %s436 = scalar_select %p435, %s24, 1
      %s437 = smul.addr %s436, 4
      %s438 = scalar_lea.vmem %s13, %s437
      %v440 = vld [vmem:[%s434] sm:$0xff]
      %v441 = vld [vmem:[%s434 + $0x8] sm:$0xff]
      %v442 = vlaneseq
      %v443 = vshrl.u32 %v442, 7
      %v444 = vadd.s32 %v443, 8
      %v445 = vld [vmem:[%s4] sm:$0x1]
      %v446 = vpack.c.bf16 %v441, %v440
      %v447 = vld [vmem:[%s2] sm:$0xf]
      %v448 = vld [vmem:[%s2 + $0x4] sm:$0xf]
      %vm449 = vcmp.eq.s32.totalorder %v443, 0
      %vm450 = vcmp.eq.s32.totalorder %v444, 0
      %v451 = vrot.slane %v440, 7
      %v452 = vrot.slane %v441, 7
      %vm453 = vcmp.lt.s32.totalorder %v443, 1
      %v454 = vsel %vm453, %v451, %v452
      %v455 = vsel %vm453, %v452, %v451
      %v456 = vsel %vm449, 1, 0
      %v457 = vsel %vm450, 1, 0
      %vm458 = vcmp.eq.s32.totalorder %v456, 1
      %vm459 = vcmp.eq.s32.totalorder %v457, 1
      %v460 = vsel %vm458, 0.0, %v455
      %v461 = vsel %vm459, 0.0, %v454
      %v462 = vpack.c.bf16 %v461, %v460
      %v463 = vld [vmem:[%s1] sm:$0xf]
      %v464 = vld [vmem:[%s1 + $0x4] sm:$0xf]
      %v467 = vunpack.c.l.b16 %v463
      %v468 = vunpack.c.l.b16 %v464
      %v469 = vpack.c.b16 %v468, %v467
      %vm471 = vcmask 130048
      %v473 = vsel %vm471, %v462, 0
      %475 = vmatprep.subr.bf16.mxu0 0
      %476 = vmatpush1.bf16.msra.mxu0 0
      %477 = vmatprep.subr.bf16.mxu0 0
      %478 = vmatpush1.bf16.msra.mxu0 0
      %479 = vmatprep.subr.bf16.mxu0 0
      %480 = vmatpush1.bf16.msra.mxu0 0
      %481 = vmatprep.subr.bf16.mxu0 0
      %482 = vmatpush1.bf16.msra.mxu0 0
      %483 = vmatprep.subr.bf16.mxu0 0
      %484 = vmatpush1.bf16.msra.mxu0 0
      %485 = vmatprep.subr.bf16.mxu0 0
      %486 = vmatpush1.bf16.msra.mxu0 0
      %487 = vmatprep.subr.bf16.mxu0 0
      %488 = vmatpush1.bf16.msra.mxu0 0
      %489 = vmatprep.subr.bf16.mxu0 0
      %490 = vmatpush1.bf16.msra.mxu0 %v469
      %491 = vmatprep.subr.bf16.mxu0 0
      %492 = vmatpush2.bf16.msra.mxu0 0
      %493 = vmatprep.subr.bf16.mxu0 0
      %494 = vmatpush2.bf16.msra.mxu0 0
      %495 = vmatprep.subr.bf16.mxu0 0
      %496 = vmatpush2.bf16.msra.mxu0 0
      %497 = vmatprep.subr.bf16.mxu0 0
      %498 = vmatpush2.bf16.msra.mxu0 0
      %499 = vmatprep.subr.bf16.mxu0 0
      %500 = vmatpush2.bf16.msra.mxu0 0
      %501 = vmatprep.subr.bf16.mxu0 0
      %502 = vmatpush2.bf16.msra.mxu0 0
      %503 = vmatprep.subr.bf16.mxu0 0
      %504 = vmatpush2.bf16.msra.mxu0 0
      %505 = vmatprep.subr.bf16.mxu0 0
      %506 = vmatpush2.bf16.msra.mxu0 0
      %507 = vmatprep.mubr.bf16.mxu0 0
      %508 = vmatmul.mubr.bf16.gmra.mxu0 %v473
      %v509 = vpop.f32.mrf.mxu0
      %v510 = vadd.f32 0.0, %v509
      %v511 = vpop.f32.mrf.mxu0
      %v512 = vpop.f32.mrf.mxu0
      %v513 = vadd.f32 0.0, %v512
      %v514 = vpop.f32.mrf.mxu0
      %515 = vdwg.mxu0
      %v518 = vunpack.c.l.b16 %v447
      %v519 = vunpack.c.l.b16 %v448
      %v520 = vpack.c.b16 %v519, %v518
      %v523 = vsel %vm471, %v446, 0
      %525 = vmatprep.subr.bf16.mxu0 0
      %526 = vmatpush1.bf16.msra.mxu0 0
      %527 = vmatprep.subr.bf16.mxu0 0
      %528 = vmatpush1.bf16.msra.mxu0 0
      %529 = vmatprep.subr.bf16.mxu0 0
      %530 = vmatpush1.bf16.msra.mxu0 0
      %531 = vmatprep.subr.bf16.mxu0 0
      %532 = vmatpush1.bf16.msra.mxu0 0
      %533 = vmatprep.subr.bf16.mxu0 0
      %534 = vmatpush1.bf16.msra.mxu0 0
      %535 = vmatprep.subr.bf16.mxu0 0
      %536 = vmatpush1.bf16.msra.mxu0 0
      %537 = vmatprep.subr.bf16.mxu0 0
      %538 = vmatpush1.bf16.msra.mxu0 0
      %539 = vmatprep.subr.bf16.mxu0 0
      %540 = vmatpush1.bf16.msra.mxu0 %v520
      %541 = vmatprep.subr.bf16.mxu0 0
      %542 = vmatpush2.bf16.msra.mxu0 0
      %543 = vmatprep.subr.bf16.mxu0 0
      %544 = vmatpush2.bf16.msra.mxu0 0
      %545 = vmatprep.subr.bf16.mxu0 0
      %546 = vmatpush2.bf16.msra.mxu0 0
      %547 = vmatprep.subr.bf16.mxu0 0
      %548 = vmatpush2.bf16.msra.mxu0 0
      %549 = vmatprep.subr.bf16.mxu0 0
      %550 = vmatpush2.bf16.msra.mxu0 0
      %551 = vmatprep.subr.bf16.mxu0 0
      %552 = vmatpush2.bf16.msra.mxu0 0
      %553 = vmatprep.subr.bf16.mxu0 0
      %554 = vmatpush2.bf16.msra.mxu0 0
      %555 = vmatprep.subr.bf16.mxu0 0
      %556 = vmatpush2.bf16.msra.mxu0 0
      %557 = vmatprep.mubr.bf16.mxu0 0
      %558 = vmatmul.mubr.bf16.gmra.mxu0 %v523
      %v559 = vpop.f32.mrf.mxu0
      %v560 = vadd.f32 %v510, %v559
      %v561 = vpop.f32.mrf.mxu0
      %v562 = vpop.f32.mrf.mxu0
      %v563 = vadd.f32 %v513, %v562
      %v564 = vpop.f32.mrf.mxu0
      %565 = vdwg.mxu0
      %vm566 = vcmp.eq.s32.totalorder %v443, 15
      %vm567 = vcmp.eq.s32.totalorder %v444, 15
      %v568 = vrot.slane %v440, 1
      %v569 = vrot.slane %v441, 1
      %vm570 = vcmp.lt.s32.totalorder %v443, 7
      %v571 = vsel %vm570, %v568, %v569
      %v572 = vsel %vm570, %v569, %v568
      %v573 = vsel %vm566, 1, 0
      %v574 = vsel %vm567, 1, 0
      %vm575 = vcmp.eq.s32.totalorder %v573, 1
      %vm576 = vcmp.eq.s32.totalorder %v574, 1
      %v577 = vsel %vm575, 0.0, %v571
      %v578 = vsel %vm576, 0.0, %v572
      %v579 = vpack.c.bf16 %v578, %v577
      %v580 = vld [vmem:[%s3] sm:$0xf]
      %v581 = vld [vmem:[%s3 + $0x4] sm:$0xf]
      %v584 = vunpack.c.l.b16 %v580
      %v585 = vunpack.c.l.b16 %v581
      %v586 = vpack.c.b16 %v585, %v584
      %v589 = vsel %vm471, %v579, 0
      %591 = vmatprep.subr.bf16.mxu0 0
      %592 = vmatpush1.bf16.msra.mxu0 0
      %593 = vmatprep.subr.bf16.mxu0 0
      %594 = vmatpush1.bf16.msra.mxu0 0
      %595 = vmatprep.subr.bf16.mxu0 0
      %596 = vmatpush1.bf16.msra.mxu0 0
      %597 = vmatprep.subr.bf16.mxu0 0
      %598 = vmatpush1.bf16.msra.mxu0 0
      %599 = vmatprep.subr.bf16.mxu0 0
      %600 = vmatpush1.bf16.msra.mxu0 0
      %601 = vmatprep.subr.bf16.mxu0 0
      %602 = vmatpush1.bf16.msra.mxu0 0
      %603 = vmatprep.subr.bf16.mxu0 0
      %604 = vmatpush1.bf16.msra.mxu0 0
      %605 = vmatprep.subr.bf16.mxu0 0
      %606 = vmatpush1.bf16.msra.mxu0 %v586
      %607 = vmatprep.subr.bf16.mxu0 0
      %608 = vmatpush2.bf16.msra.mxu0 0
      %609 = vmatprep.subr.bf16.mxu0 0
      %610 = vmatpush2.bf16.msra.mxu0 0
      %611 = vmatprep.subr.bf16.mxu0 0
      %612 = vmatpush2.bf16.msra.mxu0 0
      %613 = vmatprep.subr.bf16.mxu0 0
      %614 = vmatpush2.bf16.msra.mxu0 0
      %615 = vmatprep.subr.bf16.mxu0 0
      %616 = vmatpush2.bf16.msra.mxu0 0
      %617 = vmatprep.subr.bf16.mxu0 0
      %618 = vmatpush2.bf16.msra.mxu0 0
      %619 = vmatprep.subr.bf16.mxu0 0
      %620 = vmatpush2.bf16.msra.mxu0 0
      %621 = vmatprep.subr.bf16.mxu0 0
      %622 = vmatpush2.bf16.msra.mxu0 0
      %623 = vmatprep.mubr.bf16.mxu0 0
      %624 = vmatmul.mubr.bf16.gmra.mxu0 %v589
      %v625 = vpop.f32.mrf.mxu0
      %v626 = vadd.f32 0.0, %v625
      %v627 = vpop.f32.mrf.mxu0
      %v628 = vpop.f32.mrf.mxu0
      %v629 = vadd.f32 0.0, %v628
      %v630 = vpop.f32.mrf.mxu0
      %631 = vdwg.mxu0
      %v632 = vadd.f32 %v560, %v626
      %v633 = vadd.f32 %v563, %v629
      %v635 = vlaneseq
      %v636 = vshrl.u32 %v635, 7
      %v637 = vsub.s32 0, %v636
      %v638 = vrot.slane %v445, %v637
      %v640 = vadd.f32 %v632, %v638
      %v641 = vadd.f32 %v633, %v638
      %644 = vrot.lane.b32.xlu0 %v640, 64
      %v645 = vpop.permute.xlu0 %644
      %646 = vrot.lane.b32.xlu0 %v641, 64
      %v647 = vpop.permute.xlu0 %646
      %v650 = vmax.f32 %v640, %v645
      %v651 = vmax.f32 %v641, %v647
      %v652 = vld [vmem:[%s5] sm:$0x1]
      %v653 = vld [vmem:[%s6] sm:$0x1]
      %vm654 = vcmask 523264
      %v655 = vsel %vm654, %v650, 0.0
      %656 = vadd.xlane.f32.xlu0 %v655
      %v657 = vpop.xlane.xlu0 %656
      %v658 = vsel %vm654, %v651, 0.0
      %659 = vadd.xlane.f32.xlu0 %v658
      %v660 = vpop.xlane.xlu0 %659
      %v661 = vrcp.pop 64.0
      %v662 = vmul.f32 %v657, %v661
      %v663 = vmul.f32 %v660, %v661
      %v664 = vsub.f32 %v650, %v662
      %v665 = vsub.f32 %v651, %v663
      %v666 = vmul.f32 %v664, %v664
      %v667 = vmul.f32 %v665, %v665
      %v668 = vsel %vm654, %v666, 0.0
      %669 = vadd.xlane.f32.xlu0 %v668
      %v670 = vpop.xlane.xlu0 %669
      %v671 = vsel %vm654, %v667, 0.0
      %672 = vadd.xlane.f32.xlu0 %v671
      %v673 = vpop.xlane.xlu0 %672
      %v674 = vmul.f32 %v670, %v661
      %v675 = vmul.f32 %v673, %v661
      %v676 = vadd.f32 %v674, 1e-05
      %v677 = vadd.f32 %v675, 1e-05
      %v678 = vrsqrt.pop %v676
      %v679 = vrsqrt.pop %v677
      %v680 = vmul.f32 %v664, %v678
      %v681 = vmul.f32 %v665, %v679
      %v683 = vlaneseq
      %v684 = vshrl.u32 %v683, 7
      %v685 = vsub.s32 0, %v684
      %v686 = vrot.slane %v652, %v685
      %v688 = vmul.f32 %v680, %v686
      %v689 = vmul.f32 %v681, %v686
      %v691 = vlaneseq
      %v692 = vshrl.u32 %v691, 7
      %v693 = vsub.s32 0, %v692
      %v694 = vrot.slane %v653, %v693
      %v696 = vadd.f32 %v688, %v694
      %v697 = vadd.f32 %v689, %v694
      %vm698 = vcmp.ge.f32.partialorder %v696, 0.0
      %vm699 = vcmp.ge.f32.partialorder %v697, 0.0
      %v700 = vmul.f32 %v696, 0.01
      %v701 = vmul.f32 %v697, 0.01
      %v702 = vsel %vm698, %v696, %v700
      %v703 = vsel %vm699, %v697, %v701
      %v704 = vld [vmem:[%s10] sm:$0x1]
      %v705 = vpack.c.bf16 %v703, %v702
      %v706 = vld [vmem:[%s8] sm:$0xf]
      %v707 = vld [vmem:[%s8 + $0x4] sm:$0xf]
      %v708 = vld [vmem:[%s8 + $0x8] sm:$0xf]
      %v709 = vld [vmem:[%s8 + $0xc] sm:$0xf]
      %v710 = vld [vmem:[%s8 + $0x10] sm:$0xf]
      %v711 = vld [vmem:[%s8 + $0x14] sm:$0xf]
      %v712 = vld [vmem:[%s8 + $0x18] sm:$0xf]
      %v713 = vld [vmem:[%s8 + $0x1c] sm:$0xf]
      %v714 = vrot.slane %v702, 7
      %v715 = vrot.slane %v703, 7
      %v716 = vsel %vm453, %v714, %v715
      %v717 = vsel %vm453, %v715, %v714
      %v718 = vsel %vm458, 0.0, %v717
      %v719 = vsel %vm459, 0.0, %v716
      %v720 = vpack.c.bf16 %v719, %v718
      %v721 = vld [vmem:[%s7] sm:$0xf]
      %v722 = vld [vmem:[%s7 + $0x4] sm:$0xf]
      %v723 = vld [vmem:[%s7 + $0x8] sm:$0xf]
      %v724 = vld [vmem:[%s7 + $0xc] sm:$0xf]
      %v725 = vld [vmem:[%s7 + $0x10] sm:$0xf]
      %v726 = vld [vmem:[%s7 + $0x14] sm:$0xf]
      %v727 = vld [vmem:[%s7 + $0x18] sm:$0xf]
      %v728 = vld [vmem:[%s7 + $0x1c] sm:$0xf]
      %v737 = vunpack.c.l.b16 %v721
      %v738 = vunpack.c.l.b16 %v722
      %v739 = vunpack.c.l.b16 %v723
      %v740 = vunpack.c.l.b16 %v724
      %v741 = vunpack.c.l.b16 %v725
      %v742 = vunpack.c.l.b16 %v726
      %v743 = vunpack.c.l.b16 %v727
      %v744 = vunpack.c.l.b16 %v728
      %v745 = vpack.c.b16 %v738, %v737
      %v746 = vpack.c.b16 %v740, %v739
      %v747 = vpack.c.b16 %v742, %v741
      %v748 = vpack.c.b16 %v744, %v743
      %v754 = vsel %vm654, %v720, 0
      %756 = vmatprep.subr.bf16.mxu0 0
      %757 = vmatpush1.bf16.msra.mxu0 0
      %758 = vmatprep.subr.bf16.mxu0 0
      %759 = vmatpush1.bf16.msra.mxu0 0
      %760 = vmatprep.subr.bf16.mxu0 0
      %761 = vmatpush1.bf16.msra.mxu0 0
      %762 = vmatprep.subr.bf16.mxu0 0
      %763 = vmatpush1.bf16.msra.mxu0 0
      %764 = vmatprep.subr.bf16.mxu0 0
      %765 = vmatpush1.bf16.msra.mxu0 %v748
      %766 = vmatprep.subr.bf16.mxu0 0
      %767 = vmatpush1.bf16.msra.mxu0 %v747
      %768 = vmatprep.subr.bf16.mxu0 0
      %769 = vmatpush1.bf16.msra.mxu0 %v746
      %770 = vmatprep.subr.bf16.mxu0 0
      %771 = vmatpush1.bf16.msra.mxu0 %v745
      %772 = vmatprep.subr.bf16.mxu0 0
      %773 = vmatpush2.bf16.msra.mxu0 0
      %774 = vmatprep.subr.bf16.mxu0 0
      %775 = vmatpush2.bf16.msra.mxu0 0
      %776 = vmatprep.subr.bf16.mxu0 0
      %777 = vmatpush2.bf16.msra.mxu0 0
      %778 = vmatprep.subr.bf16.mxu0 0
      %779 = vmatpush2.bf16.msra.mxu0 0
      %780 = vmatprep.subr.bf16.mxu0 0
      %781 = vmatpush2.bf16.msra.mxu0 0
      %782 = vmatprep.subr.bf16.mxu0 0
      %783 = vmatpush2.bf16.msra.mxu0 0
      %784 = vmatprep.subr.bf16.mxu0 0
      %785 = vmatpush2.bf16.msra.mxu0 0
      %786 = vmatprep.subr.bf16.mxu0 0
      %787 = vmatpush2.bf16.msra.mxu0 0
      %788 = vmatprep.mubr.bf16.mxu0 0
      %789 = vmatmul.mubr.bf16.gmra.mxu0 %v754
      %v790 = vpop.f32.mrf.mxu0
      %v791 = vadd.f32 0.0, %v790
      %v792 = vpop.f32.mrf.mxu0
      %v793 = vpop.f32.mrf.mxu0
      %v794 = vadd.f32 0.0, %v793
      %v795 = vpop.f32.mrf.mxu0
      %796 = vdwg.mxu0
      %v805 = vunpack.c.l.b16 %v706
      %v806 = vunpack.c.l.b16 %v707
      %v807 = vunpack.c.l.b16 %v708
      %v808 = vunpack.c.l.b16 %v709
      %v809 = vunpack.c.l.b16 %v710
      %v810 = vunpack.c.l.b16 %v711
      %v811 = vunpack.c.l.b16 %v712
      %v812 = vunpack.c.l.b16 %v713
      %v813 = vpack.c.b16 %v806, %v805
      %v814 = vpack.c.b16 %v808, %v807
      %v815 = vpack.c.b16 %v810, %v809
      %v816 = vpack.c.b16 %v812, %v811
      %v822 = vsel %vm654, %v705, 0
      %824 = vmatprep.subr.bf16.mxu0 0
      %825 = vmatpush1.bf16.msra.mxu0 0
      %826 = vmatprep.subr.bf16.mxu0 0
      %827 = vmatpush1.bf16.msra.mxu0 0
      %828 = vmatprep.subr.bf16.mxu0 0
      %829 = vmatpush1.bf16.msra.mxu0 0
      %830 = vmatprep.subr.bf16.mxu0 0
      %831 = vmatpush1.bf16.msra.mxu0 0
      %832 = vmatprep.subr.bf16.mxu0 0
      %833 = vmatpush1.bf16.msra.mxu0 %v816
      %834 = vmatprep.subr.bf16.mxu0 0
      %835 = vmatpush1.bf16.msra.mxu0 %v815
      %836 = vmatprep.subr.bf16.mxu0 0
      %837 = vmatpush1.bf16.msra.mxu0 %v814
      %838 = vmatprep.subr.bf16.mxu0 0
      %839 = vmatpush1.bf16.msra.mxu0 %v813
      %840 = vmatprep.subr.bf16.mxu0 0
      %841 = vmatpush2.bf16.msra.mxu0 0
      %842 = vmatprep.subr.bf16.mxu0 0
      %843 = vmatpush2.bf16.msra.mxu0 0
      %844 = vmatprep.subr.bf16.mxu0 0
      %845 = vmatpush2.bf16.msra.mxu0 0
      %846 = vmatprep.subr.bf16.mxu0 0
      %847 = vmatpush2.bf16.msra.mxu0 0
      %848 = vmatprep.subr.bf16.mxu0 0
      %849 = vmatpush2.bf16.msra.mxu0 0
      %850 = vmatprep.subr.bf16.mxu0 0
      %851 = vmatpush2.bf16.msra.mxu0 0
      %852 = vmatprep.subr.bf16.mxu0 0
      %853 = vmatpush2.bf16.msra.mxu0 0
      %854 = vmatprep.subr.bf16.mxu0 0
      %855 = vmatpush2.bf16.msra.mxu0 0
      %856 = vmatprep.mubr.bf16.mxu0 0
      %857 = vmatmul.mubr.bf16.gmra.mxu0 %v822
      %v858 = vpop.f32.mrf.mxu0
      %v859 = vadd.f32 %v791, %v858
      %v860 = vpop.f32.mrf.mxu0
      %v861 = vpop.f32.mrf.mxu0
      %v862 = vadd.f32 %v794, %v861
      %v863 = vpop.f32.mrf.mxu0
      %864 = vdwg.mxu0
      %v865 = vrot.slane %v702, 1
      %v866 = vrot.slane %v703, 1
      %v867 = vsel %vm570, %v865, %v866
      %v868 = vsel %vm570, %v866, %v865
      %v869 = vsel %vm575, 0.0, %v867
      %v870 = vsel %vm576, 0.0, %v868
      %v871 = vpack.c.bf16 %v870, %v869
      %v872 = vld [vmem:[%s9] sm:$0xf]
      %v873 = vld [vmem:[%s9 + $0x4] sm:$0xf]
      %v874 = vld [vmem:[%s9 + $0x8] sm:$0xf]
      %v875 = vld [vmem:[%s9 + $0xc] sm:$0xf]
      %v876 = vld [vmem:[%s9 + $0x10] sm:$0xf]
      %v877 = vld [vmem:[%s9 + $0x14] sm:$0xf]
      %v878 = vld [vmem:[%s9 + $0x18] sm:$0xf]
      %v879 = vld [vmem:[%s9 + $0x1c] sm:$0xf]
      %v888 = vunpack.c.l.b16 %v872
      %v889 = vunpack.c.l.b16 %v873
      %v890 = vunpack.c.l.b16 %v874
      %v891 = vunpack.c.l.b16 %v875
      %v892 = vunpack.c.l.b16 %v876
      %v893 = vunpack.c.l.b16 %v877
      %v894 = vunpack.c.l.b16 %v878
      %v895 = vunpack.c.l.b16 %v879
      %v896 = vpack.c.b16 %v889, %v888
      %v897 = vpack.c.b16 %v891, %v890
      %v898 = vpack.c.b16 %v893, %v892
      %v899 = vpack.c.b16 %v895, %v894
      %v905 = vsel %vm654, %v871, 0
      %907 = vmatprep.subr.bf16.mxu0 0
      %908 = vmatpush1.bf16.msra.mxu0 0
      %909 = vmatprep.subr.bf16.mxu0 0
      %910 = vmatpush1.bf16.msra.mxu0 0
      %911 = vmatprep.subr.bf16.mxu0 0
      %912 = vmatpush1.bf16.msra.mxu0 0
      %913 = vmatprep.subr.bf16.mxu0 0
      %914 = vmatpush1.bf16.msra.mxu0 0
      %915 = vmatprep.subr.bf16.mxu0 0
      %916 = vmatpush1.bf16.msra.mxu0 %v899
      %917 = vmatprep.subr.bf16.mxu0 0
      %918 = vmatpush1.bf16.msra.mxu0 %v898
      %919 = vmatprep.subr.bf16.mxu0 0
      %920 = vmatpush1.bf16.msra.mxu0 %v897
      %921 = vmatprep.subr.bf16.mxu0 0
      %922 = vmatpush1.bf16.msra.mxu0 %v896
      %923 = vmatprep.subr.bf16.mxu0 0
      %924 = vmatpush2.bf16.msra.mxu0 0
      %925 = vmatprep.subr.bf16.mxu0 0
      %926 = vmatpush2.bf16.msra.mxu0 0
      %927 = vmatprep.subr.bf16.mxu0 0
      %928 = vmatpush2.bf16.msra.mxu0 0
      %929 = vmatprep.subr.bf16.mxu0 0
      %930 = vmatpush2.bf16.msra.mxu0 0
      %931 = vmatprep.subr.bf16.mxu0 0
      %932 = vmatpush2.bf16.msra.mxu0 0
      %933 = vmatprep.subr.bf16.mxu0 0
      %934 = vmatpush2.bf16.msra.mxu0 0
      %935 = vmatprep.subr.bf16.mxu0 0
      %936 = vmatpush2.bf16.msra.mxu0 0
      %937 = vmatprep.subr.bf16.mxu0 0
      %938 = vmatpush2.bf16.msra.mxu0 0
      %939 = vmatprep.mubr.bf16.mxu0 0
      %940 = vmatmul.mubr.bf16.gmra.mxu0 %v905
      %v941 = vpop.f32.mrf.mxu0
      %v942 = vadd.f32 0.0, %v941
      %v943 = vpop.f32.mrf.mxu0
      %v944 = vpop.f32.mrf.mxu0
      %v945 = vadd.f32 0.0, %v944
      %v946 = vpop.f32.mrf.mxu0
      %947 = vdwg.mxu0
      %v948 = vadd.f32 %v859, %v942
      %v949 = vadd.f32 %v862, %v945
      %v951 = vlaneseq
      %v952 = vshrl.u32 %v951, 7
      %v953 = vsub.s32 0, %v952
      %v954 = vrot.slane %v704, %v953
      %v956 = vadd.f32 %v948, %v954
      %v957 = vadd.f32 %v949, %v954
      %v958 = vld [vmem:[%s11] sm:$0x1]
      %v959 = vld [vmem:[%s12] sm:$0x1]
      %v960 = vsel %vm654, %v956, 0.0
      %961 = vadd.xlane.f32.xlu0 %v960
      %v962 = vpop.xlane.xlu0 %961
      %v963 = vsel %vm654, %v957, 0.0
      %964 = vadd.xlane.f32.xlu0 %v963
      %v965 = vpop.xlane.xlu0 %964
      %v966 = vmul.f32 %v962, %v661
      %v967 = vmul.f32 %v965, %v661
      %v968 = vsub.f32 %v956, %v966
      %v969 = vsub.f32 %v957, %v967
      %v970 = vmul.f32 %v968, %v968
      %v971 = vmul.f32 %v969, %v969
      %v972 = vsel %vm654, %v970, 0.0
      %973 = vadd.xlane.f32.xlu0 %v972
      %v974 = vpop.xlane.xlu0 %973
      %v975 = vsel %vm654, %v971, 0.0
      %976 = vadd.xlane.f32.xlu0 %v975
      %v977 = vpop.xlane.xlu0 %976
      %v978 = vmul.f32 %v974, %v661
      %v979 = vmul.f32 %v977, %v661
      %v980 = vadd.f32 %v978, 1e-05
      %v981 = vadd.f32 %v979, 1e-05
      %v982 = vrsqrt.pop %v980
      %v983 = vrsqrt.pop %v981
      %v984 = vmul.f32 %v968, %v982
      %v985 = vmul.f32 %v969, %v983
      %v987 = vlaneseq
      %v988 = vshrl.u32 %v987, 7
      %v989 = vsub.s32 0, %v988
      %v990 = vrot.slane %v958, %v989
      %v992 = vmul.f32 %v984, %v990
      %v993 = vmul.f32 %v985, %v990
      %v995 = vlaneseq
      %v996 = vshrl.u32 %v995, 7
      %v997 = vsub.s32 0, %v996
      %v998 = vrot.slane %v959, %v997
      %v1000 = vadd.f32 %v992, %v998
      %v1001 = vadd.f32 %v993, %v998
      %vm1002 = vcmp.ge.f32.partialorder %v1000, 0.0
      %vm1003 = vcmp.ge.f32.partialorder %v1001, 0.0
      %v1004 = vmul.f32 %v1000, 0.01
      %v1005 = vmul.f32 %v1001, 0.01
      %v1006 = vsel %vm1002, %v1000, %v1004
      %v1007 = vsel %vm1003, %v1001, %v1005
      %v1010 = vcombine.high %v1006, %v1006
      %v1012 = vunpack.c.l.s4 1983009808
      %v1013 = vunpack.c.0.s8 %v1012
      %v1014 = vlaneseq
      %v1015 = vshrl.u32 %v1014, 7
      %v1016 = vsub.s32 %v1013, %v1015
      %v1017 = vrot.slane %v1006, %v1016
      %v1019 = vunpack.c.l.s4 1983009808
      %v1020 = vunpack.c.0.s8 %v1019
      %v1021 = vlaneseq
      %v1022 = vshrl.u32 %v1021, 7
      %v1023 = vsub.s32 %v1020, %v1022
      %v1024 = vrot.slane %v1010, %v1023
      %v1025 = vcombine.high %v1017, %v1017
      %v1026 = vcombine.high %v1024, %v1024
      %v1027 = vcombine.high %v1007, %v1007
      %v1029 = vunpack.c.l.s4 1983009808
      %v1030 = vunpack.c.0.s8 %v1029
      %v1031 = vlaneseq
      %v1032 = vshrl.u32 %v1031, 7
      %v1033 = vsub.s32 %v1030, %v1032
      %v1034 = vrot.slane %v1007, %v1033
      %v1036 = vunpack.c.l.s4 1983009808
      %v1037 = vunpack.c.0.s8 %v1036
      %v1038 = vlaneseq
      %v1039 = vshrl.u32 %v1038, 7
      %v1040 = vsub.s32 %v1037, %v1039
      %v1041 = vrot.slane %v1027, %v1040
      %v1042 = vcombine.high %v1034, %v1034
      %v1043 = vcombine.high %v1041, %v1041
      %vm1052 = vcmask 517120
      %v1053 = vsel %vm1052, %v1017, -inf
      %v1054 = vrot.slane %v1053, 4
      %v1055 = vmax.f32 %v1053, %v1054
      %v1056 = vrot.slane %v1055, 2
      %v1057 = vmax.f32 %v1055, %v1056
      %v1058 = vrot.slane %v1057, 1
      %v1059 = vmax.f32 %v1057, %v1058
      %v1060 = vsel %vm1052, %v1025, -inf
      %v1061 = vrot.slane %v1060, 4
      %v1062 = vmax.f32 %v1060, %v1061
      %v1063 = vrot.slane %v1062, 2
      %v1064 = vmax.f32 %v1062, %v1063
      %v1065 = vrot.slane %v1064, 1
      %v1066 = vmax.f32 %v1064, %v1065
      %v1067 = vsel %vm1052, %v1024, -inf
      %v1068 = vrot.slane %v1067, 4
      %v1069 = vmax.f32 %v1067, %v1068
      %v1070 = vrot.slane %v1069, 2
      %v1071 = vmax.f32 %v1069, %v1070
      %v1072 = vrot.slane %v1071, 1
      %v1073 = vmax.f32 %v1071, %v1072
      %v1074 = vsel %vm1052, %v1026, -inf
      %v1075 = vrot.slane %v1074, 4
      %v1076 = vmax.f32 %v1074, %v1075
      %v1077 = vrot.slane %v1076, 2
      %v1078 = vmax.f32 %v1076, %v1077
      %v1079 = vrot.slane %v1078, 1
      %v1080 = vmax.f32 %v1078, %v1079
      %v1081 = vsel %vm1052, %v1034, -inf
      %v1082 = vrot.slane %v1081, 4
      %v1083 = vmax.f32 %v1081, %v1082
      %v1084 = vrot.slane %v1083, 2
      %v1085 = vmax.f32 %v1083, %v1084
      %v1086 = vrot.slane %v1085, 1
      %v1087 = vmax.f32 %v1085, %v1086
      %v1088 = vsel %vm1052, %v1042, -inf
      %v1089 = vrot.slane %v1088, 4
      %v1090 = vmax.f32 %v1088, %v1089
      %v1091 = vrot.slane %v1090, 2
      %v1092 = vmax.f32 %v1090, %v1091
      %v1093 = vrot.slane %v1092, 1
      %v1094 = vmax.f32 %v1092, %v1093
      %v1095 = vsel %vm1052, %v1041, -inf
      %v1096 = vrot.slane %v1095, 4
      %v1097 = vmax.f32 %v1095, %v1096
      %v1098 = vrot.slane %v1097, 2
      %v1099 = vmax.f32 %v1097, %v1098
      %v1100 = vrot.slane %v1099, 1
      %v1101 = vmax.f32 %v1099, %v1100
      %v1102 = vsel %vm1052, %v1043, -inf
      %v1103 = vrot.slane %v1102, 4
      %v1104 = vmax.f32 %v1102, %v1103
      %v1105 = vrot.slane %v1104, 2
      %v1106 = vmax.f32 %v1104, %v1105
      %v1107 = vrot.slane %v1106, 1
      %v1108 = vmax.f32 %v1106, %v1107
      %1110 = vrot.lane.b32.xlu0 %v1066, 64
      %v1111 = vpop.permute.xlu0 %1110
      %1114 = vrot.lane.b32.xlu0 %v1080, 64
      %v1115 = vpop.permute.xlu0 %1114
      %1118 = vrot.lane.b32.xlu0 %v1094, 64
      %v1119 = vpop.permute.xlu0 %1118
      %1122 = vrot.lane.b32.xlu0 %v1108, 64
      %v1123 = vpop.permute.xlu0 %1122
      %v1125 = vsel %vm654, %v1059, %v1111
      %v1126 = vsel %vm654, %v1073, %v1115
      %v1127 = vsel %vm654, %v1087, %v1119
      %v1128 = vsel %vm654, %v1101, %v1123
      %v1133 = vcombine.low %v1125, %v1126
      %v1134 = vcombine.low %v1127, %v1128
      %v1136 = vunpack.c.l.s4 1966171168
      %v1137 = vunpack.c.0.s8 %v1136
      %v1138 = vlaneseq
      %v1139 = vshrl.u32 %v1138, 7
      %v1140 = vsub.s32 %v1137, %v1139
      %v1141 = vrot.slane %v1133, %v1140
      %v1143 = vunpack.c.l.s4 1966171168
      %v1144 = vunpack.c.0.s8 %v1143
      %v1145 = vlaneseq
      %v1146 = vshrl.u32 %v1145, 7
      %v1147 = vsub.s32 %v1144, %v1146
      %v1148 = vrot.slane %v1134, %v1147
      %v1149 = vcombine.low %v1141, %v1148
      %v1151 = vunpack.c.l.s4 1966171168
      %v1152 = vunpack.c.0.s8 %v1151
      %v1153 = vlaneseq
      %v1154 = vshrl.u32 %v1153, 7
      %v1155 = vsub.s32 %v1152, %v1154
      %v1156 = vrot.slane %v1149, %v1155
      %v1158 = vlaneseq
      %vm1159 = vcmp.ge.s32.totalorder %v1158, 0
      %vm1160 = vcmp.lt.s32.totalorder %v1158, 512
      %vm1161 = vmand %vm1159, %vm1160
      %1162 = vst.msk [vmem:[%s438] sm:$0xf] %vm1161, %v1156
      %p1163 = scmp.lt.s32.totalorder %s24, 1
      %s1164 = scalar_select %p1163, %s24, 1
      %s1165 = smul.addr %s1164, 4
      %s1166 = scalar_lea.vmem %s13, %s1165
      // Predicated region
      $region73: #{apply_cdrnn_forward.3} parent=71 // pred_check
        %p1167 = pneg %p320
      $region74: #{apply_cdrnn_forward.3} parent=71 // pred_check_branch
        %1169 = sbr.rel (%p1167) target = $region76
      $region75: #{apply_cdrnn_forward.3} parent=71 // pred_region
        _
      $region76: #{apply_cdrnn_forward.3} parent=71 // pred_fallthru
        _
    $region72: #{apply_cdrnn_forward.3} parent=5 // pred_fallthru
      _
    %p1170 = scmp.le.s32.totalorder 2, %s19
    // Predicated region
    $region77: #{apply_cdrnn_forward.3} parent=5 // pred_check
      %p1171 = pneg %p1170
    $region78: #{apply_cdrnn_forward.3} parent=5 // pred_check_branch
      %1173 = sbr.rel (%p1171) target = $region80
    $region79: #{apply_cdrnn_forward.3} parent=5 // pred_region
      %s1174 = ssub.s32 %s19, 2
      // Predicated region
      $region81: #{apply_cdrnn_forward.3} parent=79 // pred_check
        %p1175 = pneg %p326
      $region82: #{apply_cdrnn_forward.3} parent=79 // pred_check_branch
        %1177 = sbr.rel (%p1175) target = $region84
      $region83: #{apply_cdrnn_forward.3} parent=79 // pred_region
        %p1178 = scmp.lt.s32.totalorder %s25, 1
        %s1179 = scalar_select %p1178, %s25, 1
        %s1180 = smul.addr %s1179, 4
        %s1181 = scalar_lea.vmem %s13, %s1180
      $region84: #{apply_cdrnn_forward.3} parent=79 // pred_fallthru
        _
    $region80: #{apply_cdrnn_forward.3} parent=5 // pred_fallthru
      _
  $region6: #{apply_cdrnn_forward.3} parent=0 // loop_footer
    %s23 = sadd.s32 1, %s19
  $region7: #{apply_cdrnn_forward.3} parent=0 // loop_footer_branch
    %18 = sbr.rel target = $region3
  $region8: #{apply_cdrnn_forward.3} parent=0 // loop_exit
    _

// kernel: apply_cdrnn_forward.4
$region0: #{apply_cdrnn_forward.4}
  #allocation0 [shape = 'u32[]', space=smem, size = 0x4, offset = 0x4, fixed_abs, tag = 'smem constant byte address 0x4 - core index']
  #allocation1 [shape = 'u32[144,128]{1,0:T(1,128)}', space=vmem, size = 0x12000, scoped, tag = 'internal scratch']
  %s0 = inlined_call_operand.vmem [shape: f32[2,8,64], index: 0, kind: input, shape index: {}]
  %s1 = inlined_call_operand.vmem [shape: bf16[64,64], index: 1, kind: input, shape index: {}]
  %s2 = inlined_call_operand.vmem [shape: bf16[64,64], index: 2, kind: input, shape index: {}]
  %s3 = inlined_call_operand.vmem [shape: bf16[64,64], index: 3, kind: input, shape index: {}]
  %s4 = inlined_call_operand.vmem [shape: f32[1,64], index: 4, kind: input, shape index: {}]
  %s5 = inlined_call_operand.vmem [shape: f32[1,32], index: 5, kind: input, shape index: {}]
  %s6 = inlined_call_operand.vmem [shape: f32[1,32], index: 6, kind: input, shape index: {}]
  %s7 = inlined_call_operand.vmem [shape: bf16[32,32], index: 7, kind: input, shape index: {}]
  %s8 = inlined_call_operand.vmem [shape: bf16[32,32], index: 8, kind: input, shape index: {}]
  %s9 = inlined_call_operand.vmem [shape: bf16[32,32], index: 9, kind: input, shape index: {}]
  %s10 = inlined_call_operand.vmem [shape: f32[1,32], index: 10, kind: input, shape index: {}]
  %s11 = inlined_call_operand.vmem [shape: f32[1,32], index: 11, kind: input, shape index: {}]
  %s12 = inlined_call_operand.vmem [shape: f32[1,32], index: 12, kind: input, shape index: {}]
  %s13 = inlined_call_operand.vmem [shape: f32[2,1,128], index: 13, kind: output, shape index: {}]
  %s14 = sld [smem:[#allocation0]]
  $region85: #{apply_cdrnn_forward.4} parent=0
    _
  %s16 = ssub.s32 1, %s14
  %s17 = scalar_select 0, %s16, %s14
  loop: start=0, step=1, limit=4
  $region2: #{apply_cdrnn_forward.4} parent=0 // loop_pre_header
    _
  $region3: #{apply_cdrnn_forward.4} parent=0 // loop_header
    %s19 = sphi 0, %s23
    %p20 = scmp.ge.s32.totalorder %s19, 4
    %s29 = sphi 0, %s31
    %s32 = sphi 0, %s29
    %s33 = sphi 0, %s32
    %s49 = sphi 0, %s33
    %s53 = sphi 0, %s53
    %s55 = sphi 0, %s53
    %s56 = sphi 0, %s55
    %s70 = sphi 0, %s56
    %s74 = sphi 0, %s74
    %s76 = sphi 0, %s74
    %s77 = sphi 0, %s76
    %s91 = sphi 0, %s77
    %s95 = sphi 0, %s95
    %s97 = sphi 0, %s95
    %s98 = sphi 0, %s97
    %s112 = sphi 0, %s98
    %s116 = sphi 0, %s116
    %s118 = sphi 0, %s116
    %s119 = sphi 0, %s118
    %s133 = sphi 0, %s119
    %s137 = sphi 0, %s137
    %s139 = sphi 0, %s137
    %s140 = sphi 0, %s139
    %s154 = sphi 0, %s140
    %s158 = sphi 0, %s158
    %s160 = sphi 0, %s158
    %s161 = sphi 0, %s160
    %s175 = sphi 0, %s161
    %s179 = sphi 0, %s179
    %s181 = sphi 0, %s179
    %s182 = sphi 0, %s181
    %s196 = sphi 0, %s182
    %s200 = sphi 0, %s200
    %s202 = sphi 0, %s200
    %s203 = sphi 0, %s202
    %s217 = sphi 0, %s203
    %s221 = sphi 0, %s221
    %s223 = sphi 0, %s221
    %s224 = sphi 0, %s223
    %s238 = sphi 0, %s224
    %s242 = sphi 0, %s242
    %s244 = sphi 0, %s242
    %s245 = sphi 0, %s244
    %s259 = sphi 0, %s245
    %s263 = sphi 0, %s263
    %s265 = sphi 0, %s263
    %s266 = sphi 0, %s265
    %s280 = sphi 0, %s266
    %s284 = sphi 0, %s284
    %s286 = sphi 0, %s284
    %s287 = sphi 0, %s286
    %s301 = sphi 0, %s287
    %s307 = sphi 0, %s309
    %s310 = sphi 0, %s307
    %s311 = sphi 0, %s310
    %s327 = sphi 0, %s311
  $region4: #{apply_cdrnn_forward.4} parent=0 // loop_header_branch
    %22 = sbr.rel (%p20) target = $region8
  $region5: #{apply_cdrnn_forward.4} parent=0 // loop_body
    %s24 = ssub.s32 %s19, 1
    %s25 = ssub.s32 %s19, 2
    %s26 = sadd.s32 %s19, 1
    %s27 = ssub.s32 %s19, %s26
    %p28 = scmp.eq.s32.totalorder %s27, 0
    %s30 = sadd.s32 %s29, 1
    %s31 = scalar_select %p28, %s29, %s30
    %p34 = pneg %p28
    %p35 = scmp.eq.s32.totalorder %s19, 1
    %p36 = por %p34, %p35
    %p37 = scmp.ne.s32.totalorder %s29, %s32
    %p38 = scmp.eq.s32.totalorder %s19, 0
    %p39 = por %p37, %p38
    %p40 = scmp.ne.s32.totalorder %s29, %s32
    %p41 = scmp.eq.s32.totalorder %s24, 1
    %p42 = por %p40, %p41
    %p43 = scmp.ne.s32.totalorder %s32, %s33
    %p44 = scmp.eq.s32.totalorder %s24, 0
    %p45 = por %p43, %p44
    %p46 = scmp.ne.s32.totalorder %s32, %s33
    %p47 = scmp.eq.s32.totalorder %s25, 1
    %p48 = por %p46, %p47
    %p50 = scmp.ne.s32.totalorder %s33, %s49
    %p51 = scmp.eq.s32.totalorder %s25, 0
    %p52 = por %p50, %p51
    %s54 = sadd.s32 %s53, 1
    %p57 = scmp.eq.s32.totalorder %s19, 1
    %p58 = scmp.ne.s32.totalorder %s53, %s55
    %p59 = scmp.eq.s32.totalorder %s19, 0
    %p60 = por %p58, %p59
    %p61 = scmp.ne.s32.totalorder %s53, %s55
    %p62 = scmp.eq.s32.totalorder %s24, 1
    %p63 = por %p61, %p62
    %p64 = scmp.ne.s32.totalorder %s55, %s56
    %p65 = scmp.eq.s32.totalorder %s24, 0
    %p66 = por %p64, %p65
    %p67 = scmp.ne.s32.totalorder %s55, %s56
    %p68 = scmp.eq.s32.totalorder %s25, 1
    %p69 = por %p67, %p68
    %p71 = scmp.ne.s32.totalorder %s56, %s70
    %p72 = scmp.eq.s32.totalorder %s25, 0
    %p73 = por %p71, %p72
    %s75 = sadd.s32 %s74, 1
    %p78 = scmp.eq.s32.totalorder %s19, 1
    %p79 = scmp.ne.s32.totalorder %s74, %s76
    %p80 = scmp.eq.s32.totalorder %s19, 0
    %p81 = por %p79, %p80
    %p82 = scmp.ne.s32.totalorder %s74, %s76
    %p83 = scmp.eq.s32.totalorder %s24, 1
    %p84 = por %p82, %p83
    %p85 = scmp.ne.s32.totalorder %s76, %s77
    %p86 = scmp.eq.s32.totalorder %s24, 0
    %p87 = por %p85, %p86
    %p88 = scmp.ne.s32.totalorder %s76, %s77
    %p89 = scmp.eq.s32.totalorder %s25, 1
    %p90 = por %p88, %p89
    %p92 = scmp.ne.s32.totalorder %s77, %s91
    %p93 = scmp.eq.s32.totalorder %s25, 0
    %p94 = por %p92, %p93
    %s96 = sadd.s32 %s95, 1
    %p99 = scmp.eq.s32.totalorder %s19, 1
    %p100 = scmp.ne.s32.totalorder %s95, %s97
    %p101 = scmp.eq.s32.totalorder %s19, 0
    %p102 = por %p100, %p101
    %p103 = scmp.ne.s32.totalorder %s95, %s97
    %p104 = scmp.eq.s32.totalorder %s24, 1
    %p105 = por %p103, %p104
    %p106 = scmp.ne.s32.totalorder %s97, %s98
    %p107 = scmp.eq.s32.totalorder %s24, 0
    %p108 = por %p106, %p107
    %p109 = scmp.ne.s32.totalorder %s97, %s98
    %p110 = scmp.eq.s32.totalorder %s25, 1
    %p111 = por %p109, %p110
    %p113 = scmp.ne.s32.totalorder %s98, %s112
    %p114 = scmp.eq.s32.totalorder %s25, 0
    %p115 = por %p113, %p114
    %s117 = sadd.s32 %s116, 1
    %p120 = scmp.eq.s32.totalorder %s19, 1
    %p121 = scmp.ne.s32.totalorder %s116, %s118
    %p122 = scmp.eq.s32.totalorder %s19, 0
    %p123 = por %p121, %p122
    %p124 = scmp.ne.s32.totalorder %s116, %s118
    %p125 = scmp.eq.s32.totalorder %s24, 1
    %p126 = por %p124, %p125
    %p127 = scmp.ne.s32.totalorder %s118, %s119
    %p128 = scmp.eq.s32.totalorder %s24, 0
    %p129 = por %p127, %p128
    %p130 = scmp.ne.s32.totalorder %s118, %s119
    %p131 = scmp.eq.s32.totalorder %s25, 1
    %p132 = por %p130, %p131
    %p134 = scmp.ne.s32.totalorder %s119, %s133
    %p135 = scmp.eq.s32.totalorder %s25, 0
    %p136 = por %p134, %p135
    %s138 = sadd.s32 %s137, 1
    %p141 = scmp.eq.s32.totalorder %s19, 1
    %p142 = scmp.ne.s32.totalorder %s137, %s139
    %p143 = scmp.eq.s32.totalorder %s19, 0
    %p144 = por %p142, %p143
    %p145 = scmp.ne.s32.totalorder %s137, %s139
    %p146 = scmp.eq.s32.totalorder %s24, 1
    %p147 = por %p145, %p146
    %p148 = scmp.ne.s32.totalorder %s139, %s140
    %p149 = scmp.eq.s32.totalorder %s24, 0
    %p150 = por %p148, %p149
    %p151 = scmp.ne.s32.totalorder %s139, %s140
    %p152 = scmp.eq.s32.totalorder %s25, 1
    %p153 = por %p151, %p152
    %p155 = scmp.ne.s32.totalorder %s140, %s154
    %p156 = scmp.eq.s32.totalorder %s25, 0
    %p157 = por %p155, %p156
    %s159 = sadd.s32 %s158, 1
    %p162 = scmp.eq.s32.totalorder %s19, 1
    %p163 = scmp.ne.s32.totalorder %s158, %s160
    %p164 = scmp.eq.s32.totalorder %s19, 0
    %p165 = por %p163, %p164
    %p166 = scmp.ne.s32.totalorder %s158, %s160
    %p167 = scmp.eq.s32.totalorder %s24, 1
    %p168 = por %p166, %p167
    %p169 = scmp.ne.s32.totalorder %s160, %s161
    %p170 = scmp.eq.s32.totalorder %s24, 0
    %p171 = por %p169, %p170
    %p172 = scmp.ne.s32.totalorder %s160, %s161
    %p173 = scmp.eq.s32.totalorder %s25, 1
    %p174 = por %p172, %p173
    %p176 = scmp.ne.s32.totalorder %s161, %s175
    %p177 = scmp.eq.s32.totalorder %s25, 0
    %p178 = por %p176, %p177
    %s180 = sadd.s32 %s179, 1
    %p183 = scmp.eq.s32.totalorder %s19, 1
    %p184 = scmp.ne.s32.totalorder %s179, %s181
    %p185 = scmp.eq.s32.totalorder %s19, 0
    %p186 = por %p184, %p185
    %p187 = scmp.ne.s32.totalorder %s179, %s181
    %p188 = scmp.eq.s32.totalorder %s24, 1
    %p189 = por %p187, %p188
    %p190 = scmp.ne.s32.totalorder %s181, %s182
    %p191 = scmp.eq.s32.totalorder %s24, 0
    %p192 = por %p190, %p191
    %p193 = scmp.ne.s32.totalorder %s181, %s182
    %p194 = scmp.eq.s32.totalorder %s25, 1
    %p195 = por %p193, %p194
    %p197 = scmp.ne.s32.totalorder %s182, %s196
    %p198 = scmp.eq.s32.totalorder %s25, 0
    %p199 = por %p197, %p198
    %s201 = sadd.s32 %s200, 1
    %p204 = scmp.eq.s32.totalorder %s19, 1
    %p205 = scmp.ne.s32.totalorder %s200, %s202
    %p206 = scmp.eq.s32.totalorder %s19, 0
    %p207 = por %p205, %p206
    %p208 = scmp.ne.s32.totalorder %s200, %s202
    %p209 = scmp.eq.s32.totalorder %s24, 1
    %p210 = por %p208, %p209
    %p211 = scmp.ne.s32.totalorder %s202, %s203
    %p212 = scmp.eq.s32.totalorder %s24, 0
    %p213 = por %p211, %p212
    %p214 = scmp.ne.s32.totalorder %s202, %s203
    %p215 = scmp.eq.s32.totalorder %s25, 1
    %p216 = por %p214, %p215
    %p218 = scmp.ne.s32.totalorder %s203, %s217
    %p219 = scmp.eq.s32.totalorder %s25, 0
    %p220 = por %p218, %p219
    %s222 = sadd.s32 %s221, 1
    %p225 = scmp.eq.s32.totalorder %s19, 1
    %p226 = scmp.ne.s32.totalorder %s221, %s223
    %p227 = scmp.eq.s32.totalorder %s19, 0
    %p228 = por %p226, %p227
    %p229 = scmp.ne.s32.totalorder %s221, %s223
    %p230 = scmp.eq.s32.totalorder %s24, 1
    %p231 = por %p229, %p230
    %p232 = scmp.ne.s32.totalorder %s223, %s224
    %p233 = scmp.eq.s32.totalorder %s24, 0
    %p234 = por %p232, %p233
    %p235 = scmp.ne.s32.totalorder %s223, %s224
    %p236 = scmp.eq.s32.totalorder %s25, 1
    %p237 = por %p235, %p236
    %p239 = scmp.ne.s32.totalorder %s224, %s238
    %p240 = scmp.eq.s32.totalorder %s25, 0
    %p241 = por %p239, %p240
    %s243 = sadd.s32 %s242, 1
    %p246 = scmp.eq.s32.totalorder %s19, 1
    %p247 = scmp.ne.s32.totalorder %s242, %s244
    %p248 = scmp.eq.s32.totalorder %s19, 0
    %p249 = por %p247, %p248
    %p250 = scmp.ne.s32.totalorder %s242, %s244
    %p251 = scmp.eq.s32.totalorder %s24, 1
    %p252 = por %p250, %p251
    %p253 = scmp.ne.s32.totalorder %s244, %s245
    %p254 = scmp.eq.s32.totalorder %s24, 0
    %p255 = por %p253, %p254
    %p256 = scmp.ne.s32.totalorder %s244, %s245
    %p257 = scmp.eq.s32.totalorder %s25, 1
    %p258 = por %p256, %p257
    %p260 = scmp.ne.s32.totalorder %s245, %s259
    %p261 = scmp.eq.s32.totalorder %s25, 0
    %p262 = por %p260, %p261
    %s264 = sadd.s32 %s263, 1
    %p267 = scmp.eq.s32.totalorder %s19, 1
    %p268 = scmp.ne.s32.totalorder %s263, %s265
    %p269 = scmp.eq.s32.totalorder %s19, 0
    %p270 = por %p268, %p269
    %p271 = scmp.ne.s32.totalorder %s263, %s265
    %p272 = scmp.eq.s32.totalorder %s24, 1
    %p273 = por %p271, %p272
    %p274 = scmp.ne.s32.totalorder %s265, %s266
    %p275 = scmp.eq.s32.totalorder %s24, 0
    %p276 = por %p274, %p275
    %p277 = scmp.ne.s32.totalorder %s265, %s266
    %p278 = scmp.eq.s32.totalorder %s25, 1
    %p279 = por %p277, %p278
    %p281 = scmp.ne.s32.totalorder %s266, %s280
    %p282 = scmp.eq.s32.totalorder %s25, 0
    %p283 = por %p281, %p282
    %s285 = sadd.s32 %s284, 1
    %p288 = scmp.eq.s32.totalorder %s19, 1
    %p289 = scmp.ne.s32.totalorder %s284, %s286
    %p290 = scmp.eq.s32.totalorder %s19, 0
    %p291 = por %p289, %p290
    %p292 = scmp.ne.s32.totalorder %s284, %s286
    %p293 = scmp.eq.s32.totalorder %s24, 1
    %p294 = por %p292, %p293
    %p295 = scmp.ne.s32.totalorder %s286, %s287
    %p296 = scmp.eq.s32.totalorder %s24, 0
    %p297 = por %p295, %p296
    %p298 = scmp.ne.s32.totalorder %s286, %s287
    %p299 = scmp.eq.s32.totalorder %s25, 1
    %p300 = por %p298, %p299
    %p302 = scmp.ne.s32.totalorder %s287, %s301
    %p303 = scmp.eq.s32.totalorder %s25, 0
    %p304 = por %p302, %p303
    %s305 = ssub.s32 %s19, %s26
    %p306 = scmp.eq.s32.totalorder %s305, 0
    %s308 = sadd.s32 %s307, 1
    %s309 = scalar_select %p306, %s307, %s308
    %p312 = pneg %p306
    %p313 = scmp.eq.s32.totalorder %s19, 1
    %p314 = por %p312, %p313
    %p315 = scmp.ne.s32.totalorder %s307, %s310
    %p316 = scmp.eq.s32.totalorder %s19, 0
    %p317 = por %p315, %p316
    %p318 = scmp.ne.s32.totalorder %s307, %s310
    %p319 = scmp.eq.s32.totalorder %s24, 1
    %p320 = por %p318, %p319
    %p321 = scmp.ne.s32.totalorder %s310, %s311
    %p322 = scmp.eq.s32.totalorder %s24, 0
    %p323 = por %p321, %p322
    %p324 = scmp.ne.s32.totalorder %s310, %s311
    %p325 = scmp.eq.s32.totalorder %s25, 1
    %p326 = por %p324, %p325
    %p328 = scmp.ne.s32.totalorder %s311, %s327
    %p329 = scmp.eq.s32.totalorder %s25, 0
    %p330 = por %p328, %p329
    %p331 = scmp.le.s32.totalorder 1, %s19
    %p332 = scmp.lt.s32.totalorder %s19, 3
    %p333 = pnand %p331, %p332
    %p334 = pneg %p333
    // Predicated region
    $region9: #{apply_cdrnn_forward.4} parent=5 // pred_check
      _
    $region10: #{apply_cdrnn_forward.4} parent=5 // pred_check_branch
      %336 = sbr.rel (%p333) target = $region12
    $region11: #{apply_cdrnn_forward.4} parent=5 // pred_region
      %s337 = ssub.s32 %s19, 1
      // Predicated region
      $region13: #{apply_cdrnn_forward.4} parent=11 // pred_check
        %p338 = pneg %p66
      $region14: #{apply_cdrnn_forward.4} parent=11 // pred_check_branch
        %340 = sbr.rel (%p338) target = $region16
      $region15: #{apply_cdrnn_forward.4} parent=11 // pred_region
        _
      $region16: #{apply_cdrnn_forward.4} parent=11 // pred_fallthru
        _
      // Predicated region
      $region17: #{apply_cdrnn_forward.4} parent=11 // pred_check
        %p341 = pneg %p87
      $region18: #{apply_cdrnn_forward.4} parent=11 // pred_check_branch
        %343 = sbr.rel (%p341) target = $region20
      $region19: #{apply_cdrnn_forward.4} parent=11 // pred_region
        _
      $region20: #{apply_cdrnn_forward.4} parent=11 // pred_fallthru
        _
      // Predicated region
      $region21: #{apply_cdrnn_forward.4} parent=11 // pred_check
        %p344 = pneg %p108
      $region22: #{apply_cdrnn_forward.4} parent=11 // pred_check_branch
        %346 = sbr.rel (%p344) target = $region24
      $region23: #{apply_cdrnn_forward.4} parent=11 // pred_region
        _
      $region24: #{apply_cdrnn_forward.4} parent=11 // pred_fallthru
        _
      // Predicated region
      $region25: #{apply_cdrnn_forward.4} parent=11 // pred_check
        %p347 = pneg %p129
      $region26: #{apply_cdrnn_forward.4} parent=11 // pred_check_branch
        %349 = sbr.rel (%p347) target = $region28
      $region27: #{apply_cdrnn_forward.4} parent=11 // pred_region
        _
      $region28: #{apply_cdrnn_forward.4} parent=11 // pred_fallthru
        _
      // Predicated region
      $region29: #{apply_cdrnn_forward.4} parent=11 // pred_check
        %p350 = pneg %p150
      $region30: #{apply_cdrnn_forward.4} parent=11 // pred_check_branch
        %352 = sbr.rel (%p350) target = $region32
      $region31: #{apply_cdrnn_forward.4} parent=11 // pred_region
        _
      $region32: #{apply_cdrnn_forward.4} parent=11 // pred_fallthru
        _
      // Predicated region
      $region33: #{apply_cdrnn_forward.4} parent=11 // pred_check
        %p353 = pneg %p171
      $region34: #{apply_cdrnn_forward.4} parent=11 // pred_check_branch
        %355 = sbr.rel (%p353) target = $region36
      $region35: #{apply_cdrnn_forward.4} parent=11 // pred_region
        _
      $region36: #{apply_cdrnn_forward.4} parent=11 // pred_fallthru
        _
      // Predicated region
      $region37: #{apply_cdrnn_forward.4} parent=11 // pred_check
        %p356 = pneg %p192
      $region38: #{apply_cdrnn_forward.4} parent=11 // pred_check_branch
        %358 = sbr.rel (%p356) target = $region40
      $region39: #{apply_cdrnn_forward.4} parent=11 // pred_region
        _
      $region40: #{apply_cdrnn_forward.4} parent=11 // pred_fallthru
        _
      // Predicated region
      $region41: #{apply_cdrnn_forward.4} parent=11 // pred_check
        %p359 = pneg %p213
      $region42: #{apply_cdrnn_forward.4} parent=11 // pred_check_branch
        %361 = sbr.rel (%p359) target = $region44
      $region43: #{apply_cdrnn_forward.4} parent=11 // pred_region
        _
      $region44: #{apply_cdrnn_forward.4} parent=11 // pred_fallthru
        _
      // Predicated region
      $region45: #{apply_cdrnn_forward.4} parent=11 // pred_check
        %p362 = pneg %p234
      $region46: #{apply_cdrnn_forward.4} parent=11 // pred_check_branch
        %364 = sbr.rel (%p362) target = $region48
      $region47: #{apply_cdrnn_forward.4} parent=11 // pred_region
        _
      $region48: #{apply_cdrnn_forward.4} parent=11 // pred_fallthru
        _
      // Predicated region
      $region49: #{apply_cdrnn_forward.4} parent=11 // pred_check
        %p365 = pneg %p255
      $region50: #{apply_cdrnn_forward.4} parent=11 // pred_check_branch
        %367 = sbr.rel (%p365) target = $region52
      $region51: #{apply_cdrnn_forward.4} parent=11 // pred_region
        _
      $region52: #{apply_cdrnn_forward.4} parent=11 // pred_fallthru
        _
      // Predicated region
      $region53: #{apply_cdrnn_forward.4} parent=11 // pred_check
        %p368 = pneg %p276
      $region54: #{apply_cdrnn_forward.4} parent=11 // pred_check_branch
        %370 = sbr.rel (%p368) target = $region56
      $region55: #{apply_cdrnn_forward.4} parent=11 // pred_region
        _
      $region56: #{apply_cdrnn_forward.4} parent=11 // pred_fallthru
        _
      // Predicated region
      $region57: #{apply_cdrnn_forward.4} parent=11 // pred_check
        %p371 = pneg %p297
      $region58: #{apply_cdrnn_forward.4} parent=11 // pred_check_branch
        %373 = sbr.rel (%p371) target = $region60
      $region59: #{apply_cdrnn_forward.4} parent=11 // pred_region
        _
      $region60: #{apply_cdrnn_forward.4} parent=11 // pred_fallthru
        _
    $region12: #{apply_cdrnn_forward.4} parent=5 // pred_fallthru
      _
    %p374 = scmp.lt.s32.totalorder %s19, 2
    // Predicated region
    $region61: #{apply_cdrnn_forward.4} parent=5 // pred_check
      %p375 = pneg %p374
    $region62: #{apply_cdrnn_forward.4} parent=5 // pred_check_branch
      %377 = sbr.rel (%p375) target = $region64
    $region63: #{apply_cdrnn_forward.4} parent=5 // pred_region
      // Predicated region
      $region65: #{apply_cdrnn_forward.4} parent=63 // pred_check
        %p378 = pneg %p39
      $region66: #{apply_cdrnn_forward.4} parent=63 // pred_check_branch
        %380 = sbr.rel (%p378) target = $region68
      $region67: #{apply_cdrnn_forward.4} parent=63 // pred_region
        %p381 = scmp.lt.s32.totalorder %s19, 1
        %s382 = scalar_select %p381, %s19, 1
        %s383 = smul.addr %s382, 8
        %s384 = scalar_lea.vmem %s0, %s383
      $region68: #{apply_cdrnn_forward.4} parent=63 // pred_fallthru
        _
    $region64: #{apply_cdrnn_forward.4} parent=5 // pred_fallthru
      _
    %p385 = scmp.le.s32.totalorder 1, %s19
    %p386 = scmp.lt.s32.totalorder %s19, 3
    %p387 = pnand %p385, %p386
    %p388 = pneg %p387
    // Predicated region
    $region69: #{apply_cdrnn_forward.4} parent=5 // pred_check
      _
    $region70: #{apply_cdrnn_forward.4} parent=5 // pred_check_branch
      %390 = sbr.rel (%p387) target = $region72
    $region71: #{apply_cdrnn_forward.4} parent=5 // pred_region
      %s391 = ssub.s32 %s19, 1
      %p392 = scmp.lt.s32.totalorder %s24, 1
      %s393 = scalar_select %p392, %s24, 1
      %s394 = smul.addr %s393, 8
      %s395 = scalar_lea.vmem %s0, %s394
      %p396 = pneg %p45
      %p397 = pneg %p42
      %p398 = pneg %p66
      %p399 = pneg %p63
      %p400 = pneg %p87
      %p401 = pneg %p84
      %p402 = pneg %p108
      %p403 = pneg %p105
      %p404 = pneg %p129
      %p405 = pneg %p126
      %p406 = pneg %p150
      %p407 = pneg %p147
      %p408 = pneg %p171
      %p409 = pneg %p168
      %p410 = pneg %p192
      %p411 = pneg %p189
      %p412 = pneg %p213
      %p413 = pneg %p210
      %p414 = pneg %p234
      %p415 = pneg %p231
      %p416 = pneg %p255
      %p417 = pneg %p252
      %p418 = pneg %p276
      %p419 = pneg %p273
      %p420 = pneg %p297
      %p421 = pneg %p294
      %p422 = pneg %p323
      %p423 = pneg %p320
      %p424 = scmp.lt.s32.totalorder %s24, 1
      %s425 = scalar_select %p424, %s24, 1
      %s426 = scalar_lea.vmem %s13, %s425
      %p427 = scmp.lt.s32.totalorder %s24, 1
      %s428 = scalar_select %p427, %s24, 1
      %s429 = smul.addr %s428, 8
      %s430 = scalar_lea.vmem %s0, %s429
      %p431 = scmp.lt.s32.totalorder %s24, 1
      %s432 = scalar_select %p431, %s24, 1
      %s433 = scalar_lea.vmem %s13, %s432
      %v435 = vld [vmem:[%s430] sm:$0xff]
      %v436 = vlaneseq
      %v437 = vshrl.u32 %v436, 7
      %v438 = vld [vmem:[%s4] sm:$0x1]
      %v439 = vpack.c.bf16 %v435, %v435
      %v440 = vld [vmem:[%s2] sm:$0xf]
      %v441 = vld [vmem:[%s2 + $0x4] sm:$0xf]
      %v442 = vld [vmem:[%s2 + $0x8] sm:$0xf]
      %v443 = vld [vmem:[%s2 + $0xc] sm:$0xf]
      %v444 = vld [vmem:[%s2 + $0x10] sm:$0xf]
      %v445 = vld [vmem:[%s2 + $0x14] sm:$0xf]
      %v446 = vld [vmem:[%s2 + $0x18] sm:$0xf]
      %v447 = vld [vmem:[%s2 + $0x1c] sm:$0xf]
      %vm448 = vcmp.eq.s32.totalorder %v437, 0
      %v449 = vrot.slane %v435, 7
      %v450 = vsel %vm448, 1, 0
      %vm451 = vcmp.eq.s32.totalorder %v450, 1
      %v452 = vsel %vm451, 0.0, %v449
      %v453 = vpack.c.bf16 %v452, %v452
      %v454 = vld [vmem:[%s1] sm:$0xf]
      %v455 = vld [vmem:[%s1 + $0x4] sm:$0xf]
      %v456 = vld [vmem:[%s1 + $0x8] sm:$0xf]
      %v457 = vld [vmem:[%s1 + $0xc] sm:$0xf]
      %v458 = vld [vmem:[%s1 + $0x10] sm:$0xf]
      %v459 = vld [vmem:[%s1 + $0x14] sm:$0xf]
      %v460 = vld [vmem:[%s1 + $0x18] sm:$0xf]
      %v461 = vld [vmem:[%s1 + $0x1c] sm:$0xf]
      %v470 = vunpack.c.l.b16 %v454
      %v471 = vunpack.c.l.b16 %v455
      %v472 = vunpack.c.l.b16 %v456
      %v473 = vunpack.c.l.b16 %v457
      %v474 = vunpack.c.l.b16 %v458
      %v475 = vunpack.c.l.b16 %v459
      %v476 = vunpack.c.l.b16 %v460
      %v477 = vunpack.c.l.b16 %v461
      %v478 = vpack.c.b16 %v471, %v470
      %v479 = vpack.c.b16 %v473, %v472
      %v480 = vpack.c.b16 %v475, %v474
      %v481 = vpack.c.b16 %v477, %v476
      %vm486 = vcmask 523264
      %v488 = vsel %vm486, %v453, 0
      %490 = vmatprep.subr.bf16.mxu0 0
      %491 = vmatpush1.bf16.msra.mxu0 0
      %492 = vmatprep.subr.bf16.mxu0 0
      %493 = vmatpush1.bf16.msra.mxu0 0
      %494 = vmatprep.subr.bf16.mxu0 0
      %495 = vmatpush1.bf16.msra.mxu0 0
      %496 = vmatprep.subr.bf16.mxu0 0
      %497 = vmatpush1.bf16.msra.mxu0 0
      %498 = vmatprep.subr.bf16.mxu0 0
      %499 = vmatpush1.bf16.msra.mxu0 %v481
      %500 = vmatprep.subr.bf16.mxu0 0
      %501 = vmatpush1.bf16.msra.mxu0 %v480
      %502 = vmatprep.subr.bf16.mxu0 0
      %503 = vmatpush1.bf16.msra.mxu0 %v479
      %504 = vmatprep.subr.bf16.mxu0 0
      %505 = vmatpush1.bf16.msra.mxu0 %v478
      %506 = vmatprep.subr.bf16.mxu0 0
      %507 = vmatpush2.bf16.msra.mxu0 0
      %508 = vmatprep.subr.bf16.mxu0 0
      %509 = vmatpush2.bf16.msra.mxu0 0
      %510 = vmatprep.subr.bf16.mxu0 0
      %511 = vmatpush2.bf16.msra.mxu0 0
      %512 = vmatprep.subr.bf16.mxu0 0
      %513 = vmatpush2.bf16.msra.mxu0 0
      %514 = vmatprep.subr.bf16.mxu0 0
      %515 = vmatpush2.bf16.msra.mxu0 0
      %516 = vmatprep.subr.bf16.mxu0 0
      %517 = vmatpush2.bf16.msra.mxu0 0
      %518 = vmatprep.subr.bf16.mxu0 0
      %519 = vmatpush2.bf16.msra.mxu0 0
      %520 = vmatprep.subr.bf16.mxu0 0
      %521 = vmatpush2.bf16.msra.mxu0 0
      %522 = vmatprep.mubr.bf16.mxu0 0
      %523 = vmatmul.mubr.bf16.gmra.mxu0 %v488
      %v524 = vpop.f32.mrf.mxu0
      %v525 = vadd.f32 0.0, %v524
      %v526 = vpop.f32.mrf.mxu0
      %v527 = vpop.f32.mrf.mxu0
      %v528 = vpop.f32.mrf.mxu0
      %529 = vdwg.mxu0
      %v538 = vunpack.c.l.b16 %v440
      %v539 = vunpack.c.l.b16 %v441
      %v540 = vunpack.c.l.b16 %v442
      %v541 = vunpack.c.l.b16 %v443
      %v542 = vunpack.c.l.b16 %v444
      %v543 = vunpack.c.l.b16 %v445
      %v544 = vunpack.c.l.b16 %v446
      %v545 = vunpack.c.l.b16 %v447
      %v546 = vpack.c.b16 %v539, %v538
      %v547 = vpack.c.b16 %v541, %v540
      %v548 = vpack.c.b16 %v543, %v542
      %v549 = vpack.c.b16 %v545, %v544
      %v555 = vsel %vm486, %v439, 0
      %557 = vmatprep.subr.bf16.mxu0 0
      %558 = vmatpush1.bf16.msra.mxu0 0
      %559 = vmatprep.subr.bf16.mxu0 0
      %560 = vmatpush1.bf16.msra.mxu0 0
      %561 = vmatprep.subr.bf16.mxu0 0
      %562 = vmatpush1.bf16.msra.mxu0 0
      %563 = vmatprep.subr.bf16.mxu0 0
      %564 = vmatpush1.bf16.msra.mxu0 0
      %565 = vmatprep.subr.bf16.mxu0 0
      %566 = vmatpush1.bf16.msra.mxu0 %v549
      %567 = vmatprep.subr.bf16.mxu0 0
      %568 = vmatpush1.bf16.msra.mxu0 %v548
      %569 = vmatprep.subr.bf16.mxu0 0
      %570 = vmatpush1.bf16.msra.mxu0 %v547
      %571 = vmatprep.subr.bf16.mxu0 0
      %572 = vmatpush1.bf16.msra.mxu0 %v546
      %573 = vmatprep.subr.bf16.mxu0 0
      %574 = vmatpush2.bf16.msra.mxu0 0
      %575 = vmatprep.subr.bf16.mxu0 0
      %576 = vmatpush2.bf16.msra.mxu0 0
      %577 = vmatprep.subr.bf16.mxu0 0
      %578 = vmatpush2.bf16.msra.mxu0 0
      %579 = vmatprep.subr.bf16.mxu0 0
      %580 = vmatpush2.bf16.msra.mxu0 0
      %581 = vmatprep.subr.bf16.mxu0 0
      %582 = vmatpush2.bf16.msra.mxu0 0
      %583 = vmatprep.subr.bf16.mxu0 0
      %584 = vmatpush2.bf16.msra.mxu0 0
      %585 = vmatprep.subr.bf16.mxu0 0
      %586 = vmatpush2.bf16.msra.mxu0 0
      %587 = vmatprep.subr.bf16.mxu0 0
      %588 = vmatpush2.bf16.msra.mxu0 0
      %589 = vmatprep.mubr.bf16.mxu0 0
      %590 = vmatmul.mubr.bf16.gmra.mxu0 %v555
      %v591 = vpop.f32.mrf.mxu0
      %v592 = vadd.f32 %v525, %v591
      %v593 = vpop.f32.mrf.mxu0
      %v594 = vpop.f32.mrf.mxu0
      %v595 = vpop.f32.mrf.mxu0
      %596 = vdwg.mxu0
      %vm597 = vcmp.eq.s32.totalorder %v437, 7
      %v598 = vrot.slane %v435, 1
      %v599 = vsel %vm597, 1, 0
      %vm600 = vcmp.eq.s32.totalorder %v599, 1
      %v601 = vsel %vm600, 0.0, %v598
      %v602 = vpack.c.bf16 %v601, %v601
      %v603 = vld [vmem:[%s3] sm:$0xf]
      %v604 = vld [vmem:[%s3 + $0x4] sm:$0xf]
      %v605 = vld [vmem:[%s3 + $0x8] sm:$0xf]
      %v606 = vld [vmem:[%s3 + $0xc] sm:$0xf]
      %v607 = vld [vmem:[%s3 + $0x10] sm:$0xf]
      %v608 = vld [vmem:[%s3 + $0x14] sm:$0xf]
      %v609 = vld [vmem:[%s3 + $0x18] sm:$0xf]
      %v610 = vld [vmem:[%s3 + $0x1c] sm:$0xf]
      %v619 = vunpack.c.l.b16 %v603
      %v620 = vunpack.c.l.b16 %v604
      %v621 = vunpack.c.l.b16 %v605
      %v622 = vunpack.c.l.b16 %v606
      %v623 = vunpack.c.l.b16 %v607
      %v624 = vunpack.c.l.b16 %v608
      %v625 = vunpack.c.l.b16 %v609
      %v626 = vunpack.c.l.b16 %v610
      %v627 = vpack.c.b16 %v620, %v619
      %v628 = vpack.c.b16 %v622, %v621
      %v629 = vpack.c.b16 %v624, %v623
      %v630 = vpack.c.b16 %v626, %v625
      %v636 = vsel %vm486, %v602, 0
      %638 = vmatprep.subr.bf16.mxu0 0
      %639 = vmatpush1.bf16.msra.mxu0 0
      %640 = vmatprep.subr.bf16.mxu0 0
      %641 = vmatpush1.bf16.msra.mxu0 0
      %642 = vmatprep.subr.bf16.mxu0 0
      %643 = vmatpush1.bf16.msra.mxu0 0
      %644 = vmatprep.subr.bf16.mxu0 0
      %645 = vmatpush1.bf16.msra.mxu0 0
      %646 = vmatprep.subr.bf16.mxu0 0
      %647 = vmatpush1.bf16.msra.mxu0 %v630
      %648 = vmatprep.subr.bf16.mxu0 0
      %649 = vmatpush1.bf16.msra.mxu0 %v629
      %650 = vmatprep.subr.bf16.mxu0 0
      %651 = vmatpush1.bf16.msra.mxu0 %v628
      %652 = vmatprep.subr.bf16.mxu0 0
      %653 = vmatpush1.bf16.msra.mxu0 %v627
      %654 = vmatprep.subr.bf16.mxu0 0
      %655 = vmatpush2.bf16.msra.mxu0 0
      %656 = vmatprep.subr.bf16.mxu0 0
      %657 = vmatpush2.bf16.msra.mxu0 0
      %658 = vmatprep.subr.bf16.mxu0 0
      %659 = vmatpush2.bf16.msra.mxu0 0
      %660 = vmatprep.subr.bf16.mxu0 0
      %661 = vmatpush2.bf16.msra.mxu0 0
      %662 = vmatprep.subr.bf16.mxu0 0
      %663 = vmatpush2.bf16.msra.mxu0 0
      %664 = vmatprep.subr.bf16.mxu0 0
      %665 = vmatpush2.bf16.msra.mxu0 0
      %666 = vmatprep.subr.bf16.mxu0 0
      %667 = vmatpush2.bf16.msra.mxu0 0
      %668 = vmatprep.subr.bf16.mxu0 0
      %669 = vmatpush2.bf16.msra.mxu0 0
      %670 = vmatprep.mubr.bf16.mxu0 0
      %671 = vmatmul.mubr.bf16.gmra.mxu0 %v636
      %v672 = vpop.f32.mrf.mxu0
      %v673 = vadd.f32 0.0, %v672
      %v674 = vpop.f32.mrf.mxu0
      %v675 = vpop.f32.mrf.mxu0
      %v676 = vpop.f32.mrf.mxu0
      %677 = vdwg.mxu0
      %v678 = vadd.f32 %v592, %v673
      %v680 = vlaneseq
      %v681 = vshrl.u32 %v680, 7
      %v682 = vsub.s32 0, %v681
      %v683 = vrot.slane %v438, %v682
      %v685 = vadd.f32 %v678, %v683
      %687 = vrot.lane.b32.xlu0 %v685, 96
      %v688 = vpop.permute.xlu0 %687
      %v690 = vmax.f32 %v685, %v688
      %v691 = vld [vmem:[%s5] sm:$0x1]
      %v692 = vld [vmem:[%s6] sm:$0x1]
      %vm693 = vcmask 261120
      %v694 = vsel %vm693, %v690, 0.0
      %695 = vadd.xlane.f32.xlu0 %v694
      %v696 = vpop.xlane.xlu0 %695
      %v697 = vrcp.pop 32.0
      %v698 = vmul.f32 %v696, %v697
      %v699 = vsub.f32 %v690, %v698
      %v700 = vmul.f32 %v699, %v699
      %v701 = vsel %vm693, %v700, 0.0
      %702 = vadd.xlane.f32.xlu0 %v701
      %v703 = vpop.xlane.xlu0 %702
      %v704 = vmul.f32 %v703, %v697
      %v705 = vadd.f32 %v704, 1e-05
      %v706 = vrsqrt.pop %v705
      %v707 = vmul.f32 %v699, %v706
      %v709 = vlaneseq
      %v710 = vshrl.u32 %v709, 7
      %v711 = vsub.s32 0, %v710
      %v712 = vrot.slane %v691, %v711
      %v714 = vmul.f32 %v707, %v712
      %v716 = vlaneseq
      %v717 = vshrl.u32 %v716, 7
      %v718 = vsub.s32 0, %v717
      %v719 = vrot.slane %v692, %v718
      %v721 = vadd.f32 %v714, %v719
      %vm722 = vcmp.ge.f32.partialorder %v721, 0.0
      %v723 = vmul.f32 %v721, 0.01
      %v724 = vsel %vm722, %v721, %v723
      %v725 = vld [vmem:[%s10] sm:$0x1]
      %v726 = vpack.c.bf16 %v724, %v724
      %v727 = vld [vmem:[%s8] sm:$0xf]
      %v728 = vld [vmem:[%s8 + $0x4] sm:$0xf]
      %v729 = vld [vmem:[%s8 + $0x8] sm:$0xf]
      %v730 = vld [vmem:[%s8 + $0xc] sm:$0xf]
      %v731 = vrot.slane %v724, 7
      %v732 = vsel %vm451, 0.0, %v731
      %v733 = vpack.c.bf16 %v732, %v732
      %v734 = vld [vmem:[%s7] sm:$0xf]
      %v735 = vld [vmem:[%s7 + $0x4] sm:$0xf]
      %v736 = vld [vmem:[%s7 + $0x8] sm:$0xf]
      %v737 = vld [vmem:[%s7 + $0xc] sm:$0xf]
      %v742 = vunpack.c.l.b16 %v734
      %v743 = vunpack.c.l.b16 %v735
      %v744 = vunpack.c.l.b16 %v736
      %v745 = vunpack.c.l.b16 %v737
      %v746 = vpack.c.b16 %v743, %v742
      %v747 = vpack.c.b16 %v745, %v744
      %v751 = vsel %vm693, %v733, 0
      %753 = vmatprep.subr.bf16.mxu0 0
      %754 = vmatpush1.bf16.msra.mxu0 0
      %755 = vmatprep.subr.bf16.mxu0 0
      %756 = vmatpush1.bf16.msra.mxu0 0
      %757 = vmatprep.subr.bf16.mxu0 0
      %758 = vmatpush1.bf16.msra.mxu0 0
      %759 = vmatprep.subr.bf16.mxu0 0
      %760 = vmatpush1.bf16.msra.mxu0 0
      %761 = vmatprep.subr.bf16.mxu0 0
      %762 = vmatpush1.bf16.msra.mxu0 0
      %763 = vmatprep.subr.bf16.mxu0 0
      %764 = vmatpush1.bf16.msra.mxu0 0
      %765 = vmatprep.subr.bf16.mxu0 0
      %766 = vmatpush1.bf16.msra.mxu0 %v747
      %767 = vmatprep.subr.bf16.mxu0 0
      %768 = vmatpush1.bf16.msra.mxu0 %v746
      %769 = vmatprep.subr.bf16.mxu0 0
      %770 = vmatpush2.bf16.msra.mxu0 0
      %771 = vmatprep.subr.bf16.mxu0 0
      %772 = vmatpush2.bf16.msra.mxu0 0
      %773 = vmatprep.subr.bf16.mxu0 0
      %774 = vmatpush2.bf16.msra.mxu0 0
      %775 = vmatprep.subr.bf16.mxu0 0
      %776 = vmatpush2.bf16.msra.mxu0 0
      %777 = vmatprep.subr.bf16.mxu0 0
      %778 = vmatpush2.bf16.msra.mxu0 0
      %779 = vmatprep.subr.bf16.mxu0 0
      %780 = vmatpush2.bf16.msra.mxu0 0
      %781 = vmatprep.subr.bf16.mxu0 0
      %782 = vmatpush2.bf16.msra.mxu0 0
      %783 = vmatprep.subr.bf16.mxu0 0
      %784 = vmatpush2.bf16.msra.mxu0 0
      %785 = vmatprep.mubr.bf16.mxu0 0
      %786 = vmatmul.mubr.bf16.gmra.mxu0 %v751
      %v787 = vpop.f32.mrf.mxu0
      %v788 = vadd.f32 0.0, %v787
      %v789 = vpop.f32.mrf.mxu0
      %v790 = vpop.f32.mrf.mxu0
      %v791 = vpop.f32.mrf.mxu0
      %792 = vdwg.mxu0
      %v797 = vunpack.c.l.b16 %v727
      %v798 = vunpack.c.l.b16 %v728
      %v799 = vunpack.c.l.b16 %v729
      %v800 = vunpack.c.l.b16 %v730
      %v801 = vpack.c.b16 %v798, %v797
      %v802 = vpack.c.b16 %v800, %v799
      %v806 = vsel %vm693, %v726, 0
      %808 = vmatprep.subr.bf16.mxu0 0
      %809 = vmatpush1.bf16.msra.mxu0 0
      %810 = vmatprep.subr.bf16.mxu0 0
      %811 = vmatpush1.bf16.msra.mxu0 0
      %812 = vmatprep.subr.bf16.mxu0 0
      %813 = vmatpush1.bf16.msra.mxu0 0
      %814 = vmatprep.subr.bf16.mxu0 0
      %815 = vmatpush1.bf16.msra.mxu0 0
      %816 = vmatprep.subr.bf16.mxu0 0
      %817 = vmatpush1.bf16.msra.mxu0 0
      %818 = vmatprep.subr.bf16.mxu0 0
      %819 = vmatpush1.bf16.msra.mxu0 0
      %820 = vmatprep.subr.bf16.mxu0 0
      %821 = vmatpush1.bf16.msra.mxu0 %v802
      %822 = vmatprep.subr.bf16.mxu0 0
      %823 = vmatpush1.bf16.msra.mxu0 %v801
      %824 = vmatprep.subr.bf16.mxu0 0
      %825 = vmatpush2.bf16.msra.mxu0 0
      %826 = vmatprep.subr.bf16.mxu0 0
      %827 = vmatpush2.bf16.msra.mxu0 0
      %828 = vmatprep.subr.bf16.mxu0 0
      %829 = vmatpush2.bf16.msra.mxu0 0
      %830 = vmatprep.subr.bf16.mxu0 0
      %831 = vmatpush2.bf16.msra.mxu0 0
      %832 = vmatprep.subr.bf16.mxu0 0
      %833 = vmatpush2.bf16.msra.mxu0 0
      %834 = vmatprep.subr.bf16.mxu0 0
      %835 = vmatpush2.bf16.msra.mxu0 0
      %836 = vmatprep.subr.bf16.mxu0 0
      %837 = vmatpush2.bf16.msra.mxu0 0
      %838 = vmatprep.subr.bf16.mxu0 0
      %839 = vmatpush2.bf16.msra.mxu0 0
      %840 = vmatprep.mubr.bf16.mxu0 0
      %841 = vmatmul.mubr.bf16.gmra.mxu0 %v806
      %v842 = vpop.f32.mrf.mxu0
      %v843 = vadd.f32 %v788, %v842
      %v844 = vpop.f32.mrf.mxu0
      %v845 = vpop.f32.mrf.mxu0
      %v846 = vpop.f32.mrf.mxu0
      %847 = vdwg.mxu0
      %v848 = vrot.slane %v724, 1
      %v849 = vsel %vm600, 0.0, %v848
      %v850 = vpack.c.bf16 %v849, %v849
      %v851 = vld [vmem:[%s9] sm:$0xf]
      %v852 = vld [vmem:[%s9 + $0x4] sm:$0xf]
      %v853 = vld [vmem:[%s9 + $0x8] sm:$0xf]
      %v854 = vld [vmem:[%s9 + $0xc] sm:$0xf]
      %v859 = vunpack.c.l.b16 %v851
      %v860 = vunpack.c.l.b16 %v852
      %v861 = vunpack.c.l.b16 %v853
      %v862 = vunpack.c.l.b16 %v854
      %v863 = vpack.c.b16 %v860, %v859
      %v864 = vpack.c.b16 %v862, %v861
      %v868 = vsel %vm693, %v850, 0
      %870 = vmatprep.subr.bf16.mxu0 0
      %871 = vmatpush1.bf16.msra.mxu0 0
      %872 = vmatprep.subr.bf16.mxu0 0
      %873 = vmatpush1.bf16.msra.mxu0 0
      %874 = vmatprep.subr.bf16.mxu0 0
      %875 = vmatpush1.bf16.msra.mxu0 0
      %876 = vmatprep.subr.bf16.mxu0 0
      %877 = vmatpush1.bf16.msra.mxu0 0
      %878 = vmatprep.subr.bf16.mxu0 0
      %879 = vmatpush1.bf16.msra.mxu0 0
      %880 = vmatprep.subr.bf16.mxu0 0
      %881 = vmatpush1.bf16.msra.mxu0 0
      %882 = vmatprep.subr.bf16.mxu0 0
      %883 = vmatpush1.bf16.msra.mxu0 %v864
      %884 = vmatprep.subr.bf16.mxu0 0
      %885 = vmatpush1.bf16.msra.mxu0 %v863
      %886 = vmatprep.subr.bf16.mxu0 0
      %887 = vmatpush2.bf16.msra.mxu0 0
      %888 = vmatprep.subr.bf16.mxu0 0
      %889 = vmatpush2.bf16.msra.mxu0 0
      %890 = vmatprep.subr.bf16.mxu0 0
      %891 = vmatpush2.bf16.msra.mxu0 0
      %892 = vmatprep.subr.bf16.mxu0 0
      %893 = vmatpush2.bf16.msra.mxu0 0
      %894 = vmatprep.subr.bf16.mxu0 0
      %895 = vmatpush2.bf16.msra.mxu0 0
      %896 = vmatprep.subr.bf16.mxu0 0
      %897 = vmatpush2.bf16.msra.mxu0 0
      %898 = vmatprep.subr.bf16.mxu0 0
      %899 = vmatpush2.bf16.msra.mxu0 0
      %900 = vmatprep.subr.bf16.mxu0 0
      %901 = vmatpush2.bf16.msra.mxu0 0
      %902 = vmatprep.mubr.bf16.mxu0 0
      %903 = vmatmul.mubr.bf16.gmra.mxu0 %v868
      %v904 = vpop.f32.mrf.mxu0
      %v905 = vadd.f32 0.0, %v904
      %v906 = vpop.f32.mrf.mxu0
      %v907 = vpop.f32.mrf.mxu0
      %v908 = vpop.f32.mrf.mxu0
      %909 = vdwg.mxu0
      %v910 = vadd.f32 %v843, %v905
      %v912 = vlaneseq
      %v913 = vshrl.u32 %v912, 7
      %v914 = vsub.s32 0, %v913
      %v915 = vrot.slane %v725, %v914
      %v917 = vadd.f32 %v910, %v915
      %v918 = vld [vmem:[%s11] sm:$0x1]
      %v919 = vld [vmem:[%s12] sm:$0x1]
      %v920 = vsel %vm693, %v917, 0.0
      %921 = vadd.xlane.f32.xlu0 %v920
      %v922 = vpop.xlane.xlu0 %921
      %v923 = vmul.f32 %v922, %v697
      %v924 = vsub.f32 %v917, %v923
      %v925 = vmul.f32 %v924, %v924
      %v926 = vsel %vm693, %v925, 0.0
      %927 = vadd.xlane.f32.xlu0 %v926
      %v928 = vpop.xlane.xlu0 %927
      %v929 = vmul.f32 %v928, %v697
      %v930 = vadd.f32 %v929, 1e-05
      %v931 = vrsqrt.pop %v930
      %v932 = vmul.f32 %v924, %v931
      %v934 = vlaneseq
      %v935 = vshrl.u32 %v934, 7
      %v936 = vsub.s32 0, %v935
      %v937 = vrot.slane %v918, %v936
      %v939 = vmul.f32 %v932, %v937
      %v941 = vlaneseq
      %v942 = vshrl.u32 %v941, 7
      %v943 = vsub.s32 0, %v942
      %v944 = vrot.slane %v919, %v943
      %v946 = vadd.f32 %v939, %v944
      %vm947 = vcmp.ge.f32.partialorder %v946, 0.0
      %v948 = vmul.f32 %v946, 0.01
      %v949 = vsel %vm947, %v946, %v948
      %v951 = vcombine.high %v949, %v949
      %v953 = vunpack.c.l.s4 1983009808
      %v954 = vunpack.c.0.s8 %v953
      %v955 = vlaneseq
      %v956 = vshrl.u32 %v955, 7
      %v957 = vsub.s32 %v954, %v956
      %v958 = vrot.slane %v949, %v957
      %v960 = vunpack.c.l.s4 1983009808
      %v961 = vunpack.c.0.s8 %v960
      %v962 = vlaneseq
      %v963 = vshrl.u32 %v962, 7
      %v964 = vsub.s32 %v961, %v963
      %v965 = vrot.slane %v951, %v964
      %v966 = vcombine.high %v958, %v958
      %v967 = vcombine.high %v965, %v965
      %vm972 = vcmask 254976
      %v973 = vsel %vm972, %v958, -inf
      %v974 = vrot.slane %v973, 4
      %v975 = vmax.f32 %v973, %v974
      %v976 = vrot.slane %v975, 2
      %v977 = vmax.f32 %v975, %v976
      %v978 = vrot.slane %v977, 1
      %v979 = vmax.f32 %v977, %v978
      %v980 = vsel %vm972, %v966, -inf
      %v981 = vrot.slane %v980, 4
      %v982 = vmax.f32 %v980, %v981
      %v983 = vrot.slane %v982, 2
      %v984 = vmax.f32 %v982, %v983
      %v985 = vrot.slane %v984, 1
      %v986 = vmax.f32 %v984, %v985
      %v987 = vsel %vm972, %v965, -inf
      %v988 = vrot.slane %v987, 4
      %v989 = vmax.f32 %v987, %v988
      %v990 = vrot.slane %v989, 2
      %v991 = vmax.f32 %v989, %v990
      %v992 = vrot.slane %v991, 1
      %v993 = vmax.f32 %v991, %v992
      %v994 = vsel %vm972, %v967, -inf
      %v995 = vrot.slane %v994, 4
      %v996 = vmax.f32 %v994, %v995
      %v997 = vrot.slane %v996, 2
      %v998 = vmax.f32 %v996, %v997
      %v999 = vrot.slane %v998, 1
      %v1000 = vmax.f32 %v998, %v999
      %1002 = vrot.lane.b32.xlu0 %v986, 32
      %v1003 = vpop.permute.xlu0 %1002
      %1006 = vrot.lane.b32.xlu0 %v993, 64
      %v1007 = vpop.permute.xlu0 %1006
      %1010 = vrot.lane.b32.xlu0 %v1000, 96
      %v1011 = vpop.permute.xlu0 %1010
      %v1013 = vsel %vm693, %v979, %v1003
      %v1014 = vsel %vm486, %v1013, %v1007
      %vm1015 = vcmask 785408
      %v1016 = vsel %vm1015, %v1014, %v1011
      %1017 = vst [vmem:[%s433] sm:$0x1] %v1016
      %p1018 = scmp.lt.s32.totalorder %s24, 1
      %s1019 = scalar_select %p1018, %s24, 1
      %s1020 = scalar_lea.vmem %s13, %s1019
      // Predicated region
      $region73: #{apply_cdrnn_forward.4} parent=71 // pred_check
        %p1021 = pneg %p320
      $region74: #{apply_cdrnn_forward.4} parent=71 // pred_check_branch
        %1023 = sbr.rel (%p1021) target = $region76
      $region75: #{apply_cdrnn_forward.4} parent=71 // pred_region
        _
      $region76: #{apply_cdrnn_forward.4} parent=71 // pred_fallthru
        _
    $region72: #{apply_cdrnn_forward.4} parent=5 // pred_fallthru
      _
    %p1024 = scmp.le.s32.totalorder 2, %s19
    // Predicated region
    $region77: #{apply_cdrnn_forward.4} parent=5 // pred_check
      %p1025 = pneg %p1024
    $region78: #{apply_cdrnn_forward.4} parent=5 // pred_check_branch
      %1027 = sbr.rel (%p1025) target = $region80
    $region79: #{apply_cdrnn_forward.4} parent=5 // pred_region
      %s1028 = ssub.s32 %s19, 2
      // Predicated region
      $region81: #{apply_cdrnn_forward.4} parent=79 // pred_check
        %p1029 = pneg %p326
      $region82: #{apply_cdrnn_forward.4} parent=79 // pred_check_branch
        %1031 = sbr.rel (%p1029) target = $region84
      $region83: #{apply_cdrnn_forward.4} parent=79 // pred_region
        %p1032 = scmp.lt.s32.totalorder %s25, 1
        %s1033 = scalar_select %p1032, %s25, 1
        %s1034 = scalar_lea.vmem %s13, %s1033
      $region84: #{apply_cdrnn_forward.4} parent=79 // pred_fallthru
        _
    $region80: #{apply_cdrnn_forward.4} parent=5 // pred_fallthru
      _
  $region6: #{apply_cdrnn_forward.4} parent=0 // loop_footer
    %s23 = sadd.s32 1, %s19
  $region7: #{apply_cdrnn_forward.4} parent=0 // loop_footer_branch
    %18 = sbr.rel target = $region3
  $region8: #{apply_cdrnn_forward.4} parent=0 // loop_exit
    _

// kernel: apply_cdrnn_forward.5
$region0: #{apply_cdrnn_forward.5}
  #allocation0 [shape = 'u32[]', space=smem, size = 0x4, offset = 0x4, fixed_abs, tag = 'smem constant byte address 0x4 - core index']
  #allocation1 [shape = 'u32[144,128]{1,0:T(1,128)}', space=vmem, size = 0x12000, scoped, tag = 'internal scratch']
  %s0 = inlined_call_operand.vmem [shape: f32[2,4,32], index: 0, kind: input, shape index: {}]
  %s1 = inlined_call_operand.vmem [shape: bf16[32,64], index: 1, kind: input, shape index: {}]
  %s2 = inlined_call_operand.vmem [shape: f32[1,64], index: 2, kind: input, shape index: {}]
  %s3 = inlined_call_operand.vmem [shape: f32[1,64], index: 3, kind: input, shape index: {}]
  %s4 = inlined_call_operand.vmem [shape: bf16[32,64], index: 4, kind: input, shape index: {}]
  %s5 = inlined_call_operand.vmem [shape: bf16[32,64], index: 5, kind: input, shape index: {}]
  %s6 = inlined_call_operand.vmem [shape: f32[1,64], index: 6, kind: input, shape index: {}]
  %s7 = inlined_call_operand.vmem [shape: f32[1,64], index: 7, kind: input, shape index: {}]
  %s8 = inlined_call_operand.vmem [shape: bf16[32,64], index: 8, kind: input, shape index: {}]
  %s9 = inlined_call_operand.vmem [shape: bf16[32,64], index: 9, kind: input, shape index: {}]
  %s10 = inlined_call_operand.vmem [shape: f32[1,64], index: 10, kind: input, shape index: {}]
  %s11 = inlined_call_operand.vmem [shape: bf16[64,128], index: 11, kind: input, shape index: {}]
  %s12 = inlined_call_operand.hbm [shape: f32[2,4,128], index: 12, kind: output, shape index: {}]
  %s13 = sld [smem:[#allocation0]]
  $region58: #{apply_cdrnn_forward.5} parent=0
    _
  %s15 = ssub.s32 1, %s13
  %s16 = scalar_select 0, %s15, %s13
  $region1: #{apply_cdrnn_forward.5} parent=0
    #allocation2 [shape = 'u8[4096]{0}', space=vmem, size = 0x1000, scoped, tag = 'output window, operand 0, single buffered']
    #allocation3 [shape = 's32[1]{0}', space=sflag, size = 0x4, scoped, tag = 'scoped memory for apply_cdrnn_forward.5']
    %17 = vsyncpa [#allocation3], 0
    // Predicated region
    $region2: #{apply_cdrnn_forward.5} parent=1 // pred_check
      _
    $region3: #{apply_cdrnn_forward.5} parent=1 // pred_check_branch
      %19 = sbr.rel (0) target = $region5
    $region4: #{apply_cdrnn_forward.5} parent=1 // pred_region
      _
    $region5: #{apply_cdrnn_forward.5} parent=1 // pred_fallthru
      _
    // Predicated region
    $region6: #{apply_cdrnn_forward.5} parent=1 // pred_check
      _
    $region7: #{apply_cdrnn_forward.5} parent=1 // pred_check_branch
      %21 = sbr.rel (0) target = $region9
    $region8: #{apply_cdrnn_forward.5} parent=1 // pred_region
      _
    $region9: #{apply_cdrnn_forward.5} parent=1 // pred_fallthru
      _
    // Predicated region
    $region10: #{apply_cdrnn_forward.5} parent=1 // pred_check
      _
    $region11: #{apply_cdrnn_forward.5} parent=1 // pred_check_branch
      %23 = sbr.rel (0) target = $region13
    $region12: #{apply_cdrnn_forward.5} parent=1 // pred_region
      _
    $region13: #{apply_cdrnn_forward.5} parent=1 // pred_fallthru
      _
    // Predicated region
    $region14: #{apply_cdrnn_forward.5} parent=1 // pred_check
      _
    $region15: #{apply_cdrnn_forward.5} parent=1 // pred_check_branch
      %25 = sbr.rel (0) target = $region17
    $region16: #{apply_cdrnn_forward.5} parent=1 // pred_region
      _
    $region17: #{apply_cdrnn_forward.5} parent=1 // pred_fallthru
      _
    // Predicated region
    $region18: #{apply_cdrnn_forward.5} parent=1 // pred_check
      _
    $region19: #{apply_cdrnn_forward.5} parent=1 // pred_check_branch
      %27 = sbr.rel (0) target = $region21
    $region20: #{apply_cdrnn_forward.5} parent=1 // pred_region
      _
    $region21: #{apply_cdrnn_forward.5} parent=1 // pred_fallthru
      _
    // Predicated region
    $region22: #{apply_cdrnn_forward.5} parent=1 // pred_check
      _
    $region23: #{apply_cdrnn_forward.5} parent=1 // pred_check_branch
      %29 = sbr.rel (0) target = $region25
    $region24: #{apply_cdrnn_forward.5} parent=1 // pred_region
      _
    $region25: #{apply_cdrnn_forward.5} parent=1 // pred_fallthru
      _
    // Predicated region
    $region26: #{apply_cdrnn_forward.5} parent=1 // pred_check
      _
    $region27: #{apply_cdrnn_forward.5} parent=1 // pred_check_branch
      %31 = sbr.rel (0) target = $region29
    $region28: #{apply_cdrnn_forward.5} parent=1 // pred_region
      _
    $region29: #{apply_cdrnn_forward.5} parent=1 // pred_fallthru
      _
    // Predicated region
    $region30: #{apply_cdrnn_forward.5} parent=1 // pred_check
      _
    $region31: #{apply_cdrnn_forward.5} parent=1 // pred_check_branch
      %33 = sbr.rel (0) target = $region33
    $region32: #{apply_cdrnn_forward.5} parent=1 // pred_region
      _
    $region33: #{apply_cdrnn_forward.5} parent=1 // pred_fallthru
      _
    // Predicated region
    $region34: #{apply_cdrnn_forward.5} parent=1 // pred_check
      _
    $region35: #{apply_cdrnn_forward.5} parent=1 // pred_check_branch
      %35 = sbr.rel (0) target = $region37
    $region36: #{apply_cdrnn_forward.5} parent=1 // pred_region
      _
    $region37: #{apply_cdrnn_forward.5} parent=1 // pred_fallthru
      _
    // Predicated region
    $region38: #{apply_cdrnn_forward.5} parent=1 // pred_check
      _
    $region39: #{apply_cdrnn_forward.5} parent=1 // pred_check_branch
      %37 = sbr.rel (0) target = $region41
    $region40: #{apply_cdrnn_forward.5} parent=1 // pred_region
      _
    $region41: #{apply_cdrnn_forward.5} parent=1 // pred_fallthru
      _
    // Predicated region
    $region42: #{apply_cdrnn_forward.5} parent=1 // pred_check
      _
    $region43: #{apply_cdrnn_forward.5} parent=1 // pred_check_branch
      %39 = sbr.rel (0) target = $region45
    $region44: #{apply_cdrnn_forward.5} parent=1 // pred_region
      _
    $region45: #{apply_cdrnn_forward.5} parent=1 // pred_fallthru
      _
    // Predicated region
    $region46: #{apply_cdrnn_forward.5} parent=1 // pred_check
      _
    $region47: #{apply_cdrnn_forward.5} parent=1 // pred_check_branch
      %41 = sbr.rel (0) target = $region49
    $region48: #{apply_cdrnn_forward.5} parent=1 // pred_region
      _
    $region49: #{apply_cdrnn_forward.5} parent=1 // pred_fallthru
      _
    %v43 = vld [vmem:[%s0] sm:$0xf]
    %v44 = vld [vmem:[%s0 + $0x4] sm:$0xf]
    %v47 = vcombine.low %v43, %v44
    %v49 = vpack.c.bf16 %v47, %v47
    %v50 = vld [vmem:[%s1] sm:$0xf]
    %v51 = vld [vmem:[%s1 + $0x4] sm:$0xf]
    %v52 = vld [vmem:[%s1 + $0x8] sm:$0xf]
    %v53 = vld [vmem:[%s1 + $0xc] sm:$0xf]
    %v58 = vunpack.c.l.b16 %v50
    %v59 = vunpack.c.l.b16 %v51
    %v60 = vunpack.c.l.b16 %v52
    %v61 = vunpack.c.l.b16 %v53
    %v62 = vpack.c.b16 %v59, %v58
    %v63 = vpack.c.b16 %v61, %v60
    %vm66 = vcmask 261120
    %v68 = vsel %vm66, %v49, 0
    %70 = vmatprep.subr.bf16.mxu0 0
    %71 = vmatpush1.bf16.msra.mxu0 0
    %72 = vmatprep.subr.bf16.mxu0 0
    %73 = vmatpush1.bf16.msra.mxu0 0
    %74 = vmatprep.subr.bf16.mxu0 0
    %75 = vmatpush1.bf16.msra.mxu0 0
    %76 = vmatprep.subr.bf16.mxu0 0
    %77 = vmatpush1.bf16.msra.mxu0 0
    %78 = vmatprep.subr.bf16.mxu0 0
    %79 = vmatpush1.bf16.msra.mxu0 0
    %80 = vmatprep.subr.bf16.mxu0 0
    %81 = vmatpush1.bf16.msra.mxu0 0
    %82 = vmatprep.subr.bf16.mxu0 0
    %83 = vmatpush1.bf16.msra.mxu0 %v63
    %84 = vmatprep.subr.bf16.mxu0 0
    %85 = vmatpush1.bf16.msra.mxu0 %v62
    %86 = vmatprep.subr.bf16.mxu0 0
    %87 = vmatpush2.bf16.msra.mxu0 0
    %88 = vmatprep.subr.bf16.mxu0 0
    %89 = vmatpush2.bf16.msra.mxu0 0
    %90 = vmatprep.subr.bf16.mxu0 0
    %91 = vmatpush2.bf16.msra.mxu0 0
    %92 = vmatprep.subr.bf16.mxu0 0
    %93 = vmatpush2.bf16.msra.mxu0 0
    %94 = vmatprep.subr.bf16.mxu0 0
    %95 = vmatpush2.bf16.msra.mxu0 0
    %96 = vmatprep.subr.bf16.mxu0 0
    %97 = vmatpush2.bf16.msra.mxu0 0
    %98 = vmatprep.subr.bf16.mxu0 0
    %99 = vmatpush2.bf16.msra.mxu0 0
    %100 = vmatprep.subr.bf16.mxu0 0
    %101 = vmatpush2.bf16.msra.mxu0 0
    %102 = vmatprep.mubr.bf16.mxu0 0
    %103 = vmatmul.mubr.bf16.gmra.mxu0 %v68
    %v104 = vpop.f32.mrf.mxu0
    %v105 = vadd.f32 0.0, %v104
    %v106 = vpop.f32.mrf.mxu0
    %v107 = vpop.f32.mrf.mxu0
    %v108 = vpop.f32.mrf.mxu0
    %109 = vdwg.mxu0
    %vm110 = vcmask 523264
    %v111 = vsel %vm110, %v105, 0.0
    %112 = vadd.xlane.f32.xlu0 %v111
    %v113 = vpop.xlane.xlu0 %112
    %v114 = vrcp.pop 64.0
    %v115 = vmul.f32 %v113, %v114
    %v116 = vsub.f32 %v105, %v115
    %v117 = vmul.f32 %v116, %v116
    %v118 = vsel %vm110, %v117, 0.0
    %119 = vadd.xlane.f32.xlu0 %v118
    %v120 = vpop.xlane.xlu0 %119
    %v121 = vmul.f32 %v120, %v114
    %v122 = vadd.f32 %v121, 1e-05
    %v123 = vrsqrt.pop %v122
    %v124 = vmul.f32 %v116, %v123
    %v125 = vld [vmem:[%s2] sm:$0x1]
    %v127 = vlaneseq
    %v128 = vshrl.u32 %v127, 7
    %v129 = vsub.s32 0, %v128
    %v130 = vrot.slane %v125, %v129
    %v132 = vmul.f32 %v124, %v130
    %v133 = vld [vmem:[%s3] sm:$0x1]
    %v135 = vlaneseq
    %v136 = vshrl.u32 %v135, 7
    %v137 = vsub.s32 0, %v136
    %v138 = vrot.slane %v133, %v137
    %v140 = vadd.f32 %v132, %v138
    %v142 = vcombine.high %v140, %v140
    %v144 = vld [vmem:[%s4] sm:$0xf]
    %v145 = vld [vmem:[%s4 + $0x4] sm:$0xf]
    %v146 = vld [vmem:[%s4 + $0x8] sm:$0xf]
    %v147 = vld [vmem:[%s4 + $0xc] sm:$0xf]
    %v148 = vld [vmem:[%s8] sm:$0xf]
    %v149 = vld [vmem:[%s8 + $0x4] sm:$0xf]
    %v150 = vld [vmem:[%s8 + $0x8] sm:$0xf]
    %v151 = vld [vmem:[%s8 + $0xc] sm:$0xf]
    %v152 = vld [vmem:[%s5] sm:$0xf]
    %v153 = vld [vmem:[%s5 + $0x4] sm:$0xf]
    %v154 = vld [vmem:[%s5 + $0x8] sm:$0xf]
    %v155 = vld [vmem:[%s5 + $0xc] sm:$0xf]
    %v156 = vld [vmem:[%s6] sm:$0x1]
    %v157 = vld [vmem:[%s7] sm:$0x1]
    %v158 = vld [vmem:[%s9] sm:$0xf]
    %v159 = vld [vmem:[%s9 + $0x4] sm:$0xf]
    %v160 = vld [vmem:[%s9 + $0x8] sm:$0xf]
    %v161 = vld [vmem:[%s9 + $0xc] sm:$0xf]
    %v162 = vld [vmem:[%s10] sm:$0x1]
    %v163 = vld [vmem:[%s11] sm:$0xf]
    %v164 = vld [vmem:[%s11 + $0x4] sm:$0xf]
    %v165 = vld [vmem:[%s11 + $0x8] sm:$0xf]
    %v166 = vld [vmem:[%s11 + $0xc] sm:$0xf]
    %v167 = vld [vmem:[%s11 + $0x10] sm:$0xf]
    %v168 = vld [vmem:[%s11 + $0x14] sm:$0xf]
    %v169 = vld [vmem:[%s11 + $0x18] sm:$0xf]
    %v170 = vld [vmem:[%s11 + $0x1c] sm:$0xf]
    %v175 = vunpack.c.l.b16 %v144
    %v176 = vunpack.c.l.b16 %v145
    %v177 = vunpack.c.l.b16 %v146
    %v178 = vunpack.c.l.b16 %v147
    %v179 = vpack.c.b16 %v176, %v175
    %v180 = vpack.c.b16 %v178, %v177
    %v184 = vsel %vm66, 0, 0
    %186 = vmatprep.subr.bf16.mxu0 0
    %187 = vmatpush1.bf16.msra.mxu0 0
    %188 = vmatprep.subr.bf16.mxu0 0
    %189 = vmatpush1.bf16.msra.mxu0 0
    %190 = vmatprep.subr.bf16.mxu0 0
    %191 = vmatpush1.bf16.msra.mxu0 0
    %192 = vmatprep.subr.bf16.mxu0 0
    %193 = vmatpush1.bf16.msra.mxu0 0
    %194 = vmatprep.subr.bf16.mxu0 0
    %195 = vmatpush1.bf16.msra.mxu0 0
    %196 = vmatprep.subr.bf16.mxu0 0
    %197 = vmatpush1.bf16.msra.mxu0 0
    %198 = vmatprep.subr.bf16.mxu0 0
    %199 = vmatpush1.bf16.msra.mxu0 %v180
    %200 = vmatprep.subr.bf16.mxu0 0
    %201 = vmatpush1.bf16.msra.mxu0 %v179
    %202 = vmatprep.subr.bf16.mxu0 0
    %203 = vmatpush2.bf16.msra.mxu0 0
    %204 = vmatprep.subr.bf16.mxu0 0
    %205 = vmatpush2.bf16.msra.mxu0 0
    %206 = vmatprep.subr.bf16.mxu0 0
    %207 = vmatpush2.bf16.msra.mxu0 0
    %208 = vmatprep.subr.bf16.mxu0 0
    %209 = vmatpush2.bf16.msra.mxu0 0
    %210 = vmatprep.subr.bf16.mxu0 0
    %211 = vmatpush2.bf16.msra.mxu0 0
    %212 = vmatprep.subr.bf16.mxu0 0
    %213 = vmatpush2.bf16.msra.mxu0 0
    %214 = vmatprep.subr.bf16.mxu0 0
    %215 = vmatpush2.bf16.msra.mxu0 0
    %216 = vmatprep.subr.bf16.mxu0 0
    %217 = vmatpush2.bf16.msra.mxu0 0
    %218 = vmatprep.mubr.bf16.mxu0 0
    %219 = vmatmul.mubr.bf16.gmra.mxu0 %v184
    %v220 = vpop.f32.mrf.mxu0
    %v221 = vadd.f32 0.0, %v220
    %v222 = vpop.f32.mrf.mxu0
    %v223 = vpop.f32.mrf.mxu0
    %v224 = vpop.f32.mrf.mxu0
    %225 = vdwg.mxu0
    %v227 = vrot.slane %v221, 1
    %v230 = vadd.f32 %v140, %v221
    %v231 = vadd.f32 %v142, %v227
    %v232 = vxor.u32 %v230, 2147483648
    %v233 = vxor.u32 %v231, 2147483648
    %v234 = vmul.f32 %v232, 1.442695
    %v235 = vpow.pop %v234
    %v236 = vmul.f32 %v233, 1.442695
    %v237 = vpow.pop %v236
    %v238 = vadd.f32 %v235, 1.0
    %v239 = vadd.f32 %v237, 1.0
    %v240 = vrcp.pop %v238
    %v241 = vmul.f32 1.0, %v240
    %v242 = vrcp.pop %v239
    %v243 = vmul.f32 1.0, %v242
    %v244 = vmul.f32 %v241, 0.0
    %v245 = vmul.f32 %v243, 0.0
    %v246 = vsub.f32 1.0, %v241
    %v247 = vsub.f32 1.0, %v243
    %vm248 = vcmp.ge.f32.partialorder %v230, 0.0
    %vm249 = vcmp.ge.f32.partialorder %v231, 0.0
    %v250 = vmul.f32 %v230, 0.01
    %v251 = vmul.f32 %v231, 0.01
    %v252 = vsel %vm248, %v230, %v250
    %v253 = vsel %vm249, %v231, %v251
    %256 = vrot.lane.b32.xlu0 %v252, 32
    %v257 = vpop.permute.xlu0 %256
    %258 = vrot.lane.b32.xlu0 %v253, 32
    %v259 = vpop.permute.xlu0 %258
    %v262 = vmul.f32 %v246, %v257
    %v263 = vmul.f32 %v247, %v259
    %v264 = vadd.f32 %v244, %v262
    %v265 = vadd.f32 %v245, %v263
    %v266 = vpack.c.bf16 %v264, %v264
    %v267 = vpack.c.bf16 %v265, %v265
    %v270 = vunpack.c.l.b16 %v266
    %v271 = vunpack.c.l.b16 %v267
    %v272 = vrot.slane %v271, 7
    %vm273 = vcmask 1041409
    %v274 = vsel %vm273, %v272, %v270
    %v275 = vpack.c.b16 %v274, %v274
    %276 = vrot.lane.b32.xlu0 %v275, 96
    %v277 = vpop.permute.xlu0 %276
    %v282 = vunpack.c.l.b16 %v152
    %v283 = vunpack.c.l.b16 %v153
    %v284 = vunpack.c.l.b16 %v154
    %v285 = vunpack.c.l.b16 %v155
    %v286 = vpack.c.b16 %v283, %v282
    %v287 = vpack.c.b16 %v285, %v284
    %v291 = vsel %vm66, %v277, 0
    %293 = vmatprep.subr.bf16.mxu0 0
    %294 = vmatpush1.bf16.msra.mxu0 0
    %295 = vmatprep.subr.bf16.mxu0 0
    %296 = vmatpush1.bf16.msra.mxu0 0
    %297 = vmatprep.subr.bf16.mxu0 0
    %298 = vmatpush1.bf16.msra.mxu0 0
    %299 = vmatprep.subr.bf16.mxu0 0
    %300 = vmatpush1.bf16.msra.mxu0 0
    %301 = vmatprep.subr.bf16.mxu0 0
    %302 = vmatpush1.bf16.msra.mxu0 0
    %303 = vmatprep.subr.bf16.mxu0 0
    %304 = vmatpush1.bf16.msra.mxu0 0
    %305 = vmatprep.subr.bf16.mxu0 0
    %306 = vmatpush1.bf16.msra.mxu0 %v287
    %307 = vmatprep.subr.bf16.mxu0 0
    %308 = vmatpush1.bf16.msra.mxu0 %v286
    %309 = vmatprep.subr.bf16.mxu0 0
    %310 = vmatpush2.bf16.msra.mxu0 0
    %311 = vmatprep.subr.bf16.mxu0 0
    %312 = vmatpush2.bf16.msra.mxu0 0
    %313 = vmatprep.subr.bf16.mxu0 0
    %314 = vmatpush2.bf16.msra.mxu0 0
    %315 = vmatprep.subr.bf16.mxu0 0
    %316 = vmatpush2.bf16.msra.mxu0 0
    %317 = vmatprep.subr.bf16.mxu0 0
    %318 = vmatpush2.bf16.msra.mxu0 0
    %319 = vmatprep.subr.bf16.mxu0 0
    %320 = vmatpush2.bf16.msra.mxu0 0
    %321 = vmatprep.subr.bf16.mxu0 0
    %322 = vmatpush2.bf16.msra.mxu0 0
    %323 = vmatprep.subr.bf16.mxu0 0
    %324 = vmatpush2.bf16.msra.mxu0 0
    %325 = vmatprep.mubr.bf16.mxu0 0
    %326 = vmatmul.mubr.bf16.gmra.mxu0 %v291
    %v327 = vpop.f32.mrf.mxu0
    %v328 = vadd.f32 0.0, %v327
    %v329 = vpop.f32.mrf.mxu0
    %v330 = vpop.f32.mrf.mxu0
    %v331 = vpop.f32.mrf.mxu0
    %332 = vdwg.mxu0
    %vm333 = vcmask 517120
    %v334 = vsel %vm333, %v328, 0.0
    %335 = vadd.xlane.f32.xlu0 %v334
    %v336 = vpop.xlane.xlu0 %335
    %v337 = vmul.f32 %v336, %v114
    %v338 = vsub.f32 %v328, %v337
    %v339 = vmul.f32 %v338, %v338
    %v340 = vsel %vm333, %v339, 0.0
    %341 = vadd.xlane.f32.xlu0 %v340
    %v342 = vpop.xlane.xlu0 %341
    %v343 = vmul.f32 %v342, %v114
    %v344 = vadd.f32 %v343, 1e-05
    %v345 = vrsqrt.pop %v344
    %v346 = vmul.f32 %v338, %v345
    %v348 = vlaneseq
    %v349 = vshrl.u32 %v348, 7
    %v350 = vsub.s32 0, %v349
    %v351 = vrot.slane %v156, %v350
    %v353 = vmul.f32 %v346, %v351
    %v355 = vlaneseq
    %v356 = vshrl.u32 %v355, 7
    %v357 = vsub.s32 0, %v356
    %v358 = vrot.slane %v157, %v357
    %v360 = vadd.f32 %v353, %v358
    %v365 = vunpack.c.l.b16 %v148
    %v366 = vunpack.c.l.b16 %v149
    %v367 = vunpack.c.l.b16 %v150
    %v368 = vunpack.c.l.b16 %v151
    %v369 = vpack.c.b16 %v366, %v365
    %v370 = vpack.c.b16 %v368, %v367
    %373 = vmatprep.subr.bf16.mxu0 0
    %374 = vmatpush1.bf16.msra.mxu0 0
    %375 = vmatprep.subr.bf16.mxu0 0
    %376 = vmatpush1.bf16.msra.mxu0 0
    %377 = vmatprep.subr.bf16.mxu0 0
    %378 = vmatpush1.bf16.msra.mxu0 0
    %379 = vmatprep.subr.bf16.mxu0 0
    %380 = vmatpush1.bf16.msra.mxu0 0
    %381 = vmatprep.subr.bf16.mxu0 0
    %382 = vmatpush1.bf16.msra.mxu0 0
    %383 = vmatprep.subr.bf16.mxu0 0
    %384 = vmatpush1.bf16.msra.mxu0 0
    %385 = vmatprep.subr.bf16.mxu0 0
    %386 = vmatpush1.bf16.msra.mxu0 %v370
    %387 = vmatprep.subr.bf16.mxu0 0
    %388 = vmatpush1.bf16.msra.mxu0 %v369
    %389 = vmatprep.subr.bf16.mxu0 0
    %390 = vmatpush2.bf16.msra.mxu0 0
    %391 = vmatprep.subr.bf16.mxu0 0
    %392 = vmatpush2.bf16.msra.mxu0 0
    %393 = vmatprep.subr.bf16.mxu0 0
    %394 = vmatpush2.bf16.msra.mxu0 0
    %395 = vmatprep.subr.bf16.mxu0 0
    %396 = vmatpush2.bf16.msra.mxu0 0
    %397 = vmatprep.subr.bf16.mxu0 0
    %398 = vmatpush2.bf16.msra.mxu0 0
    %399 = vmatprep.subr.bf16.mxu0 0
    %400 = vmatpush2.bf16.msra.mxu0 0
    %401 = vmatprep.subr.bf16.mxu0 0
    %402 = vmatpush2.bf16.msra.mxu0 0
    %403 = vmatprep.subr.bf16.mxu0 0
    %404 = vmatpush2.bf16.msra.mxu0 0
    %405 = vmatprep.mubr.bf16.mxu0 0
    %406 = vmatmul.mubr.bf16.gmra.mxu0 %v184
    %v407 = vpop.f32.mrf.mxu0
    %v408 = vadd.f32 0.0, %v407
    %v409 = vpop.f32.mrf.mxu0
    %v410 = vpop.f32.mrf.mxu0
    %v411 = vpop.f32.mrf.mxu0
    %412 = vdwg.mxu0
    %v413 = vadd.f32 %v360, %v408
    %v414 = vxor.u32 %v413, 2147483648
    %v415 = vmul.f32 %v414, 1.442695
    %v416 = vpow.pop %v415
    %v417 = vadd.f32 %v416, 1.0
    %v418 = vrcp.pop %v417
    %v419 = vmul.f32 1.0, %v418
    %v420 = vmul.f32 %v419, 0.0
    %v421 = vsub.f32 1.0, %v419
    %vm422 = vcmp.ge.f32.partialorder %v413, 0.0
    %v423 = vmul.f32 %v413, 0.01
    %v424 = vsel %vm422, %v413, %v423
    %426 = vrot.lane.b32.xlu0 %v424, 32
    %v427 = vpop.permute.xlu0 %426
    %v429 = vmul.f32 %v421, %v427
    %v430 = vadd.f32 %v420, %v429
    %v431 = vpack.c.bf16 %v430, %v430
    %v433 = vlaneseq
    %v434 = vshrl.u32 %v433, 7
    %v435 = vsub.s32 0, %v434
    %v436 = vrot.slane %v162, %v435
    %439 = vrot.lane.b32.xlu0 %v431, 96
    %v440 = vpop.permute.xlu0 %439
    %v445 = vunpack.c.l.b16 %v158
    %v446 = vunpack.c.l.b16 %v159
    %v447 = vunpack.c.l.b16 %v160
    %v448 = vunpack.c.l.b16 %v161
    %v449 = vpack.c.b16 %v446, %v445
    %v450 = vpack.c.b16 %v448, %v447
    %v454 = vsel %vm66, %v440, 0
    %456 = vmatprep.subr.bf16.mxu0 0
    %457 = vmatpush1.bf16.msra.mxu0 0
    %458 = vmatprep.subr.bf16.mxu0 0
    %459 = vmatpush1.bf16.msra.mxu0 0
    %460 = vmatprep.subr.bf16.mxu0 0
    %461 = vmatpush1.bf16.msra.mxu0 0
    %462 = vmatprep.subr.bf16.mxu0 0
    %463 = vmatpush1.bf16.msra.mxu0 0
    %464 = vmatprep.subr.bf16.mxu0 0
    %465 = vmatpush1.bf16.msra.mxu0 0
    %466 = vmatprep.subr.bf16.mxu0 0
    %467 = vmatpush1.bf16.msra.mxu0 0
    %468 = vmatprep.subr.bf16.mxu0 0
    %469 = vmatpush1.bf16.msra.mxu0 %v450
    %470 = vmatprep.subr.bf16.mxu0 0
    %471 = vmatpush1.bf16.msra.mxu0 %v449
    %472 = vmatprep.subr.bf16.mxu0 0
    %473 = vmatpush2.bf16.msra.mxu0 0
    %474 = vmatprep.subr.bf16.mxu0 0
    %475 = vmatpush2.bf16.msra.mxu0 0
    %476 = vmatprep.subr.bf16.mxu0 0
    %477 = vmatpush2.bf16.msra.mxu0 0
    %478 = vmatprep.subr.bf16.mxu0 0
    %479 = vmatpush2.bf16.msra.mxu0 0
    %480 = vmatprep.subr.bf16.mxu0 0
    %481 = vmatpush2.bf16.msra.mxu0 0
    %482 = vmatprep.subr.bf16.mxu0 0
    %483 = vmatpush2.bf16.msra.mxu0 0
    %484 = vmatprep.subr.bf16.mxu0 0
    %485 = vmatpush2.bf16.msra.mxu0 0
    %486 = vmatprep.subr.bf16.mxu0 0
    %487 = vmatpush2.bf16.msra.mxu0 0
    %488 = vmatprep.mubr.bf16.mxu0 0
    %489 = vmatmul.mubr.bf16.gmra.mxu0 %v454
    %v490 = vpop.f32.mrf.mxu0
    %v491 = vadd.f32 %v436, %v490
    %v492 = vpop.f32.mrf.mxu0
    %v493 = vpop.f32.mrf.mxu0
    %v494 = vpop.f32.mrf.mxu0
    %495 = vdwg.mxu0
    %vm496 = vcmp.ge.f32.partialorder %v491, 0.0
    %v497 = vmul.f32 %v491, 0.01
    %v498 = vsel %vm496, %v491, %v497
    %v499 = vpack.c.bf16 %v498, %v498
    %v508 = vunpack.c.l.b16 %v163
    %v509 = vunpack.c.l.b16 %v164
    %v510 = vunpack.c.l.b16 %v165
    %v511 = vunpack.c.l.b16 %v166
    %v512 = vunpack.c.l.b16 %v167
    %v513 = vunpack.c.l.b16 %v168
    %v514 = vunpack.c.l.b16 %v169
    %v515 = vunpack.c.l.b16 %v170
    %v516 = vpack.c.b16 %v509, %v508
    %v517 = vpack.c.b16 %v511, %v510
    %v518 = vpack.c.b16 %v513, %v512
    %v519 = vpack.c.b16 %v515, %v514
    %v525 = vsel %vm110, %v499, 0
    %527 = vmatprep.subr.bf16.mxu0 0
    %528 = vmatpush1.bf16.msra.mxu0 0
    %529 = vmatprep.subr.bf16.mxu0 0
    %530 = vmatpush1.bf16.msra.mxu0 0
    %531 = vmatprep.subr.bf16.mxu0 0
    %532 = vmatpush1.bf16.msra.mxu0 0
    %533 = vmatprep.subr.bf16.mxu0 0
    %534 = vmatpush1.bf16.msra.mxu0 0
    %535 = vmatprep.subr.bf16.mxu0 0
    %536 = vmatpush1.bf16.msra.mxu0 %v519
    %537 = vmatprep.subr.bf16.mxu0 0
    %538 = vmatpush1.bf16.msra.mxu0 %v518
    %539 = vmatprep.subr.bf16.mxu0 0
    %540 = vmatpush1.bf16.msra.mxu0 %v517
    %541 = vmatprep.subr.bf16.mxu0 0
    %542 = vmatpush1.bf16.msra.mxu0 %v516
    %543 = vmatprep.subr.bf16.mxu0 0
    %544 = vmatpush2.bf16.msra.mxu0 0
    %545 = vmatprep.subr.bf16.mxu0 0
    %546 = vmatpush2.bf16.msra.mxu0 0
    %547 = vmatprep.subr.bf16.mxu0 0
    %548 = vmatpush2.bf16.msra.mxu0 0
    %549 = vmatprep.subr.bf16.mxu0 0
    %550 = vmatpush2.bf16.msra.mxu0 0
    %551 = vmatprep.subr.bf16.mxu0 0
    %552 = vmatpush2.bf16.msra.mxu0 0
    %553 = vmatprep.subr.bf16.mxu0 0
    %554 = vmatpush2.bf16.msra.mxu0 0
    %555 = vmatprep.subr.bf16.mxu0 0
    %556 = vmatpush2.bf16.msra.mxu0 0
    %557 = vmatprep.subr.bf16.mxu0 0
    %558 = vmatpush2.bf16.msra.mxu0 0
    %559 = vmatprep.mubr.bf16.mxu0 0
    %560 = vmatmul.mubr.bf16.gmra.mxu0 %v525
    %v561 = vpop.f32.mrf.mxu0
    %v562 = vadd.f32 0.0, %v561
    %v563 = vpop.f32.mrf.mxu0
    %v564 = vpop.f32.mrf.mxu0
    %v565 = vpop.f32.mrf.mxu0
    %566 = vdwg.mxu0
    %v569 = vunpack.c.l.s4 1966171168
    %v570 = vunpack.c.0.s8 %v569
    %v571 = vlaneseq
    %v572 = vshrl.u32 %v571, 7
    %v573 = vsub.s32 %v570, %v572
    %v574 = vrot.slane %v562, %v573
    %v575 = vcombine.high %v574, %v574
    %v577 = vunpack.c.l.s4 1966171168
    %v578 = vunpack.c.0.s8 %v577
    %v579 = vlaneseq
    %v580 = vshrl.u32 %v579, 7
    %v581 = vsub.s32 %v578, %v580
    %v582 = vrot.slane %v574, %v581
    %v584 = vunpack.c.l.s4 1966171168
    %v585 = vunpack.c.0.s8 %v584
    %v586 = vlaneseq
    %v587 = vshrl.u32 %v586, 7
    %v588 = vsub.s32 %v585, %v587
    %v589 = vrot.slane %v575, %v588
    %592 = vst [vmem:[#allocation2] sm:$0x1] %v582
    %593 = vst [vmem:[#allocation2 + $0x4] sm:$0x1] %v589
    %594 = vmatprep.subr.bf16.mxu0 0
    %595 = vmatpush1.bf16.msra.mxu0 0
    %596 = vmatprep.subr.bf16.mxu0 0
    %597 = vmatpush1.bf16.msra.mxu0 0
    %598 = vmatprep.subr.bf16.mxu0 0
    %599 = vmatpush1.bf16.msra.mxu0 0
    %600 = vmatprep.subr.bf16.mxu0 0
    %601 = vmatpush1.bf16.msra.mxu0 0
    %602 = vmatprep.subr.bf16.mxu0 0
    %603 = vmatpush1.bf16.msra.mxu0 0
    %604 = vmatprep.subr.bf16.mxu0 0
    %605 = vmatpush1.bf16.msra.mxu0 0
    %606 = vmatprep.subr.bf16.mxu0 0
    %607 = vmatpush1.bf16.msra.mxu0 %v180
    %608 = vmatprep.subr.bf16.mxu0 0
    %609 = vmatpush1.bf16.msra.mxu0 %v179
    %610 = vmatprep.subr.bf16.mxu0 0
    %611 = vmatpush2.bf16.msra.mxu0 0
    %612 = vmatprep.subr.bf16.mxu0 0
    %613 = vmatpush2.bf16.msra.mxu0 0
    %614 = vmatprep.subr.bf16.mxu0 0
    %615 = vmatpush2.bf16.msra.mxu0 0
    %616 = vmatprep.subr.bf16.mxu0 0
    %617 = vmatpush2.bf16.msra.mxu0 0
    %618 = vmatprep.subr.bf16.mxu0 0
    %619 = vmatpush2.bf16.msra.mxu0 0
    %620 = vmatprep.subr.bf16.mxu0 0
    %621 = vmatpush2.bf16.msra.mxu0 0
    %622 = vmatprep.subr.bf16.mxu0 0
    %623 = vmatpush2.bf16.msra.mxu0 0
    %624 = vmatprep.subr.bf16.mxu0 0
    %625 = vmatpush2.bf16.msra.mxu0 0
    %626 = vmatprep.mubr.bf16.mxu0 0
    %627 = vmatmul.mubr.bf16.gmra.mxu0 %v291
    %v628 = vpop.f32.mrf.mxu0
    %v629 = vadd.f32 0.0, %v628
    %v630 = vpop.f32.mrf.mxu0
    %v631 = vpop.f32.mrf.mxu0
    %v632 = vpop.f32.mrf.mxu0
    %633 = vdwg.mxu0
    %v635 = vrot.slane %v629, 7
    %v638 = vadd.f32 %v140, %v635
    %v639 = vadd.f32 %v142, %v629
    %v640 = vxor.u32 %v638, 2147483648
    %v641 = vxor.u32 %v639, 2147483648
    %v642 = vmul.f32 %v640, 1.442695
    %v643 = vpow.pop %v642
    %v644 = vmul.f32 %v641, 1.442695
    %v645 = vpow.pop %v644
    %v646 = vadd.f32 %v643, 1.0
    %v647 = vadd.f32 %v645, 1.0
    %v648 = vrcp.pop %v646
    %v649 = vmul.f32 1.0, %v648
    %v650 = vrcp.pop %v647
    %v651 = vmul.f32 1.0, %v650
    %v654 = vrot.slane %v264, 7
    %v655 = vrot.slane %v265, 7
    %v658 = vmul.f32 %v649, %v654
    %v659 = vmul.f32 %v651, %v655
    %v660 = vsub.f32 1.0, %v649
    %v661 = vsub.f32 1.0, %v651
    %vm662 = vcmp.ge.f32.partialorder %v638, 0.0
    %vm663 = vcmp.ge.f32.partialorder %v639, 0.0
    %v664 = vmul.f32 %v638, 0.01
    %v665 = vmul.f32 %v639, 0.01
    %v666 = vsel %vm662, %v638, %v664
    %v667 = vsel %vm663, %v639, %v665
    %670 = vrot.lane.b32.xlu0 %v666, 32
    %v671 = vpop.permute.xlu0 %670
    %672 = vrot.lane.b32.xlu0 %v667, 32
    %v673 = vpop.permute.xlu0 %672
    %v676 = vmul.f32 %v660, %v671
    %v677 = vmul.f32 %v661, %v673
    %v678 = vadd.f32 %v658, %v676
    %v679 = vadd.f32 %v659, %v677
    %v680 = vpack.c.bf16 %v678, %v678
    %v681 = vpack.c.bf16 %v679, %v679
    %v684 = vunpack.c.l.b16 %v680
    %v685 = vunpack.c.l.b16 %v681
    %v686 = vrot.slane %v684, 1
    %v687 = vsel %vm273, %v685, %v686
    %v688 = vpack.c.b16 %v687, %v687
    %689 = vrot.lane.b32.xlu0 %v688, 96
    %v690 = vpop.permute.xlu0 %689
    %v692 = vsel %vm66, %v690, 0
    %694 = vmatprep.subr.bf16.mxu0 0
    %695 = vmatpush1.bf16.msra.mxu0 0
    %696 = vmatprep.subr.bf16.mxu0 0
    %697 = vmatpush1.bf16.msra.mxu0 0
    %698 = vmatprep.subr.bf16.mxu0 0
    %699 = vmatpush1.bf16.msra.mxu0 0
    %700 = vmatprep.subr.bf16.mxu0 0
    %701 = vmatpush1.bf16.msra.mxu0 0
    %702 = vmatprep.subr.bf16.mxu0 0
    %703 = vmatpush1.bf16.msra.mxu0 0
    %704 = vmatprep.subr.bf16.mxu0 0
    %705 = vmatpush1.bf16.msra.mxu0 0
    %706 = vmatprep.subr.bf16.mxu0 0
    %707 = vmatpush1.bf16.msra.mxu0 %v287
    %708 = vmatprep.subr.bf16.mxu0 0
    %709 = vmatpush1.bf16.msra.mxu0 %v286
    %710 = vmatprep.subr.bf16.mxu0 0
    %711 = vmatpush2.bf16.msra.mxu0 0
    %712 = vmatprep.subr.bf16.mxu0 0
    %713 = vmatpush2.bf16.msra.mxu0 0
    %714 = vmatprep.subr.bf16.mxu0 0
    %715 = vmatpush2.bf16.msra.mxu0 0
    %716 = vmatprep.subr.bf16.mxu0 0
    %717 = vmatpush2.bf16.msra.mxu0 0
    %718 = vmatprep.subr.bf16.mxu0 0
    %719 = vmatpush2.bf16.msra.mxu0 0
    %720 = vmatprep.subr.bf16.mxu0 0
    %721 = vmatpush2.bf16.msra.mxu0 0
    %722 = vmatprep.subr.bf16.mxu0 0
    %723 = vmatpush2.bf16.msra.mxu0 0
    %724 = vmatprep.subr.bf16.mxu0 0
    %725 = vmatpush2.bf16.msra.mxu0 0
    %726 = vmatprep.mubr.bf16.mxu0 0
    %727 = vmatmul.mubr.bf16.gmra.mxu0 %v692
    %v728 = vpop.f32.mrf.mxu0
    %v729 = vadd.f32 0.0, %v728
    %v730 = vpop.f32.mrf.mxu0
    %v731 = vpop.f32.mrf.mxu0
    %v732 = vpop.f32.mrf.mxu0
    %733 = vdwg.mxu0
    %v734 = vsel %vm333, %v729, 0.0
    %735 = vadd.xlane.f32.xlu0 %v734
    %v736 = vpop.xlane.xlu0 %735
    %v737 = vmul.f32 %v736, %v114
    %v738 = vsub.f32 %v729, %v737
    %v739 = vmul.f32 %v738, %v738
    %v740 = vsel %vm333, %v739, 0.0
    %741 = vadd.xlane.f32.xlu0 %v740
    %v742 = vpop.xlane.xlu0 %741
    %v743 = vmul.f32 %v742, %v114
    %v744 = vadd.f32 %v743, 1e-05
    %v745 = vrsqrt.pop %v744
    %v746 = vmul.f32 %v738, %v745
    %v747 = vmul.f32 %v746, %v351
    %v748 = vadd.f32 %v747, %v358
    %749 = vmatprep.subr.bf16.mxu0 0
    %750 = vmatpush1.bf16.msra.mxu0 0
    %751 = vmatprep.subr.bf16.mxu0 0
    %752 = vmatpush1.bf16.msra.mxu0 0
    %753 = vmatprep.subr.bf16.mxu0 0
    %754 = vmatpush1.bf16.msra.mxu0 0
    %755 = vmatprep.subr.bf16.mxu0 0
    %756 = vmatpush1.bf16.msra.mxu0 0
    %757 = vmatprep.subr.bf16.mxu0 0
    %758 = vmatpush1.bf16.msra.mxu0 0
    %759 = vmatprep.subr.bf16.mxu0 0
    %760 = vmatpush1.bf16.msra.mxu0 0
    %761 = vmatprep.subr.bf16.mxu0 0
    %762 = vmatpush1.bf16.msra.mxu0 %v370
    %763 = vmatprep.subr.bf16.mxu0 0
    %764 = vmatpush1.bf16.msra.mxu0 %v369
    %765 = vmatprep.subr.bf16.mxu0 0
    %766 = vmatpush2.bf16.msra.mxu0 0
    %767 = vmatprep.subr.bf16.mxu0 0
    %768 = vmatpush2.bf16.msra.mxu0 0
    %769 = vmatprep.subr.bf16.mxu0 0
    %770 = vmatpush2.bf16.msra.mxu0 0
    %771 = vmatprep.subr.bf16.mxu0 0
    %772 = vmatpush2.bf16.msra.mxu0 0
    %773 = vmatprep.subr.bf16.mxu0 0
    %774 = vmatpush2.bf16.msra.mxu0 0
    %775 = vmatprep.subr.bf16.mxu0 0
    %776 = vmatpush2.bf16.msra.mxu0 0
    %777 = vmatprep.subr.bf16.mxu0 0
    %778 = vmatpush2.bf16.msra.mxu0 0
    %779 = vmatprep.subr.bf16.mxu0 0
    %780 = vmatpush2.bf16.msra.mxu0 0
    %781 = vmatprep.mubr.bf16.mxu0 0
    %782 = vmatmul.mubr.bf16.gmra.mxu0 %v454
    %v783 = vpop.f32.mrf.mxu0
    %v784 = vadd.f32 0.0, %v783
    %v785 = vpop.f32.mrf.mxu0
    %v786 = vpop.f32.mrf.mxu0
    %v787 = vpop.f32.mrf.mxu0
    %788 = vdwg.mxu0
    %v789 = vadd.f32 %v748, %v784
    %v790 = vxor.u32 %v789, 2147483648
    %v791 = vmul.f32 %v790, 1.442695
    %v792 = vpow.pop %v791
    %v793 = vadd.f32 %v792, 1.0
    %v794 = vrcp.pop %v793
    %v795 = vmul.f32 1.0, %v794
    %v796 = vmul.f32 %v795, %v430
    %v797 = vsub.f32 1.0, %v795
    %vm798 = vcmp.ge.f32.partialorder %v789, 0.0
    %v799 = vmul.f32 %v789, 0.01
    %v800 = vsel %vm798, %v789, %v799
    %802 = vrot.lane.b32.xlu0 %v800, 32
    %v803 = vpop.permute.xlu0 %802
    %v805 = vmul.f32 %v797, %v803
    %v806 = vadd.f32 %v796, %v805
    %v807 = vpack.c.bf16 %v806, %v806
    %809 = vrot.lane.b32.xlu0 %v807, 96
    %v810 = vpop.permute.xlu0 %809
    %v812 = vsel %vm66, %v810, 0
    %814 = vmatprep.subr.bf16.mxu0 0
    %815 = vmatpush1.bf16.msra.mxu0 0
    %816 = vmatprep.subr.bf16.mxu0 0
    %817 = vmatpush1.bf16.msra.mxu0 0
    %818 = vmatprep.subr.bf16.mxu0 0
    %819 = vmatpush1.bf16.msra.mxu0 0
    %820 = vmatprep.subr.bf16.mxu0 0
    %821 = vmatpush1.bf16.msra.mxu0 0
    %822 = vmatprep.subr.bf16.mxu0 0
    %823 = vmatpush1.bf16.msra.mxu0 0
    %824 = vmatprep.subr.bf16.mxu0 0
    %825 = vmatpush1.bf16.msra.mxu0 0
    %826 = vmatprep.subr.bf16.mxu0 0
    %827 = vmatpush1.bf16.msra.mxu0 %v450
    %828 = vmatprep.subr.bf16.mxu0 0
    %829 = vmatpush1.bf16.msra.mxu0 %v449
    %830 = vmatprep.subr.bf16.mxu0 0
    %831 = vmatpush2.bf16.msra.mxu0 0
    %832 = vmatprep.subr.bf16.mxu0 0
    %833 = vmatpush2.bf16.msra.mxu0 0
    %834 = vmatprep.subr.bf16.mxu0 0
    %835 = vmatpush2.bf16.msra.mxu0 0
    %836 = vmatprep.subr.bf16.mxu0 0
    %837 = vmatpush2.bf16.msra.mxu0 0
    %838 = vmatprep.subr.bf16.mxu0 0
    %839 = vmatpush2.bf16.msra.mxu0 0
    %840 = vmatprep.subr.bf16.mxu0 0
    %841 = vmatpush2.bf16.msra.mxu0 0
    %842 = vmatprep.subr.bf16.mxu0 0
    %843 = vmatpush2.bf16.msra.mxu0 0
    %844 = vmatprep.subr.bf16.mxu0 0
    %845 = vmatpush2.bf16.msra.mxu0 0
    %846 = vmatprep.mubr.bf16.mxu0 0
    %847 = vmatmul.mubr.bf16.gmra.mxu0 %v812
    %v848 = vpop.f32.mrf.mxu0
    %v849 = vadd.f32 %v436, %v848
    %v850 = vpop.f32.mrf.mxu0
    %v851 = vpop.f32.mrf.mxu0
    %v852 = vpop.f32.mrf.mxu0
    %853 = vdwg.mxu0
    %vm854 = vcmp.ge.f32.partialorder %v849, 0.0
    %v855 = vmul.f32 %v849, 0.01
    %v856 = vsel %vm854, %v849, %v855
    %v857 = vpack.c.bf16 %v856, %v856
    %v859 = vsel %vm110, %v857, 0
    %861 = vmatprep.subr.bf16.mxu0 0
    %862 = vmatpush1.bf16.msra.mxu0 0
    %863 = vmatprep.subr.bf16.mxu0 0
    %864 = vmatpush1.bf16.msra.mxu0 0
    %865 = vmatprep.subr.bf16.mxu0 0
    %866 = vmatpush1.bf16.msra.mxu0 0
    %867 = vmatprep.subr.bf16.mxu0 0
    %868 = vmatpush1.bf16.msra.mxu0 0
    %869 = vmatprep.subr.bf16.mxu0 0
    %870 = vmatpush1.bf16.msra.mxu0 %v519
    %871 = vmatprep.subr.bf16.mxu0 0
    %872 = vmatpush1.bf16.msra.mxu0 %v518
    %873 = vmatprep.subr.bf16.mxu0 0
    %874 = vmatpush1.bf16.msra.mxu0 %v517
    %875 = vmatprep.subr.bf16.mxu0 0
    %876 = vmatpush1.bf16.msra.mxu0 %v516
    %877 = vmatprep.subr.bf16.mxu0 0
    %878 = vmatpush2.bf16.msra.mxu0 0
    %879 = vmatprep.subr.bf16.mxu0 0
    %880 = vmatpush2.bf16.msra.mxu0 0
    %881 = vmatprep.subr.bf16.mxu0 0
    %882 = vmatpush2.bf16.msra.mxu0 0
    %883 = vmatprep.subr.bf16.mxu0 0
    %884 = vmatpush2.bf16.msra.mxu0 0
    %885 = vmatprep.subr.bf16.mxu0 0
    %886 = vmatpush2.bf16.msra.mxu0 0
    %887 = vmatprep.subr.bf16.mxu0 0
    %888 = vmatpush2.bf16.msra.mxu0 0
    %889 = vmatprep.subr.bf16.mxu0 0
    %890 = vmatpush2.bf16.msra.mxu0 0
    %891 = vmatprep.subr.bf16.mxu0 0
    %892 = vmatpush2.bf16.msra.mxu0 0
    %893 = vmatprep.mubr.bf16.mxu0 0
    %894 = vmatmul.mubr.bf16.gmra.mxu0 %v859
    %v895 = vpop.f32.mrf.mxu0
    %v896 = vadd.f32 0.0, %v895
    %v897 = vpop.f32.mrf.mxu0
    %v898 = vpop.f32.mrf.mxu0
    %v899 = vpop.f32.mrf.mxu0
    %900 = vdwg.mxu0
    %v903 = vunpack.c.l.s4 1966171168
    %v904 = vunpack.c.0.s8 %v903
    %v905 = vlaneseq
    %v906 = vshrl.u32 %v905, 7
    %v907 = vsub.s32 %v904, %v906
    %v908 = vrot.slane %v896, %v907
    %v909 = vcombine.high %v908, %v908
    %v911 = vunpack.c.l.s4 1966171168
    %v912 = vunpack.c.0.s8 %v911
    %v913 = vlaneseq
    %v914 = vshrl.u32 %v913, 7
    %v915 = vsub.s32 %v912, %v914
    %v916 = vrot.slane %v908, %v915
    %v918 = vunpack.c.l.s4 1966171168
    %v919 = vunpack.c.0.s8 %v918
    %v920 = vlaneseq
    %v921 = vshrl.u32 %v920, 7
    %v922 = vsub.s32 %v919, %v921
    %v923 = vrot.slane %v909, %v922
    %926 = vst [vmem:[#allocation2 + $0x1] sm:$0x1] %v916
    %927 = vst [vmem:[#allocation2 + $0x5] sm:$0x1] %v923
    %928 = vmatprep.subr.bf16.mxu0 0
    %929 = vmatpush1.bf16.msra.mxu0 0
    %930 = vmatprep.subr.bf16.mxu0 0
    %931 = vmatpush1.bf16.msra.mxu0 0
    %932 = vmatprep.subr.bf16.mxu0 0
    %933 = vmatpush1.bf16.msra.mxu0 0
    %934 = vmatprep.subr.bf16.mxu0 0
    %935 = vmatpush1.bf16.msra.mxu0 0
    %936 = vmatprep.subr.bf16.mxu0 0
    %937 = vmatpush1.bf16.msra.mxu0 0
    %938 = vmatprep.subr.bf16.mxu0 0
    %939 = vmatpush1.bf16.msra.mxu0 0
    %940 = vmatprep.subr.bf16.mxu0 0
    %941 = vmatpush1.bf16.msra.mxu0 %v180
    %942 = vmatprep.subr.bf16.mxu0 0
    %943 = vmatpush1.bf16.msra.mxu0 %v179
    %944 = vmatprep.subr.bf16.mxu0 0
    %945 = vmatpush2.bf16.msra.mxu0 0
    %946 = vmatprep.subr.bf16.mxu0 0
    %947 = vmatpush2.bf16.msra.mxu0 0
    %948 = vmatprep.subr.bf16.mxu0 0
    %949 = vmatpush2.bf16.msra.mxu0 0
    %950 = vmatprep.subr.bf16.mxu0 0
    %951 = vmatpush2.bf16.msra.mxu0 0
    %952 = vmatprep.subr.bf16.mxu0 0
    %953 = vmatpush2.bf16.msra.mxu0 0
    %954 = vmatprep.subr.bf16.mxu0 0
    %955 = vmatpush2.bf16.msra.mxu0 0
    %956 = vmatprep.subr.bf16.mxu0 0
    %957 = vmatpush2.bf16.msra.mxu0 0
    %958 = vmatprep.subr.bf16.mxu0 0
    %959 = vmatpush2.bf16.msra.mxu0 0
    %960 = vmatprep.mubr.bf16.mxu0 0
    %961 = vmatmul.mubr.bf16.gmra.mxu0 %v692
    %v962 = vpop.f32.mrf.mxu0
    %v963 = vadd.f32 0.0, %v962
    %v964 = vpop.f32.mrf.mxu0
    %v965 = vpop.f32.mrf.mxu0
    %v966 = vpop.f32.mrf.mxu0
    %967 = vdwg.mxu0
    %v969 = vrot.slane %v963, 6
    %v970 = vrot.slane %v963, 7
    %v973 = vadd.f32 %v140, %v969
    %v974 = vadd.f32 %v142, %v970
    %v975 = vxor.u32 %v973, 2147483648
    %v976 = vxor.u32 %v974, 2147483648
    %v977 = vmul.f32 %v975, 1.442695
    %v978 = vpow.pop %v977
    %v979 = vmul.f32 %v976, 1.442695
    %v980 = vpow.pop %v979
    %v981 = vadd.f32 %v978, 1.0
    %v982 = vadd.f32 %v980, 1.0
    %v983 = vrcp.pop %v981
    %v984 = vmul.f32 1.0, %v983
    %v985 = vrcp.pop %v982
    %v986 = vmul.f32 1.0, %v985
    %v989 = vrot.slane %v678, 7
    %v990 = vrot.slane %v679, 7
    %v993 = vmul.f32 %v984, %v989
    %v994 = vmul.f32 %v986, %v990
    %v995 = vsub.f32 1.0, %v984
    %v996 = vsub.f32 1.0, %v986
    %vm997 = vcmp.ge.f32.partialorder %v973, 0.0
    %vm998 = vcmp.ge.f32.partialorder %v974, 0.0
    %v999 = vmul.f32 %v973, 0.01
    %v1000 = vmul.f32 %v974, 0.01
    %v1001 = vsel %vm997, %v973, %v999
    %v1002 = vsel %vm998, %v974, %v1000
    %1005 = vrot.lane.b32.xlu0 %v1001, 32
    %v1006 = vpop.permute.xlu0 %1005
    %1007 = vrot.lane.b32.xlu0 %v1002, 32
    %v1008 = vpop.permute.xlu0 %1007
    %v1011 = vmul.f32 %v995, %v1006
    %v1012 = vmul.f32 %v996, %v1008
    %v1013 = vadd.f32 %v993, %v1011
    %v1014 = vadd.f32 %v994, %v1012
    %v1015 = vpack.c.bf16 %v1013, %v1013
    %v1016 = vpack.c.bf16 %v1014, %v1014
    %v1019 = vunpack.c.l.b16 %v1015
    %v1020 = vunpack.c.l.b16 %v1016
    %v1021 = vrot.slane %v1019, 2
    %v1022 = vrot.slane %v1020, 1
    %v1023 = vsel %vm273, %v1022, %v1021
    %v1024 = vpack.c.b16 %v1023, %v1023
    %1025 = vrot.lane.b32.xlu0 %v1024, 96
    %v1026 = vpop.permute.xlu0 %1025
    %v1028 = vsel %vm66, %v1026, 0
    %1030 = vmatprep.subr.bf16.mxu0 0
    %1031 = vmatpush1.bf16.msra.mxu0 0
    %1032 = vmatprep.subr.bf16.mxu0 0
    %1033 = vmatpush1.bf16.msra.mxu0 0
    %1034 = vmatprep.subr.bf16.mxu0 0
    %1035 = vmatpush1.bf16.msra.mxu0 0
    %1036 = vmatprep.subr.bf16.mxu0 0
    %1037 = vmatpush1.bf16.msra.mxu0 0
    %1038 = vmatprep.subr.bf16.mxu0 0
    %1039 = vmatpush1.bf16.msra.mxu0 0
    %1040 = vmatprep.subr.bf16.mxu0 0
    %1041 = vmatpush1.bf16.msra.mxu0 0
    %1042 = vmatprep.subr.bf16.mxu0 0
    %1043 = vmatpush1.bf16.msra.mxu0 %v287
    %1044 = vmatprep.subr.bf16.mxu0 0
    %1045 = vmatpush1.bf16.msra.mxu0 %v286
    %1046 = vmatprep.subr.bf16.mxu0 0
    %1047 = vmatpush2.bf16.msra.mxu0 0
    %1048 = vmatprep.subr.bf16.mxu0 0
    %1049 = vmatpush2.bf16.msra.mxu0 0
    %1050 = vmatprep.subr.bf16.mxu0 0
    %1051 = vmatpush2.bf16.msra.mxu0 0
    %1052 = vmatprep.subr.bf16.mxu0 0
    %1053 = vmatpush2.bf16.msra.mxu0 0
    %1054 = vmatprep.subr.bf16.mxu0 0
    %1055 = vmatpush2.bf16.msra.mxu0 0
    %1056 = vmatprep.subr.bf16.mxu0 0
    %1057 = vmatpush2.bf16.msra.mxu0 0
    %1058 = vmatprep.subr.bf16.mxu0 0
    %1059 = vmatpush2.bf16.msra.mxu0 0
    %1060 = vmatprep.subr.bf16.mxu0 0
    %1061 = vmatpush2.bf16.msra.mxu0 0
    %1062 = vmatprep.mubr.bf16.mxu0 0
    %1063 = vmatmul.mubr.bf16.gmra.mxu0 %v1028
    %v1064 = vpop.f32.mrf.mxu0
    %v1065 = vadd.f32 0.0, %v1064
    %v1066 = vpop.f32.mrf.mxu0
    %v1067 = vpop.f32.mrf.mxu0
    %v1068 = vpop.f32.mrf.mxu0
    %1069 = vdwg.mxu0
    %v1070 = vsel %vm333, %v1065, 0.0
    %1071 = vadd.xlane.f32.xlu0 %v1070
    %v1072 = vpop.xlane.xlu0 %1071
    %v1073 = vmul.f32 %v1072, %v114
    %v1074 = vsub.f32 %v1065, %v1073
    %v1075 = vmul.f32 %v1074, %v1074
    %v1076 = vsel %vm333, %v1075, 0.0
    %1077 = vadd.xlane.f32.xlu0 %v1076
    %v1078 = vpop.xlane.xlu0 %1077
    %v1079 = vmul.f32 %v1078, %v114
    %v1080 = vadd.f32 %v1079, 1e-05
    %v1081 = vrsqrt.pop %v1080
    %v1082 = vmul.f32 %v1074, %v1081
    %v1083 = vmul.f32 %v1082, %v351
    %v1084 = vadd.f32 %v1083, %v358
    %1085 = vmatprep.subr.bf16.mxu0 0
    %1086 = vmatpush1.bf16.msra.mxu0 0
    %1087 = vmatprep.subr.bf16.mxu0 0
    %1088 = vmatpush1.bf16.msra.mxu0 0
    %1089 = vmatprep.subr.bf16.mxu0 0
    %1090 = vmatpush1.bf16.msra.mxu0 0
    %1091 = vmatprep.subr.bf16.mxu0 0
    %1092 = vmatpush1.bf16.msra.mxu0 0
    %1093 = vmatprep.subr.bf16.mxu0 0
    %1094 = vmatpush1.bf16.msra.mxu0 0
    %1095 = vmatprep.subr.bf16.mxu0 0
    %1096 = vmatpush1.bf16.msra.mxu0 0
    %1097 = vmatprep.subr.bf16.mxu0 0
    %1098 = vmatpush1.bf16.msra.mxu0 %v370
    %1099 = vmatprep.subr.bf16.mxu0 0
    %1100 = vmatpush1.bf16.msra.mxu0 %v369
    %1101 = vmatprep.subr.bf16.mxu0 0
    %1102 = vmatpush2.bf16.msra.mxu0 0
    %1103 = vmatprep.subr.bf16.mxu0 0
    %1104 = vmatpush2.bf16.msra.mxu0 0
    %1105 = vmatprep.subr.bf16.mxu0 0
    %1106 = vmatpush2.bf16.msra.mxu0 0
    %1107 = vmatprep.subr.bf16.mxu0 0
    %1108 = vmatpush2.bf16.msra.mxu0 0
    %1109 = vmatprep.subr.bf16.mxu0 0
    %1110 = vmatpush2.bf16.msra.mxu0 0
    %1111 = vmatprep.subr.bf16.mxu0 0
    %1112 = vmatpush2.bf16.msra.mxu0 0
    %1113 = vmatprep.subr.bf16.mxu0 0
    %1114 = vmatpush2.bf16.msra.mxu0 0
    %1115 = vmatprep.subr.bf16.mxu0 0
    %1116 = vmatpush2.bf16.msra.mxu0 0
    %1117 = vmatprep.mubr.bf16.mxu0 0
    %1118 = vmatmul.mubr.bf16.gmra.mxu0 %v812
    %v1119 = vpop.f32.mrf.mxu0
    %v1120 = vadd.f32 0.0, %v1119
    %v1121 = vpop.f32.mrf.mxu0
    %v1122 = vpop.f32.mrf.mxu0
    %v1123 = vpop.f32.mrf.mxu0
    %1124 = vdwg.mxu0
    %v1125 = vadd.f32 %v1084, %v1120
    %v1126 = vxor.u32 %v1125, 2147483648
    %v1127 = vmul.f32 %v1126, 1.442695
    %v1128 = vpow.pop %v1127
    %v1129 = vadd.f32 %v1128, 1.0
    %v1130 = vrcp.pop %v1129
    %v1131 = vmul.f32 1.0, %v1130
    %v1132 = vmul.f32 %v1131, %v806
    %v1133 = vsub.f32 1.0, %v1131
    %vm1134 = vcmp.ge.f32.partialorder %v1125, 0.0
    %v1135 = vmul.f32 %v1125, 0.01
    %v1136 = vsel %vm1134, %v1125, %v1135
    %1138 = vrot.lane.b32.xlu0 %v1136, 32
    %v1139 = vpop.permute.xlu0 %1138
    %v1141 = vmul.f32 %v1133, %v1139
    %v1142 = vadd.f32 %v1132, %v1141
    %v1143 = vpack.c.bf16 %v1142, %v1142
    %1145 = vrot.lane.b32.xlu0 %v1143, 96
    %v1146 = vpop.permute.xlu0 %1145
    %v1148 = vsel %vm66, %v1146, 0
    %1150 = vmatprep.subr.bf16.mxu0 0
    %1151 = vmatpush1.bf16.msra.mxu0 0
    %1152 = vmatprep.subr.bf16.mxu0 0
    %1153 = vmatpush1.bf16.msra.mxu0 0
    %1154 = vmatprep.subr.bf16.mxu0 0
    %1155 = vmatpush1.bf16.msra.mxu0 0
    %1156 = vmatprep.subr.bf16.mxu0 0
    %1157 = vmatpush1.bf16.msra.mxu0 0
    %1158 = vmatprep.subr.bf16.mxu0 0
    %1159 = vmatpush1.bf16.msra.mxu0 0
    %1160 = vmatprep.subr.bf16.mxu0 0
    %1161 = vmatpush1.bf16.msra.mxu0 0
    %1162 = vmatprep.subr.bf16.mxu0 0
    %1163 = vmatpush1.bf16.msra.mxu0 %v450
    %1164 = vmatprep.subr.bf16.mxu0 0
    %1165 = vmatpush1.bf16.msra.mxu0 %v449
    %1166 = vmatprep.subr.bf16.mxu0 0
    %1167 = vmatpush2.bf16.msra.mxu0 0
    %1168 = vmatprep.subr.bf16.mxu0 0
    %1169 = vmatpush2.bf16.msra.mxu0 0
    %1170 = vmatprep.subr.bf16.mxu0 0
    %1171 = vmatpush2.bf16.msra.mxu0 0
    %1172 = vmatprep.subr.bf16.mxu0 0
    %1173 = vmatpush2.bf16.msra.mxu0 0
    %1174 = vmatprep.subr.bf16.mxu0 0
    %1175 = vmatpush2.bf16.msra.mxu0 0
    %1176 = vmatprep.subr.bf16.mxu0 0
    %1177 = vmatpush2.bf16.msra.mxu0 0
    %1178 = vmatprep.subr.bf16.mxu0 0
    %1179 = vmatpush2.bf16.msra.mxu0 0
    %1180 = vmatprep.subr.bf16.mxu0 0
    %1181 = vmatpush2.bf16.msra.mxu0 0
    %1182 = vmatprep.mubr.bf16.mxu0 0
    %1183 = vmatmul.mubr.bf16.gmra.mxu0 %v1148
    %v1184 = vpop.f32.mrf.mxu0
    %v1185 = vadd.f32 %v436, %v1184
    %v1186 = vpop.f32.mrf.mxu0
    %v1187 = vpop.f32.mrf.mxu0
    %v1188 = vpop.f32.mrf.mxu0
    %1189 = vdwg.mxu0
    %vm1190 = vcmp.ge.f32.partialorder %v1185, 0.0
    %v1191 = vmul.f32 %v1185, 0.01
    %v1192 = vsel %vm1190, %v1185, %v1191
    %v1193 = vpack.c.bf16 %v1192, %v1192
    %v1195 = vsel %vm110, %v1193, 0
    %1197 = vmatprep.subr.bf16.mxu0 0
    %1198 = vmatpush1.bf16.msra.mxu0 0
    %1199 = vmatprep.subr.bf16.mxu0 0
    %1200 = vmatpush1.bf16.msra.mxu0 0
    %1201 = vmatprep.subr.bf16.mxu0 0
    %1202 = vmatpush1.bf16.msra.mxu0 0
    %1203 = vmatprep.subr.bf16.mxu0 0
    %1204 = vmatpush1.bf16.msra.mxu0 0
    %1205 = vmatprep.subr.bf16.mxu0 0
    %1206 = vmatpush1.bf16.msra.mxu0 %v519
    %1207 = vmatprep.subr.bf16.mxu0 0
    %1208 = vmatpush1.bf16.msra.mxu0 %v518
    %1209 = vmatprep.subr.bf16.mxu0 0
    %1210 = vmatpush1.bf16.msra.mxu0 %v517
    %1211 = vmatprep.subr.bf16.mxu0 0
    %1212 = vmatpush1.bf16.msra.mxu0 %v516
    %1213 = vmatprep.subr.bf16.mxu0 0
    %1214 = vmatpush2.bf16.msra.mxu0 0
    %1215 = vmatprep.subr.bf16.mxu0 0
    %1216 = vmatpush2.bf16.msra.mxu0 0
    %1217 = vmatprep.subr.bf16.mxu0 0
    %1218 = vmatpush2.bf16.msra.mxu0 0
    %1219 = vmatprep.subr.bf16.mxu0 0
    %1220 = vmatpush2.bf16.msra.mxu0 0
    %1221 = vmatprep.subr.bf16.mxu0 0
    %1222 = vmatpush2.bf16.msra.mxu0 0
    %1223 = vmatprep.subr.bf16.mxu0 0
    %1224 = vmatpush2.bf16.msra.mxu0 0
    %1225 = vmatprep.subr.bf16.mxu0 0
    %1226 = vmatpush2.bf16.msra.mxu0 0
    %1227 = vmatprep.subr.bf16.mxu0 0
    %1228 = vmatpush2.bf16.msra.mxu0 0
    %1229 = vmatprep.mubr.bf16.mxu0 0
    %1230 = vmatmul.mubr.bf16.gmra.mxu0 %v1195
    %v1231 = vpop.f32.mrf.mxu0
    %v1232 = vadd.f32 0.0, %v1231
    %v1233 = vpop.f32.mrf.mxu0
    %v1234 = vpop.f32.mrf.mxu0
    %v1235 = vpop.f32.mrf.mxu0
    %1236 = vdwg.mxu0
    %v1239 = vunpack.c.l.s4 1966171168
    %v1240 = vunpack.c.0.s8 %v1239
    %v1241 = vlaneseq
    %v1242 = vshrl.u32 %v1241, 7
    %v1243 = vsub.s32 %v1240, %v1242
    %v1244 = vrot.slane %v1232, %v1243
    %v1245 = vcombine.high %v1244, %v1244
    %v1247 = vunpack.c.l.s4 1966171168
    %v1248 = vunpack.c.0.s8 %v1247
    %v1249 = vlaneseq
    %v1250 = vshrl.u32 %v1249, 7
    %v1251 = vsub.s32 %v1248, %v1250
    %v1252 = vrot.slane %v1244, %v1251
    %v1254 = vunpack.c.l.s4 1966171168
    %v1255 = vunpack.c.0.s8 %v1254
    %v1256 = vlaneseq
    %v1257 = vshrl.u32 %v1256, 7
    %v1258 = vsub.s32 %v1255, %v1257
    %v1259 = vrot.slane %v1245, %v1258
    %1262 = vst [vmem:[#allocation2 + $0x2] sm:$0x1] %v1252
    %1263 = vst [vmem:[#allocation2 + $0x6] sm:$0x1] %v1259
    %1264 = vmatprep.subr.bf16.mxu0 0
    %1265 = vmatpush1.bf16.msra.mxu0 0
    %1266 = vmatprep.subr.bf16.mxu0 0
    %1267 = vmatpush1.bf16.msra.mxu0 0
    %1268 = vmatprep.subr.bf16.mxu0 0
    %1269 = vmatpush1.bf16.msra.mxu0 0
    %1270 = vmatprep.subr.bf16.mxu0 0
    %1271 = vmatpush1.bf16.msra.mxu0 0
    %1272 = vmatprep.subr.bf16.mxu0 0
    %1273 = vmatpush1.bf16.msra.mxu0 0
    %1274 = vmatprep.subr.bf16.mxu0 0
    %1275 = vmatpush1.bf16.msra.mxu0 0
    %1276 = vmatprep.subr.bf16.mxu0 0
    %1277 = vmatpush1.bf16.msra.mxu0 %v180
    %1278 = vmatprep.subr.bf16.mxu0 0
    %1279 = vmatpush1.bf16.msra.mxu0 %v179
    %1280 = vmatprep.subr.bf16.mxu0 0
    %1281 = vmatpush2.bf16.msra.mxu0 0
    %1282 = vmatprep.subr.bf16.mxu0 0
    %1283 = vmatpush2.bf16.msra.mxu0 0
    %1284 = vmatprep.subr.bf16.mxu0 0
    %1285 = vmatpush2.bf16.msra.mxu0 0
    %1286 = vmatprep.subr.bf16.mxu0 0
    %1287 = vmatpush2.bf16.msra.mxu0 0
    %1288 = vmatprep.subr.bf16.mxu0 0
    %1289 = vmatpush2.bf16.msra.mxu0 0
    %1290 = vmatprep.subr.bf16.mxu0 0
    %1291 = vmatpush2.bf16.msra.mxu0 0
    %1292 = vmatprep.subr.bf16.mxu0 0
    %1293 = vmatpush2.bf16.msra.mxu0 0
    %1294 = vmatprep.subr.bf16.mxu0 0
    %1295 = vmatpush2.bf16.msra.mxu0 0
    %1296 = vmatprep.mubr.bf16.mxu0 0
    %1297 = vmatmul.mubr.bf16.gmra.mxu0 %v1028
    %v1298 = vpop.f32.mrf.mxu0
    %v1299 = vadd.f32 0.0, %v1298
    %v1300 = vpop.f32.mrf.mxu0
    %v1301 = vpop.f32.mrf.mxu0
    %v1302 = vpop.f32.mrf.mxu0
    %1303 = vdwg.mxu0
    %v1305 = vrot.slane %v1299, 5
    %v1306 = vrot.slane %v1299, 6
    %v1309 = vadd.f32 %v140, %v1305
    %v1310 = vadd.f32 %v142, %v1306
    %v1311 = vxor.u32 %v1309, 2147483648
    %v1312 = vxor.u32 %v1310, 2147483648
    %v1313 = vmul.f32 %v1311, 1.442695
    %v1314 = vpow.pop %v1313
    %v1315 = vmul.f32 %v1312, 1.442695
    %v1316 = vpow.pop %v1315
    %v1317 = vadd.f32 %v1314, 1.0
    %v1318 = vadd.f32 %v1316, 1.0
    %v1319 = vrcp.pop %v1317
    %v1320 = vmul.f32 1.0, %v1319
    %v1321 = vrcp.pop %v1318
    %v1322 = vmul.f32 1.0, %v1321
    %v1325 = vrot.slane %v1013, 7
    %v1326 = vrot.slane %v1014, 7
    %v1329 = vmul.f32 %v1320, %v1325
    %v1330 = vmul.f32 %v1322, %v1326
    %v1331 = vsub.f32 1.0, %v1320
    %v1332 = vsub.f32 1.0, %v1322
    %vm1333 = vcmp.ge.f32.partialorder %v1309, 0.0
    %vm1334 = vcmp.ge.f32.partialorder %v1310, 0.0
    %v1335 = vmul.f32 %v1309, 0.01
    %v1336 = vmul.f32 %v1310, 0.01
    %v1337 = vsel %vm1333, %v1309, %v1335
    %v1338 = vsel %vm1334, %v1310, %v1336
    %1341 = vrot.lane.b32.xlu0 %v1337, 32
    %v1342 = vpop.permute.xlu0 %1341
    %1343 = vrot.lane.b32.xlu0 %v1338, 32
    %v1344 = vpop.permute.xlu0 %1343
    %v1347 = vmul.f32 %v1331, %v1342
    %v1348 = vmul.f32 %v1332, %v1344
    %v1349 = vadd.f32 %v1329, %v1347
    %v1350 = vadd.f32 %v1330, %v1348
    %v1351 = vpack.c.bf16 %v1349, %v1349
    %v1352 = vpack.c.bf16 %v1350, %v1350
    %v1355 = vunpack.c.l.b16 %v1351
    %v1356 = vunpack.c.l.b16 %v1352
    %v1357 = vrot.slane %v1355, 3
    %v1358 = vrot.slane %v1356, 2
    %v1359 = vsel %vm273, %v1358, %v1357
    %v1360 = vpack.c.b16 %v1359, %v1359
    %1361 = vrot.lane.b32.xlu0 %v1360, 96
    %v1362 = vpop.permute.xlu0 %1361
    %v1364 = vsel %vm66, %v1362, 0
    %1366 = vmatprep.subr.bf16.mxu0 0
    %1367 = vmatpush1.bf16.msra.mxu0 0
    %1368 = vmatprep.subr.bf16.mxu0 0
    %1369 = vmatpush1.bf16.msra.mxu0 0
    %1370 = vmatprep.subr.bf16.mxu0 0
    %1371 = vmatpush1.bf16.msra.mxu0 0
    %1372 = vmatprep.subr.bf16.mxu0 0
    %1373 = vmatpush1.bf16.msra.mxu0 0
    %1374 = vmatprep.subr.bf16.mxu0 0
    %1375 = vmatpush1.bf16.msra.mxu0 0
    %1376 = vmatprep.subr.bf16.mxu0 0
    %1377 = vmatpush1.bf16.msra.mxu0 0
    %1378 = vmatprep.subr.bf16.mxu0 0
    %1379 = vmatpush1.bf16.msra.mxu0 %v287
    %1380 = vmatprep.subr.bf16.mxu0 0
    %1381 = vmatpush1.bf16.msra.mxu0 %v286
    %1382 = vmatprep.subr.bf16.mxu0 0
    %1383 = vmatpush2.bf16.msra.mxu0 0
    %1384 = vmatprep.subr.bf16.mxu0 0
    %1385 = vmatpush2.bf16.msra.mxu0 0
    %1386 = vmatprep.subr.bf16.mxu0 0
    %1387 = vmatpush2.bf16.msra.mxu0 0
    %1388 = vmatprep.subr.bf16.mxu0 0
    %1389 = vmatpush2.bf16.msra.mxu0 0
    %1390 = vmatprep.subr.bf16.mxu0 0
    %1391 = vmatpush2.bf16.msra.mxu0 0
    %1392 = vmatprep.subr.bf16.mxu0 0
    %1393 = vmatpush2.bf16.msra.mxu0 0
    %1394 = vmatprep.subr.bf16.mxu0 0
    %1395 = vmatpush2.bf16.msra.mxu0 0
    %1396 = vmatprep.subr.bf16.mxu0 0
    %1397 = vmatpush2.bf16.msra.mxu0 0
    %1398 = vmatprep.mubr.bf16.mxu0 0
    %1399 = vmatmul.mubr.bf16.gmra.mxu0 %v1364
    %v1400 = vpop.f32.mrf.mxu0
    %v1401 = vadd.f32 0.0, %v1400
    %v1402 = vpop.f32.mrf.mxu0
    %v1403 = vpop.f32.mrf.mxu0
    %v1404 = vpop.f32.mrf.mxu0
    %1405 = vdwg.mxu0
    %v1406 = vsel %vm333, %v1401, 0.0
    %1407 = vadd.xlane.f32.xlu0 %v1406
    %v1408 = vpop.xlane.xlu0 %1407
    %v1409 = vmul.f32 %v1408, %v114
    %v1410 = vsub.f32 %v1401, %v1409
    %v1411 = vmul.f32 %v1410, %v1410
    %v1412 = vsel %vm333, %v1411, 0.0
    %1413 = vadd.xlane.f32.xlu0 %v1412
    %v1414 = vpop.xlane.xlu0 %1413
    %v1415 = vmul.f32 %v1414, %v114
    %v1416 = vadd.f32 %v1415, 1e-05
    %v1417 = vrsqrt.pop %v1416
    %v1418 = vmul.f32 %v1410, %v1417
    %v1419 = vmul.f32 %v1418, %v351
    %v1420 = vadd.f32 %v1419, %v358
    %1421 = vmatprep.subr.bf16.mxu0 0
    %1422 = vmatpush1.bf16.msra.mxu0 0
    %1423 = vmatprep.subr.bf16.mxu0 0
    %1424 = vmatpush1.bf16.msra.mxu0 0
    %1425 = vmatprep.subr.bf16.mxu0 0
    %1426 = vmatpush1.bf16.msra.mxu0 0
    %1427 = vmatprep.subr.bf16.mxu0 0
    %1428 = vmatpush1.bf16.msra.mxu0 0
    %1429 = vmatprep.subr.bf16.mxu0 0
    %1430 = vmatpush1.bf16.msra.mxu0 0
    %1431 = vmatprep.subr.bf16.mxu0 0
    %1432 = vmatpush1.bf16.msra.mxu0 0
    %1433 = vmatprep.subr.bf16.mxu0 0
    %1434 = vmatpush1.bf16.msra.mxu0 %v370
    %1435 = vmatprep.subr.bf16.mxu0 0
    %1436 = vmatpush1.bf16.msra.mxu0 %v369
    %1437 = vmatprep.subr.bf16.mxu0 0
    %1438 = vmatpush2.bf16.msra.mxu0 0
    %1439 = vmatprep.subr.bf16.mxu0 0
    %1440 = vmatpush2.bf16.msra.mxu0 0
    %1441 = vmatprep.subr.bf16.mxu0 0
    %1442 = vmatpush2.bf16.msra.mxu0 0
    %1443 = vmatprep.subr.bf16.mxu0 0
    %1444 = vmatpush2.bf16.msra.mxu0 0
    %1445 = vmatprep.subr.bf16.mxu0 0
    %1446 = vmatpush2.bf16.msra.mxu0 0
    %1447 = vmatprep.subr.bf16.mxu0 0
    %1448 = vmatpush2.bf16.msra.mxu0 0
    %1449 = vmatprep.subr.bf16.mxu0 0
    %1450 = vmatpush2.bf16.msra.mxu0 0
    %1451 = vmatprep.subr.bf16.mxu0 0
    %1452 = vmatpush2.bf16.msra.mxu0 0
    %1453 = vmatprep.mubr.bf16.mxu0 0
    %1454 = vmatmul.mubr.bf16.gmra.mxu0 %v1148
    %v1455 = vpop.f32.mrf.mxu0
    %v1456 = vadd.f32 0.0, %v1455
    %v1457 = vpop.f32.mrf.mxu0
    %v1458 = vpop.f32.mrf.mxu0
    %v1459 = vpop.f32.mrf.mxu0
    %1460 = vdwg.mxu0
    %v1461 = vadd.f32 %v1420, %v1456
    %v1462 = vxor.u32 %v1461, 2147483648
    %v1463 = vmul.f32 %v1462, 1.442695
    %v1464 = vpow.pop %v1463
    %v1465 = vadd.f32 %v1464, 1.0
    %v1466 = vrcp.pop %v1465
    %v1467 = vmul.f32 1.0, %v1466
    %v1468 = vmul.f32 %v1467, %v1142
    %v1469 = vsub.f32 1.0, %v1467
    %vm1470 = vcmp.ge.f32.partialorder %v1461, 0.0
    %v1471 = vmul.f32 %v1461, 0.01
    %v1472 = vsel %vm1470, %v1461, %v1471
    %1474 = vrot.lane.b32.xlu0 %v1472, 32
    %v1475 = vpop.permute.xlu0 %1474
    %v1477 = vmul.f32 %v1469, %v1475
    %v1478 = vadd.f32 %v1468, %v1477
    %v1479 = vpack.c.bf16 %v1478, %v1478
    %1481 = vrot.lane.b32.xlu0 %v1479, 96
    %v1482 = vpop.permute.xlu0 %1481
    %v1484 = vsel %vm66, %v1482, 0
    %1486 = vmatprep.subr.bf16.mxu0 0
    %1487 = vmatpush1.bf16.msra.mxu0 0
    %1488 = vmatprep.subr.bf16.mxu0 0
    %1489 = vmatpush1.bf16.msra.mxu0 0
    %1490 = vmatprep.subr.bf16.mxu0 0
    %1491 = vmatpush1.bf16.msra.mxu0 0
    %1492 = vmatprep.subr.bf16.mxu0 0
    %1493 = vmatpush1.bf16.msra.mxu0 0
    %1494 = vmatprep.subr.bf16.mxu0 0
    %1495 = vmatpush1.bf16.msra.mxu0 0
    %1496 = vmatprep.subr.bf16.mxu0 0
    %1497 = vmatpush1.bf16.msra.mxu0 0
    %1498 = vmatprep.subr.bf16.mxu0 0
    %1499 = vmatpush1.bf16.msra.mxu0 %v450
    %1500 = vmatprep.subr.bf16.mxu0 0
    %1501 = vmatpush1.bf16.msra.mxu0 %v449
    %1502 = vmatprep.subr.bf16.mxu0 0
    %1503 = vmatpush2.bf16.msra.mxu0 0
    %1504 = vmatprep.subr.bf16.mxu0 0
    %1505 = vmatpush2.bf16.msra.mxu0 0
    %1506 = vmatprep.subr.bf16.mxu0 0
    %1507 = vmatpush2.bf16.msra.mxu0 0
    %1508 = vmatprep.subr.bf16.mxu0 0
    %1509 = vmatpush2.bf16.msra.mxu0 0
    %1510 = vmatprep.subr.bf16.mxu0 0
    %1511 = vmatpush2.bf16.msra.mxu0 0
    %1512 = vmatprep.subr.bf16.mxu0 0
    %1513 = vmatpush2.bf16.msra.mxu0 0
    %1514 = vmatprep.subr.bf16.mxu0 0
    %1515 = vmatpush2.bf16.msra.mxu0 0
    %1516 = vmatprep.subr.bf16.mxu0 0
    %1517 = vmatpush2.bf16.msra.mxu0 0
    %1518 = vmatprep.mubr.bf16.mxu0 0
    %1519 = vmatmul.mubr.bf16.gmra.mxu0 %v1484
    %v1520 = vpop.f32.mrf.mxu0
    %v1521 = vadd.f32 %v436, %v1520
    %v1522 = vpop.f32.mrf.mxu0
    %v1523 = vpop.f32.mrf.mxu0
    %v1524 = vpop.f32.mrf.mxu0
    %1525 = vdwg.mxu0
    %vm1526 = vcmp.ge.f32.partialorder %v1521, 0.0
    %v1527 = vmul.f32 %v1521, 0.01
    %v1528 = vsel %vm1526, %v1521, %v1527
    %v1529 = vpack.c.bf16 %v1528, %v1528
    %v1531 = vsel %vm110, %v1529, 0
    %1533 = vmatprep.subr.bf16.mxu0 0
    %1534 = vmatpush1.bf16.msra.mxu0 0
    %1535 = vmatprep.subr.bf16.mxu0 0
    %1536 = vmatpush1.bf16.msra.mxu0 0
    %1537 = vmatprep.subr.bf16.mxu0 0
    %1538 = vmatpush1.bf16.msra.mxu0 0
    %1539 = vmatprep.subr.bf16.mxu0 0
    %1540 = vmatpush1.bf16.msra.mxu0 0
    %1541 = vmatprep.subr.bf16.mxu0 0
    %1542 = vmatpush1.bf16.msra.mxu0 %v519
    %1543 = vmatprep.subr.bf16.mxu0 0
    %1544 = vmatpush1.bf16.msra.mxu0 %v518
    %1545 = vmatprep.subr.bf16.mxu0 0
    %1546 = vmatpush1.bf16.msra.mxu0 %v517
    %1547 = vmatprep.subr.bf16.mxu0 0
    %1548 = vmatpush1.bf16.msra.mxu0 %v516
    %1549 = vmatprep.subr.bf16.mxu0 0
    %1550 = vmatpush2.bf16.msra.mxu0 0
    %1551 = vmatprep.subr.bf16.mxu0 0
    %1552 = vmatpush2.bf16.msra.mxu0 0
    %1553 = vmatprep.subr.bf16.mxu0 0
    %1554 = vmatpush2.bf16.msra.mxu0 0
    %1555 = vmatprep.subr.bf16.mxu0 0
    %1556 = vmatpush2.bf16.msra.mxu0 0
    %1557 = vmatprep.subr.bf16.mxu0 0
    %1558 = vmatpush2.bf16.msra.mxu0 0
    %1559 = vmatprep.subr.bf16.mxu0 0
    %1560 = vmatpush2.bf16.msra.mxu0 0
    %1561 = vmatprep.subr.bf16.mxu0 0
    %1562 = vmatpush2.bf16.msra.mxu0 0
    %1563 = vmatprep.subr.bf16.mxu0 0
    %1564 = vmatpush2.bf16.msra.mxu0 0
    %1565 = vmatprep.mubr.bf16.mxu0 0
    %1566 = vmatmul.mubr.bf16.gmra.mxu0 %v1531
    %v1567 = vpop.f32.mrf.mxu0
    %v1568 = vadd.f32 0.0, %v1567
    %v1569 = vpop.f32.mrf.mxu0
    %v1570 = vpop.f32.mrf.mxu0
    %v1571 = vpop.f32.mrf.mxu0
    %1572 = vdwg.mxu0
    %v1575 = vunpack.c.l.s4 1966171168
    %v1576 = vunpack.c.0.s8 %v1575
    %v1577 = vlaneseq
    %v1578 = vshrl.u32 %v1577, 7
    %v1579 = vsub.s32 %v1576, %v1578
    %v1580 = vrot.slane %v1568, %v1579
    %v1581 = vcombine.high %v1580, %v1580
    %v1583 = vunpack.c.l.s4 1966171168
    %v1584 = vunpack.c.0.s8 %v1583
    %v1585 = vlaneseq
    %v1586 = vshrl.u32 %v1585, 7
    %v1587 = vsub.s32 %v1584, %v1586
    %v1588 = vrot.slane %v1580, %v1587
    %v1590 = vunpack.c.l.s4 1966171168
    %v1591 = vunpack.c.0.s8 %v1590
    %v1592 = vlaneseq
    %v1593 = vshrl.u32 %v1592, 7
    %v1594 = vsub.s32 %v1591, %v1593
    %v1595 = vrot.slane %v1581, %v1594
    %1598 = vst [vmem:[#allocation2 + $0x3] sm:$0x1] %v1588
    %1599 = vst [vmem:[#allocation2 + $0x7] sm:$0x1] %v1595
    // Predicated region
    $region50: #{apply_cdrnn_forward.5} parent=1 // pred_check
      _
    $region51: #{apply_cdrnn_forward.5} parent=1 // pred_check_branch
      %1601 = sbr.rel (0) target = $region53
    $region52: #{apply_cdrnn_forward.5} parent=1 // pred_region
      %s1603 = ssub.s32 128, 128
      %1604 = vsyncadd [#allocation3], %s1603
      %s1605 = sshll.u32 [#allocation2], 4
      %s1606 = int_to_ptr.vmem [resolvable:$true] %s1605
      %1611 = dma.vmem_to_hbm [thread:$0]  %s1606, 128, %s12, [#allocation3], 64, 64, 4
    $region53: #{apply_cdrnn_forward.5} parent=1 // pred_fallthru
      _
    // Predicated region
    $region54: #{apply_cdrnn_forward.5} parent=1 // pred_check
      _
    $region55: #{apply_cdrnn_forward.5} parent=1 // pred_check_branch
      %1613 = sbr.rel (0) target = $region57
    $region56: #{apply_cdrnn_forward.5} parent=1 // pred_region
      %1614 = dma.done [#allocation3], 128
    $region57: #{apply_cdrnn_forward.5} parent=1 // pred_fallthru
      _
    %1615 = vsyncpa [#allocation3], 1

</llo_original>
